<compile_context>
chip_gen: v7x
topology: tpu7x:2x2x1
jax: 0.10.0
libtpu: 0.0.40
codegen_flags: <defaults>
</compile_context>

<pallas_src>
import functools

import jax
import jax.numpy as jnp
from jax.experimental import pallas as pl
from jax.experimental.pallas import tpu as pltpu


# ----------------------------- Pallas kernel --------------------------------

def _layer_norm(v, gamma, beta, eps=1e-5):
    mu = jnp.mean(v, axis=-1, keepdims=True)
    var = jnp.mean((v - mu) ** 2, axis=-1, keepdims=True)
    return (v - mu) * jax.lax.rsqrt(var + eps) * gamma + beta


def encoder_layer_kernel(
    x_full_ref, x_tile_ref, mask_ref,
    wq_ref, bq_ref, wkv_ref, bkv_ref, wo_ref, bo_ref,
    w1_ref, b1_ref, w2_ref, b2_ref,
    ln1_g_ref, ln1_b_ref, ln2_g_ref, ln2_b_ref,
    o_ref,
    k_scr_ref, v_scr_ref,
    *, n_head: int,
):
    f32 = jnp.float32
    cdt = jnp.bfloat16                      # MXU input dtype (f32 accumulation)

    _, S, D = x_full_ref.shape
    tq = x_tile_ref.shape[1]
    dh = D // n_head

    # ---- K/V projection: once per batch element (query-tile 0 only) --------
    @pl.when(pl.program_id(1) == 0)
    def _():
        xs = x_full_ref[0].astype(cdt)                                    # (S, D)
        kv = jnp.dot(xs, wkv_ref[...], preferred_element_type=f32) + bkv_ref[...]
        kv = kv.astype(cdt)                                               # (S, 2D)
        # single reshape + head-major transpose (no per-head lane slices)
        k_scr_ref[...] = jnp.swapaxes(kv[:, :D].reshape(S, n_head, dh), 0, 1)
        v_scr_ref[...] = jnp.swapaxes(kv[:, D:].reshape(S, n_head, dh), 0, 1)

    # ---- Q projection for this tile's rows (1/sqrt(dh) pre-folded) ---------
    xq = x_tile_ref[0]                                                    # (tq, D) f32
    q = jnp.dot(xq.astype(cdt), wq_ref[...], preferred_element_type=f32) + bq_ref[...]
    qh = jnp.swapaxes(q.astype(cdt).reshape(tq, n_head, dh), 0, 1)        # (H, tq, dh)

    # ---- head-batched attention, deferred softmax normalization ------------
    s = jnp.einsum("hqd,hkd->hqk", qh, k_scr_ref[...],
                   preferred_element_type=f32)                            # (H, tq, S)
    bias = jnp.where(mask_ref[0] > 0, 0.0, -1e9).astype(f32)              # (1, S)
    s = s + bias
    s = s - jnp.max(s, axis=-1, keepdims=True)
    p = jnp.exp(s)                                                        # unnormalized
    denom = jnp.sum(p, axis=-1, keepdims=True)                            # (H, tq, 1)
    ctx = jnp.einsum("hqk,hkd->hqd", p.astype(cdt), v_scr_ref[...],
                     preferred_element_type=f32)                          # (H, tq, dh)
    ctx = ctx * pl.reciprocal(denom, approx=True)                         # defer norm

    # ---- output projection: single D-contraction matmul --------------------
    ctx2 = jnp.swapaxes(ctx, 0, 1).reshape(tq, D)                         # (tq, H*dh)
    attn = jnp.dot(ctx2.astype(cdt), wo_ref[...],
                   preferred_element_type=f32) + bo_ref[...]              # (tq, D)

    # ---- SubLayer 0: residual + LayerNorm (dropout = identity) -------------
    y = _layer_norm(xq + attn, ln1_g_ref[...], ln1_b_ref[...])

    # ---- FFN ----------------------------------------------------------------
    h1 = jnp.dot(y.astype(cdt), w1_ref[...], preferred_element_type=f32) + b1_ref[...]
    h1 = jnp.maximum(h1, 0.0)
    f = jnp.dot(h1.astype(cdt), w2_ref[...], preferred_element_type=f32) + b2_ref[...]

    # ---- SubLayer 1: residual + LayerNorm -----------------------------------
    out = _layer_norm(y + f, ln2_g_ref[...], ln2_b_ref[...])
    o_ref[0] = out.astype(o_ref.dtype)


# ----------------------------- wrapper ---------------------------------------

def prepare_encoder_params(params, n_head):
    """One-time parameter preparation (hoisted out of the per-call path):
    fused K|V weight, bf16 casts for MXU operands, 1/sqrt(dh) folded into
    the Q projection weight/bias."""
    D = params["wq"].shape[0]
    dh = D // n_head
    scale = 1.0 / (dh ** 0.5)
    cdt, f32 = jnp.bfloat16, jnp.float32
    return {
        "wq": (params["wq"] * scale).astype(cdt),
        "bq": (params["bq"] * scale).astype(f32),
        "wkv": jnp.concatenate([params["wk"], params["wv"]], axis=1).astype(cdt),
        "bkv": jnp.concatenate([params["bk"], params["bv"]], axis=1).astype(f32),
        "wo": params["wo"].astype(cdt), "bo": params["bo"].astype(f32),
        "w1": params["w1"].astype(cdt), "b1": params["b1"].astype(f32),
        "w2": params["w2"].astype(cdt), "b2": params["b2"].astype(f32),
        "ln1_g": params["ln1_g"].astype(f32), "ln1_b": params["ln1_b"].astype(f32),
        "ln2_g": params["ln2_g"].astype(f32), "ln2_b": params["ln2_b"].astype(f32),
    }


def _vmem_limit_bytes():
    """Generation-aware scoped-VMEM limit: ~3/4 of physical, capped at 96 MiB
    (-> 48 MiB on v7x's 64 MiB per-core VMEM, 96 MiB on v5e/v6e)."""
    try:
        cap = pltpu.get_tpu_info().vmem_capacity_bytes
    except Exception:
        cap = 64 * 1024 * 1024            # conservative default (v7x per-core)
    return min(int(cap * 3 // 4), 96 * 1024 * 1024)


def _pick_tq(S, D, d_ff, n_head, vmem_limit):
    """Largest divisor-of-S query tile (<= 512 rows) whose per-tile activation
    footprint fits in roughly half the VMEM limit (rest: weights, K/V scratch,
    pipeline buffers)."""
    fixed = 4 * S * D          # bf16 K + V scratch
    fixed += 2 * 4 * S * D     # resident (double-buffered) f32 full-seq x block
    budget = max(vmem_limit // 2 - fixed, vmem_limit // 8)

    def tile_bytes(t):
        scores = 2 * n_head * t * S * 4      # s and exp(s), f32
        ffn = 2 * t * d_ff * 4               # FFN hidden (+ ReLU), f32
        acts = 8 * t * D * 4                 # q / ctx / attn / y / f / out, f32
        return scores + ffn + acts

    t = S
    while t > 8 and t % 2 == 0 and (t > 512 or tile_bytes(t) > budget):
        t //= 2
    return t


def encoder_layer(x, mask, prep, n_head, *, tq=None, single_buffer_weights=True):
    """x: (B, S, D) f32, mask: (B, 1, S) f32 (1 = attend), prep from
    prepare_encoder_params()."""
    B, S, D = x.shape
    assert D % n_head == 0
    dh = D // n_head
    d_ff = prep["w1"].shape[1]

    vmem_limit = _vmem_limit_bytes()
    if tq is None:
        tq = _pick_tq(S, D, d_ff, n_head, vmem_limit)
    assert S % tq == 0

    weight_mode = pl.Buffered(1) if single_buffer_weights else None

    def const_spec(shape):
        idx = lambda b, q: (0,) * len(shape)
        if weight_mode is None:
            return pl.BlockSpec(shape, idx)
        # constant index_map -> never refetched; single-buffer to halve the
        # resident weight VMEM footprint.
        return pl.BlockSpec(shape, idx, pipeline_mode=weight_mode)

    in_specs = [
        pl.BlockSpec((1, S, D), lambda b, q: (b, 0, 0)),    # x full seq (for K/V)
        pl.BlockSpec((1, tq, D), lambda b, q: (b, q, 0)),   # x, this query tile
        pl.BlockSpec((1, 1, S), lambda b, q: (b, 0, 0)),    # padding mask
        const_spec((D, D)), const_spec((1, D)),             # wq (scale folded), bq
        const_spec((D, 2 * D)), const_spec((1, 2 * D)),     # wkv, bkv
        const_spec((D, D)), const_spec((1, D)),             # wo, bo
        const_spec((D, d_ff)), const_spec((1, d_ff)),       # w1, b1
        const_spec((d_ff, D)), const_spec((1, D)),          # w2, b2
        const_spec((1, D)), const_spec((1, D)),             # ln1 gamma/beta
        const_spec((1, D)), const_spec((1, D)),             # ln2 gamma/beta
    ]

    kernel = functools.partial(encoder_layer_kernel, n_head=n_head)

    return pl.pallas_call(
        kernel,
        out_shape=jax.ShapeDtypeStruct((B, S, D), x.dtype),
        grid_spec=pltpu.PrefetchScalarGridSpec(
            num_scalar_prefetch=0,
            grid=(B, S // tq),
            in_specs=in_specs,
            out_specs=pl.BlockSpec((1, tq, D), lambda b, q: (b, q, 0)),
            scratch_shapes=[
                pltpu.VMEM((n_head, S, dh), jnp.bfloat16),   # K cache (per batch)
                pltpu.VMEM((n_head, S, dh), jnp.bfloat16),   # V cache (per batch)
            ],
        ),
        compiler_params=pltpu.CompilerParams(
            # B "parallel" (megacore shards over batch); q "arbitrary" so the
            # K/V scratch computed at q == 0 carries across query tiles.
            dimension_semantics=("parallel", "arbitrary"),
            vmem_limit_bytes=vmem_limit,
        ),
    )(
        x, x, mask,
        prep["wq"], prep["bq"], prep["wkv"], prep["bkv"],
        prep["wo"], prep["bo"],
        prep["w1"], prep["b1"], prep["w2"], prep["b2"],
        prep["ln1_g"], prep["ln1_b"], prep["ln2_g"], prep["ln2_b"],
    )


# ----------------------------- pure-JAX reference -----------------------------

def encoder_layer_ref(x, mask, p, n_head):
    B, S, D = x.shape
    dh = D // n_head

    def ln(v, g, b):
        mu = v.mean(-1, keepdims=True)
        var = ((v - mu) ** 2).mean(-1, keepdims=True)
        return (v - mu) / jnp.sqrt(var + 1e-5) * g + b

    q = x @ p["wq"] + p["bq"]
    k = x @ p["wk"] + p["bk"]
    v = x @ p["wv"] + p["bv"]

    def split(t):  # (B,S,D) -> (B,H,S,dh)
        return t.reshape(B, S, n_head, dh).transpose(0, 2, 1, 3)

    qh, kh, vh = split(q), split(k), split(v)
    s = jnp.einsum("bhqd,bhkd->bhqk", qh, kh) / (dh ** 0.5)
    keep = (mask > 0)[:, None, :, :]            # (B,1,1,S)
    s = jnp.where(keep, s, -1e9)
    pattn = jax.nn.softmax(s, axis=-1)
    ctx = jnp.einsum("bhqk,bhkd->bhqd", pattn, vh).transpose(0, 2, 1, 3).reshape(B, S, D)
    attn_out = ctx @ p["wo"] + p["bo"]

    y = ln(x + attn_out, p["ln1_g"], p["ln1_b"])
    f = jnp.maximum(y @ p["w1"] + p["b1"], 0.0) @ p["w2"] + p["b2"]
    return ln(y + f, p["ln2_g"], p["ln2_b"])


# ----------------------------- main -------------------------------------------

if __name__ == "__main__":
    B, S, D, H, d_ff = 2, 8, 32, 4, 64

    key = jax.random.PRNGKey(0)
    keys = jax.random.split(key, 16)

    def w(k, shape):
        return jax.random.normal(k, shape, jnp.float32) * 0.02

    params = {
        "wq": w(keys[0], (D, D)), "bq": w(keys[1], (1, D)),
        "wk": w(keys[2], (D, D)), "bk": w(keys[3], (1, D)),
        "wv": w(keys[4], (D, D)), "bv": w(keys[5], (1, D)),
        "wo": w(keys[6], (D, D)), "bo": w(keys[7], (1, D)),
        "w1": w(keys[8], (D, d_ff)), "b1": w(keys[9], (1, d_ff)),
        "w2": w(keys[10], (d_ff, D)), "b2": w(keys[11], (1, D)),
        "ln1_g": jnp.ones((1, D), jnp.float32), "ln1_b": jnp.zeros((1, D), jnp.float32),
        "ln2_g": jnp.ones((1, D), jnp.float32), "ln2_b": jnp.zeros((1, D), jnp.float32),
    }
    prep = prepare_encoder_params(params, H)    # one-time weight preprocessing

    def run(x, mask, tq=None):
        # Try single-buffered constant weights (pl.Buffered(1)) first; fall
        # back to default double-buffering if this JAX build rejects it.
        try:
            return jax.block_until_ready(
                encoder_layer(x, mask, prep, H, tq=tq, single_buffer_weights=True))
        except Exception:
            return jax.block_until_ready(
                encoder_layer(x, mask, prep, H, tq=tq, single_buffer_weights=False))

    tol = dict(atol=1e-2, rtol=1e-2)   # bf16 MXU + approx reciprocal vs f32 ref

    # --- test 1: single query tile (tq == S) ---------------------------------
    x1 = jax.random.normal(keys[12], (B, S, D), jnp.float32)
    lens1 = jnp.array([8, 6])
    mask1 = (jnp.arange(S)[None, None, :] < lens1[:, None, None]).astype(jnp.float32)
    out1 = run(x1, mask1)
    ref1 = encoder_layer_ref(x1, mask1, params, H)
    assert out1.shape == (B, S, D)
    assert jnp.allclose(out1, ref1, **tol), float(jnp.max(jnp.abs(out1 - ref1)))

    # --- test 2: multi-tile path (tq < S) exercises the K/V-scratch carry ----
    S2 = 16
    x2 = jax.random.normal(keys[13], (B, S2, D), jnp.float32)
    lens2 = jnp.array([16, 11])
    mask2 = (jnp.arange(S2)[None, None, :] < lens2[:, None, None]).astype(jnp.float32)
    out2 = run(x2, mask2, tq=8)
    ref2 = encoder_layer_ref(x2, mask2, params, H)
    assert out2.shape == (B, S2, D)
    assert jnp.allclose(out2, ref2, **tol), float(jnp.max(jnp.abs(out2 - ref2)))

    print("KERNEL_OK")
</pallas_src>

<mosaic_0001>
module attributes {stable_mosaic.version = 11 : i64} {
  func.func @encoder_layer_kernel(%arg0: i32, %arg1: i32, %arg2: memref<1x8x32xf32, #tpu.memory_space<vmem>>, %arg3: memref<1x8x32xf32, #tpu.memory_space<vmem>>, %arg4: memref<1x1x8xf32, #tpu.memory_space<vmem>>, %arg5: memref<32x32xbf16, #tpu.memory_space<vmem>>, %arg6: memref<1x32xf32, #tpu.memory_space<vmem>>, %arg7: memref<32x64xbf16, #tpu.memory_space<vmem>>, %arg8: memref<1x64xf32, #tpu.memory_space<vmem>>, %arg9: memref<32x32xbf16, #tpu.memory_space<vmem>>, %arg10: memref<1x32xf32, #tpu.memory_space<vmem>>, %arg11: memref<32x64xbf16, #tpu.memory_space<vmem>>, %arg12: memref<1x64xf32, #tpu.memory_space<vmem>>, %arg13: memref<64x32xbf16, #tpu.memory_space<vmem>>, %arg14: memref<1x32xf32, #tpu.memory_space<vmem>>, %arg15: memref<1x32xf32, #tpu.memory_space<vmem>>, %arg16: memref<1x32xf32, #tpu.memory_space<vmem>>, %arg17: memref<1x32xf32, #tpu.memory_space<vmem>>, %arg18: memref<1x32xf32, #tpu.memory_space<vmem>>, %arg19: memref<1x8x32xf32, #tpu.memory_space<vmem>>, %arg20: memref<4x8x8xbf16, #tpu.memory_space<vmem>>, %arg21: memref<4x8x8xbf16, #tpu.memory_space<vmem>>) attributes {dimension_semantics = [#tpu.dimension_semantics<parallel>, #tpu.dimension_semantics<arbitrary>], iteration_bounds = array<i64: 2, 1>, scalar_prefetch = 0 : i64, scratch_operands = 2 : i64, tpu.core_type = #tpu.core_type<tc>, window_params = [{transform_indices = @transform_0, window_bounds = array<i64: 1, 8, 32>}, {transform_indices = @transform_1, window_bounds = array<i64: 1, 8, 32>}, {transform_indices = @transform_2, window_bounds = array<i64: 1, 1, 8>}, {pipeline_mode = #tpu.pipeline_mode<synchronous>, transform_indices = @transform_3, window_bounds = array<i64: 32, 32>}, {pipeline_mode = #tpu.pipeline_mode<synchronous>, transform_indices = @transform_4, window_bounds = array<i64: 1, 32>}, {pipeline_mode = #tpu.pipeline_mode<synchronous>, transform_indices = @transform_5, window_bounds = array<i64: 32, 64>}, {pipeline_mode = #tpu.pipeline_mode<synchronous>, transform_indices = @transform_6, window_bounds = array<i64: 1, 64>}, {pipeline_mode = #tpu.pipeline_mode<synchronous>, transform_indices = @transform_7, window_bounds = array<i64: 32, 32>}, {pipeline_mode = #tpu.pipeline_mode<synchronous>, transform_indices = @transform_8, window_bounds = array<i64: 1, 32>}, {pipeline_mode = #tpu.pipeline_mode<synchronous>, transform_indices = @transform_9, window_bounds = array<i64: 32, 64>}, {pipeline_mode = #tpu.pipeline_mode<synchronous>, transform_indices = @transform_10, window_bounds = array<i64: 1, 64>}, {pipeline_mode = #tpu.pipeline_mode<synchronous>, transform_indices = @transform_11, window_bounds = array<i64: 64, 32>}, {pipeline_mode = #tpu.pipeline_mode<synchronous>, transform_indices = @transform_12, window_bounds = array<i64: 1, 32>}, {pipeline_mode = #tpu.pipeline_mode<synchronous>, transform_indices = @transform_13, window_bounds = array<i64: 1, 32>}, {pipeline_mode = #tpu.pipeline_mode<synchronous>, transform_indices = @transform_14, window_bounds = array<i64: 1, 32>}, {pipeline_mode = #tpu.pipeline_mode<synchronous>, transform_indices = @transform_15, window_bounds = array<i64: 1, 32>}, {pipeline_mode = #tpu.pipeline_mode<synchronous>, transform_indices = @transform_16, window_bounds = array<i64: 1, 32>}, {transform_indices = @transform_17, window_bounds = array<i64: 1, 8, 32>}]} {
    %c0_i32 = arith.constant 0 : i32
    %0 = arith.cmpi eq, %arg1, %c0_i32 : i32
    %1 = arith.extui %0 : i1 to i32
    %c0_i32_0 = arith.constant 0 : i32
    %2 = arith.cmpi ne, %1, %c0_i32_0 : i32
    scf.if %2 {
      %c0_60 = arith.constant 0 : index
      %c0_61 = arith.constant 0 : index
      %c0_62 = arith.constant 0 : index
      %114 = vector.load %arg2[%c0_60, %c0_61, %c0_62] : memref<1x8x32xf32, #tpu.memory_space<vmem>>, vector<1x8x32xf32>
      %115 = vector.shape_cast %114 : vector<1x8x32xf32> to vector<8x32xf32>
      %116 = arith.truncf %115 : vector<8x32xf32> to vector<8x32xbf16>
      %c0_63 = arith.constant 0 : index
      %c0_64 = arith.constant 0 : index
      %117 = vector.load %arg7[%c0_63, %c0_64] : memref<32x64xbf16, #tpu.memory_space<vmem>>, vector<32x64xbf16>
      %cst_65 = arith.constant dense<0.000000e+00> : vector<8x64xf32>
      %118 = tpu.matmul %116, %117, %cst_65 {dimension_numbers = #tpu.dot_dimension_numbers<[1], [0], [0], [1], [0, 0, 1, 1], [], []>} : vector<8x32xbf16>, vector<32x64xbf16>, vector<8x64xf32> -> vector<8x64xf32>
      %c0_66 = arith.constant 0 : index
      %c0_67 = arith.constant 0 : index
      %119 = vector.load %arg8[%c0_66, %c0_67] : memref<1x64xf32, #tpu.memory_space<vmem>>, vector<1x64xf32>
      %120 = vector.broadcast %119 : vector<1x64xf32> to vector<8x64xf32>
      %121 = arith.addf %118, %120 : vector<8x64xf32>
      %122 = arith.truncf %121 : vector<8x64xf32> to vector<8x64xbf16>
      %123 = vector.extract_strided_slice %122 {offsets = [0, 0], sizes = [8, 32], strides = [1, 1]} : vector<8x64xbf16> to vector<8x32xbf16>
      %124 = vector.shape_cast %123 : vector<8x32xbf16> to vector<8x4x8xbf16>
      %125 = tpu.transpose %124, [1, 0, 2] : vector<8x4x8xbf16> -> vector<4x8x8xbf16>
      %c0_68 = arith.constant 0 : index
      %c0_69 = arith.constant 0 : index
      %c0_70 = arith.constant 0 : index
      %126 = vector.load %arg20[%c0_68, %c0_69, %c0_70] : memref<4x8x8xbf16, #tpu.memory_space<vmem>>, vector<4x8x8xbf16>
      tpu.vector_store %arg20[%c0_68, %c0_69, %c0_70], %125 {strides = array<i32>} : memref<4x8x8xbf16, #tpu.memory_space<vmem>>, vector<4x8x8xbf16>,
      %127 = vector.extract_strided_slice %122 {offsets = [0, 32], sizes = [8, 32], strides = [1, 1]} : vector<8x64xbf16> to vector<8x32xbf16>
      %128 = vector.shape_cast %127 : vector<8x32xbf16> to vector<8x4x8xbf16>
      %129 = tpu.transpose %128, [1, 0, 2] : vector<8x4x8xbf16> -> vector<4x8x8xbf16>
      %c0_71 = arith.constant 0 : index
      %c0_72 = arith.constant 0 : index
      %c0_73 = arith.constant 0 : index
      %130 = vector.load %arg21[%c0_71, %c0_72, %c0_73] : memref<4x8x8xbf16, #tpu.memory_space<vmem>>, vector<4x8x8xbf16>
      tpu.vector_store %arg21[%c0_71, %c0_72, %c0_73], %129 {strides = array<i32>} : memref<4x8x8xbf16, #tpu.memory_space<vmem>>, vector<4x8x8xbf16>,
    } else {
    }
    %c0 = arith.constant 0 : index
    %c0_1 = arith.constant 0 : index
    %c0_2 = arith.constant 0 : index
    %3 = vector.load %arg3[%c0, %c0_1, %c0_2] : memref<1x8x32xf32, #tpu.memory_space<vmem>>, vector<1x8x32xf32>
    %4 = vector.shape_cast %3 : vector<1x8x32xf32> to vector<8x32xf32>
    %5 = arith.truncf %4 : vector<8x32xf32> to vector<8x32xbf16>
    %c0_3 = arith.constant 0 : index
    %c0_4 = arith.constant 0 : index
    %6 = vector.load %arg5[%c0_3, %c0_4] : memref<32x32xbf16, #tpu.memory_space<vmem>>, vector<32x32xbf16>
    %cst = arith.constant dense<0.000000e+00> : vector<8x32xf32>
    %7 = tpu.matmul %5, %6, %cst {dimension_numbers = #tpu.dot_dimension_numbers<[1], [0], [0], [1], [0, 0, 1, 1], [], []>} : vector<8x32xbf16>, vector<32x32xbf16>, vector<8x32xf32> -> vector<8x32xf32>
    %c0_5 = arith.constant 0 : index
    %c0_6 = arith.constant 0 : index
    %8 = vector.load %arg6[%c0_5, %c0_6] : memref<1x32xf32, #tpu.memory_space<vmem>>, vector<1x32xf32>
    %9 = vector.broadcast %8 : vector<1x32xf32> to vector<8x32xf32>
    %10 = arith.addf %7, %9 : vector<8x32xf32>
    %11 = arith.truncf %10 : vector<8x32xf32> to vector<8x32xbf16>
    %12 = vector.shape_cast %11 : vector<8x32xbf16> to vector<8x4x8xbf16>
    %13 = tpu.transpose %12, [1, 0, 2] : vector<8x4x8xbf16> -> vector<4x8x8xbf16>
    %c0_7 = arith.constant 0 : index
    %c0_8 = arith.constant 0 : index
    %c0_9 = arith.constant 0 : index
    %14 = vector.load %arg20[%c0_7, %c0_8, %c0_9] : memref<4x8x8xbf16, #tpu.memory_space<vmem>>, vector<4x8x8xbf16>
    "tpu.trace_start"() <{level = 10 : i32, message = "hqd,hkd->hqk"}> : () -> ()
    %cst_10 = arith.constant dense<0.000000e+00> : vector<4x8x8xf32>
    %15 = tpu.matmul %13, %14, %cst_10 {dimension_numbers = #tpu.dot_dimension_numbers<[2], [2], [1], [1], [0, 0, 0, 1, 1, 1], [0], [0]>} : vector<4x8x8xbf16>, vector<4x8x8xbf16>, vector<4x8x8xf32> -> vector<4x8x8xf32>
    "tpu.trace_stop"() : () -> ()
    %c0_11 = arith.constant 0 : index
    %c0_12 = arith.constant 0 : index
    %c0_13 = arith.constant 0 : index
    %16 = vector.load %arg4[%c0_11, %c0_12, %c0_13] : memref<1x1x8xf32, #tpu.memory_space<vmem>>, vector<1x1x8xf32>
    %17 = vector.shape_cast %16 : vector<1x1x8xf32> to vector<1x8xf32>
    %cst_14 = arith.constant 0.000000e+00 : f32
    %18 = vector.broadcast %cst_14 : f32 to vector<1x8xf32>
    %19 = arith.cmpf ogt, %17, %18 : vector<1x8xf32>
    %cst_15 = arith.constant 0.000000e+00 : f32
    %cst_16 = arith.constant -1.000000e+09 : f32
    %20 = vector.broadcast %cst_15 : f32 to vector<1x8xf32>
    %21 = vector.broadcast %cst_16 : f32 to vector<1x8xf32>
    %22 = arith.select %19, %20, %21 : vector<1x8xi1>, vector<1x8xf32>
    %23 = vector.shape_cast %22 : vector<1x8xf32> to vector<1x1x8xf32>
    %24 = vector.broadcast %23 : vector<1x1x8xf32> to vector<4x8x8xf32>
    %25 = arith.addf %15, %24 : vector<4x8x8xf32>
    %cst_17 = arith.constant dense<0xFF800000> : vector<4x8xf32>
    %26 = vector.multi_reduction <maximumf>, %25, %cst_17 [2] : vector<4x8x8xf32> to vector<4x8xf32>
    %27 = vector.shape_cast %26 : vector<4x8xf32> to vector<4x8x1xf32>
    %28 = vector.broadcast %27 : vector<4x8x1xf32> to vector<4x8x8xf32>
    %29 = arith.subf %25, %28 : vector<4x8x8xf32>
    %30 = math.exp %29 : vector<4x8x8xf32>
    %cst_18 = arith.constant dense<0.000000e+00> : vector<4x8xf32>
    %31 = vector.multi_reduction <add>, %30, %cst_18 [2] : vector<4x8x8xf32> to vector<4x8xf32>
    %32 = vector.shape_cast %31 : vector<4x8xf32> to vector<4x8x1xf32>
    %33 = arith.truncf %30 : vector<4x8x8xf32> to vector<4x8x8xbf16>
    %c0_19 = arith.constant 0 : index
    %c0_20 = arith.constant 0 : index
    %c0_21 = arith.constant 0 : index
    %34 = vector.load %arg21[%c0_19, %c0_20, %c0_21] : memref<4x8x8xbf16, #tpu.memory_space<vmem>>, vector<4x8x8xbf16>
    "tpu.trace_start"() <{level = 10 : i32, message = "hqk,hkd->hqd"}> : () -> ()
    %cst_22 = arith.constant dense<0.000000e+00> : vector<4x8x8xf32>
    %35 = tpu.matmul %33, %34, %cst_22 {dimension_numbers = #tpu.dot_dimension_numbers<[2], [1], [1], [2], [0, 0, 0, 1, 1, 2], [0], [0]>} : vector<4x8x8xbf16>, vector<4x8x8xbf16>, vector<4x8x8xf32> -> vector<4x8x8xf32>
    "tpu.trace_stop"() : () -> ()
    %36 = tpu.reciprocal %32 {approx = true} : vector<4x8x1xf32> -> vector<4x8x1xf32>
    %37 = vector.broadcast %36 : vector<4x8x1xf32> to vector<4x8x8xf32>
    %38 = arith.mulf %35, %37 : vector<4x8x8xf32>
    %39 = tpu.transpose %38, [1, 0, 2] : vector<4x8x8xf32> -> vector<8x4x8xf32>
    %40 = vector.shape_cast %39 : vector<8x4x8xf32> to vector<8x32xf32>
    %41 = arith.truncf %40 : vector<8x32xf32> to vector<8x32xbf16>
    %c0_23 = arith.constant 0 : index
    %c0_24 = arith.constant 0 : index
    %42 = vector.load %arg9[%c0_23, %c0_24] : memref<32x32xbf16, #tpu.memory_space<vmem>>, vector<32x32xbf16>
    %cst_25 = arith.constant dense<0.000000e+00> : vector<8x32xf32>
    %43 = tpu.matmul %41, %42, %cst_25 {dimension_numbers = #tpu.dot_dimension_numbers<[1], [0], [0], [1], [0, 0, 1, 1], [], []>} : vector<8x32xbf16>, vector<32x32xbf16>, vector<8x32xf32> -> vector<8x32xf32>
    %c0_26 = arith.constant 0 : index
    %c0_27 = arith.constant 0 : index
    %44 = vector.load %arg10[%c0_26, %c0_27] : memref<1x32xf32, #tpu.memory_space<vmem>>, vector<1x32xf32>
    %45 = vector.broadcast %44 : vector<1x32xf32> to vector<8x32xf32>
    %46 = arith.addf %43, %45 : vector<8x32xf32>
    %47 = arith.addf %4, %46 : vector<8x32xf32>
    %c0_28 = arith.constant 0 : index
    %c0_29 = arith.constant 0 : index
    %48 = vector.load %arg15[%c0_28, %c0_29] : memref<1x32xf32, #tpu.memory_space<vmem>>, vector<1x32xf32>
    %c0_30 = arith.constant 0 : index
    %c0_31 = arith.constant 0 : index
    %49 = vector.load %arg16[%c0_30, %c0_31] : memref<1x32xf32, #tpu.memory_space<vmem>>, vector<1x32xf32>
    %cst_32 = arith.constant dense<0.000000e+00> : vector<8xf32>
    %50 = vector.multi_reduction <add>, %47, %cst_32 [1] : vector<8x32xf32> to vector<8xf32>
    %51 = vector.shape_cast %50 : vector<8xf32> to vector<8x1xf32>
    %cst_33 = arith.constant 3.200000e+01 : f32
    %52 = vector.broadcast %cst_33 : f32 to vector<8x1xf32>
    %53 = arith.divf %51, %52 : vector<8x1xf32>
    %54 = vector.broadcast %53 : vector<8x1xf32> to vector<8x32xf32>
    %55 = arith.subf %47, %54 : vector<8x32xf32>
    %56 = arith.mulf %55, %55 : vector<8x32xf32>
    %cst_34 = arith.constant dense<0.000000e+00> : vector<8xf32>
    %57 = vector.multi_reduction <add>, %56, %cst_34 [1] : vector<8x32xf32> to vector<8xf32>
    %58 = vector.shape_cast %57 : vector<8xf32> to vector<8x1xf32>
    %cst_35 = arith.constant 3.200000e+01 : f32
    %59 = vector.broadcast %cst_35 : f32 to vector<8x1xf32>
    %60 = arith.divf %58, %59 : vector<8x1xf32>
    %61 = vector.broadcast %53 : vector<8x1xf32> to vector<8x32xf32>
    %62 = arith.subf %47, %61 : vector<8x32xf32>
    %cst_36 = arith.constant 9.99999974E-6 : f32
    %63 = vector.broadcast %cst_36 : f32 to vector<8x1xf32>
    %64 = arith.addf %60, %63 : vector<8x1xf32>
    %65 = math.rsqrt %64 : vector<8x1xf32>
    %66 = vector.broadcast %65 : vector<8x1xf32> to vector<8x32xf32>
    %67 = arith.mulf %62, %66 : vector<8x32xf32>
    %68 = vector.broadcast %48 : vector<1x32xf32> to vector<8x32xf32>
    %69 = arith.mulf %67, %68 : vector<8x32xf32>
    %70 = vector.broadcast %49 : vector<1x32xf32> to vector<8x32xf32>
    %71 = arith.addf %69, %70 : vector<8x32xf32>
    %72 = arith.truncf %71 : vector<8x32xf32> to vector<8x32xbf16>
    %c0_37 = arith.constant 0 : index
    %c0_38 = arith.constant 0 : index
    %73 = vector.load %arg11[%c0_37, %c0_38] : memref<32x64xbf16, #tpu.memory_space<vmem>>, vector<32x64xbf16>
    %cst_39 = arith.constant dense<0.000000e+00> : vector<8x64xf32>
    %74 = tpu.matmul %72, %73, %cst_39 {dimension_numbers = #tpu.dot_dimension_numbers<[1], [0], [0], [1], [0, 0, 1, 1], [], []>} : vector<8x32xbf16>, vector<32x64xbf16>, vector<8x64xf32> -> vector<8x64xf32>
    %c0_40 = arith.constant 0 : index
    %c0_41 = arith.constant 0 : index
    %75 = vector.load %arg12[%c0_40, %c0_41] : memref<1x64xf32, #tpu.memory_space<vmem>>, vector<1x64xf32>
    %76 = vector.broadcast %75 : vector<1x64xf32> to vector<8x64xf32>
    %77 = arith.addf %74, %76 : vector<8x64xf32>
    %cst_42 = arith.constant 0.000000e+00 : f32
    %78 = vector.broadcast %cst_42 : f32 to vector<8x64xf32>
    %79 = arith.maximumf %77, %78 : vector<8x64xf32>
    %80 = arith.truncf %79 : vector<8x64xf32> to vector<8x64xbf16>
    %c0_43 = arith.constant 0 : index
    %c0_44 = arith.constant 0 : index
    %81 = vector.load %arg13[%c0_43, %c0_44] : memref<64x32xbf16, #tpu.memory_space<vmem>>, vector<64x32xbf16>
    %cst_45 = arith.constant dense<0.000000e+00> : vector<8x32xf32>
    %82 = tpu.matmul %80, %81, %cst_45 {dimension_numbers = #tpu.dot_dimension_numbers<[1], [0], [0], [1], [0, 0, 1, 1], [], []>} : vector<8x64xbf16>, vector<64x32xbf16>, vector<8x32xf32> -> vector<8x32xf32>
    %c0_46 = arith.constant 0 : index
    %c0_47 = arith.constant 0 : index
    %83 = vector.load %arg14[%c0_46, %c0_47] : memref<1x32xf32, #tpu.memory_space<vmem>>, vector<1x32xf32>
    %84 = vector.broadcast %83 : vector<1x32xf32> to vector<8x32xf32>
    %85 = arith.addf %82, %84 : vector<8x32xf32>
    %86 = arith.addf %71, %85 : vector<8x32xf32>
    %c0_48 = arith.constant 0 : index
    %c0_49 = arith.constant 0 : index
    %87 = vector.load %arg17[%c0_48, %c0_49] : memref<1x32xf32, #tpu.memory_space<vmem>>, vector<1x32xf32>
    %c0_50 = arith.constant 0 : index
    %c0_51 = arith.constant 0 : index
    %88 = vector.load %arg18[%c0_50, %c0_51] : memref<1x32xf32, #tpu.memory_space<vmem>>, vector<1x32xf32>
    %cst_52 = arith.constant dense<0.000000e+00> : vector<8xf32>
    %89 = vector.multi_reduction <add>, %86, %cst_52 [1] : vector<8x32xf32> to vector<8xf32>
    %90 = vector.shape_cast %89 : vector<8xf32> to vector<8x1xf32>
    %cst_53 = arith.constant 3.200000e+01 : f32
    %91 = vector.broadcast %cst_53 : f32 to vector<8x1xf32>
    %92 = arith.divf %90, %91 : vector<8x1xf32>
    %93 = vector.broadcast %92 : vector<8x1xf32> to vector<8x32xf32>
    %94 = arith.subf %86, %93 : vector<8x32xf32>
    %95 = arith.mulf %94, %94 : vector<8x32xf32>
    %cst_54 = arith.constant dense<0.000000e+00> : vector<8xf32>
    %96 = vector.multi_reduction <add>, %95, %cst_54 [1] : vector<8x32xf32> to vector<8xf32>
    %97 = vector.shape_cast %96 : vector<8xf32> to vector<8x1xf32>
    %cst_55 = arith.constant 3.200000e+01 : f32
    %98 = vector.broadcast %cst_55 : f32 to vector<8x1xf32>
    %99 = arith.divf %97, %98 : vector<8x1xf32>
    %100 = vector.broadcast %92 : vector<8x1xf32> to vector<8x32xf32>
    %101 = arith.subf %86, %100 : vector<8x32xf32>
    %cst_56 = arith.constant 9.99999974E-6 : f32
    %102 = vector.broadcast %cst_56 : f32 to vector<8x1xf32>
    %103 = arith.addf %99, %102 : vector<8x1xf32>
    %104 = math.rsqrt %103 : vector<8x1xf32>
    %105 = vector.broadcast %104 : vector<8x1xf32> to vector<8x32xf32>
    %106 = arith.mulf %101, %105 : vector<8x32xf32>
    %107 = vector.broadcast %87 : vector<1x32xf32> to vector<8x32xf32>
    %108 = arith.mulf %106, %107 : vector<8x32xf32>
    %109 = vector.broadcast %88 : vector<1x32xf32> to vector<8x32xf32>
    %110 = arith.addf %108, %109 : vector<8x32xf32>
    %c0_57 = arith.constant 0 : index
    %c0_58 = arith.constant 0 : index
    %c0_59 = arith.constant 0 : index
    %111 = vector.load %arg19[%c0_57, %c0_58, %c0_59] : memref<1x8x32xf32, #tpu.memory_space<vmem>>, vector<1x8x32xf32>
    %112 = vector.shape_cast %111 : vector<1x8x32xf32> to vector<8x32xf32>
    %113 = vector.shape_cast %110 : vector<8x32xf32> to vector<1x8x32xf32>
    tpu.vector_store %arg19[%c0_57, %c0_58, %c0_59], %113 {strides = array<i32>} : memref<1x8x32xf32, #tpu.memory_space<vmem>>, vector<1x8x32xf32>,
    return
  }
  func.func @transform_0(%arg0: i32, %arg1: i32) -> (i32, i32, i32) {
    %c0_i32 = arith.constant 0 : i32
    %c0_i32_0 = arith.constant 0 : i32
    %c0_i32_1 = arith.constant 0 : i32
    return %arg0, %c0_i32, %c0_i32_0 : i32, i32, i32
  }
  func.func @transform_1(%arg0: i32, %arg1: i32) -> (i32, i32, i32) {
    %c0_i32 = arith.constant 0 : i32
    %c0_i32_0 = arith.constant 0 : i32
    return %arg0, %arg1, %c0_i32 : i32, i32, i32
  }
  func.func @transform_2(%arg0: i32, %arg1: i32) -> (i32, i32, i32) {
    %c0_i32 = arith.constant 0 : i32
    %c0_i32_0 = arith.constant 0 : i32
    %c0_i32_1 = arith.constant 0 : i32
    return %arg0, %c0_i32, %c0_i32_0 : i32, i32, i32
  }
  func.func @transform_3(%arg0: i32, %arg1: i32) -> (i32, i32) {
    %c0_i32 = arith.constant 0 : i32
    %c0_i32_0 = arith.constant 0 : i32
    %c0_i32_1 = arith.constant 0 : i32
    return %c0_i32, %c0_i32_0 : i32, i32
  }
  func.func @transform_4(%arg0: i32, %arg1: i32) -> (i32, i32) {
    %c0_i32 = arith.constant 0 : i32
    %c0_i32_0 = arith.constant 0 : i32
    %c0_i32_1 = arith.constant 0 : i32
    return %c0_i32, %c0_i32_0 : i32, i32
  }
  func.func @transform_5(%arg0: i32, %arg1: i32) -> (i32, i32) {
    %c0_i32 = arith.constant 0 : i32
    %c0_i32_0 = arith.constant 0 : i32
    %c0_i32_1 = arith.constant 0 : i32
    return %c0_i32, %c0_i32_0 : i32, i32
  }
  func.func @transform_6(%arg0: i32, %arg1: i32) -> (i32, i32) {
    %c0_i32 = arith.constant 0 : i32
    %c0_i32_0 = arith.constant 0 : i32
    %c0_i32_1 = arith.constant 0 : i32
    return %c0_i32, %c0_i32_0 : i32, i32
  }
  func.func @transform_7(%arg0: i32, %arg1: i32) -> (i32, i32) {
    %c0_i32 = arith.constant 0 : i32
    %c0_i32_0 = arith.constant 0 : i32
    %c0_i32_1 = arith.constant 0 : i32
    return %c0_i32, %c0_i32_0 : i32, i32
  }
  func.func @transform_8(%arg0: i32, %arg1: i32) -> (i32, i32) {
    %c0_i32 = arith.constant 0 : i32
    %c0_i32_0 = arith.constant 0 : i32
    %c0_i32_1 = arith.constant 0 : i32
    return %c0_i32, %c0_i32_0 : i32, i32
  }
  func.func @transform_9(%arg0: i32, %arg1: i32) -> (i32, i32) {
    %c0_i32 = arith.constant 0 : i32
    %c0_i32_0 = arith.constant 0 : i32
    %c0_i32_1 = arith.constant 0 : i32
    return %c0_i32, %c0_i32_0 : i32, i32
  }
  func.func @transform_10(%arg0: i32, %arg1: i32) -> (i32, i32) {
    %c0_i32 = arith.constant 0 : i32
    %c0_i32_0 = arith.constant 0 : i32
    %c0_i32_1 = arith.constant 0 : i32
    return %c0_i32, %c0_i32_0 : i32, i32
  }
  func.func @transform_11(%arg0: i32, %arg1: i32) -> (i32, i32) {
    %c0_i32 = arith.constant 0 : i32
    %c0_i32_0 = arith.constant 0 : i32
    %c0_i32_1 = arith.constant 0 : i32
    return %c0_i32, %c0_i32_0 : i32, i32
  }
  func.func @transform_12(%arg0: i32, %arg1: i32) -> (i32, i32) {
    %c0_i32 = arith.constant 0 : i32
    %c0_i32_0 = arith.constant 0 : i32
    %c0_i32_1 = arith.constant 0 : i32
    return %c0_i32, %c0_i32_0 : i32, i32
  }
  func.func @transform_13(%arg0: i32, %arg1: i32) -> (i32, i32) {
    %c0_i32 = arith.constant 0 : i32
    %c0_i32_0 = arith.constant 0 : i32
    %c0_i32_1 = arith.constant 0 : i32
    return %c0_i32, %c0_i32_0 : i32, i32
  }
  func.func @transform_14(%arg0: i32, %arg1: i32) -> (i32, i32) {
    %c0_i32 = arith.constant 0 : i32
    %c0_i32_0 = arith.constant 0 : i32
    %c0_i32_1 = arith.constant 0 : i32
    return %c0_i32, %c0_i32_0 : i32, i32
  }
  func.func @transform_15(%arg0: i32, %arg1: i32) -> (i32, i32) {
    %c0_i32 = arith.constant 0 : i32
    %c0_i32_0 = arith.constant 0 : i32
    %c0_i32_1 = arith.constant 0 : i32
    return %c0_i32, %c0_i32_0 : i32, i32
  }
  func.func @transform_16(%arg0: i32, %arg1: i32) -> (i32, i32) {
    %c0_i32 = arith.constant 0 : i32
    %c0_i32_0 = arith.constant 0 : i32
    %c0_i32_1 = arith.constant 0 : i32
    return %c0_i32, %c0_i32_0 : i32, i32
  }
  func.func @transform_17(%arg0: i32, %arg1: i32) -> (i32, i32, i32) {
    %c0_i32 = arith.constant 0 : i32
    %c0_i32_0 = arith.constant 0 : i32
    return %arg0, %arg1, %c0_i32 : i32, i32, i32
  }
}

module attributes {stable_mosaic.version = 11 : i64} {
  func.func @encoder_layer_kernel(%arg0: i32, %arg1: i32, %arg2: memref<1x8x32xf32, #tpu.memory_space<vmem>>, %arg3: memref<1x8x32xf32, #tpu.memory_space<vmem>>, %arg4: memref<1x1x8xf32, #tpu.memory_space<vmem>>, %arg5: memref<32x32xbf16, #tpu.memory_space<vmem>>, %arg6: memref<1x32xf32, #tpu.memory_space<vmem>>, %arg7: memref<32x64xbf16, #tpu.memory_space<vmem>>, %arg8: memref<1x64xf32, #tpu.memory_space<vmem>>, %arg9: memref<32x32xbf16, #tpu.memory_space<vmem>>, %arg10: memref<1x32xf32, #tpu.memory_space<vmem>>, %arg11: memref<32x64xbf16, #tpu.memory_space<vmem>>, %arg12: memref<1x64xf32, #tpu.memory_space<vmem>>, %arg13: memref<64x32xbf16, #tpu.memory_space<vmem>>, %arg14: memref<1x32xf32, #tpu.memory_space<vmem>>, %arg15: memref<1x32xf32, #tpu.memory_space<vmem>>, %arg16: memref<1x32xf32, #tpu.memory_space<vmem>>, %arg17: memref<1x32xf32, #tpu.memory_space<vmem>>, %arg18: memref<1x32xf32, #tpu.memory_space<vmem>>, %arg19: memref<1x8x32xf32, #tpu.memory_space<vmem>>, %arg20: memref<4x8x8xbf16, #tpu.memory_space<vmem>>, %arg21: memref<4x8x8xbf16, #tpu.memory_space<vmem>>) attributes {dimension_semantics = [#tpu.dimension_semantics<parallel>, #tpu.dimension_semantics<arbitrary>], iteration_bounds = array<i64: 2, 1>, scalar_prefetch = 0 : i64, scratch_operands = 2 : i64, tpu.core_type = #tpu.core_type<tc>, window_params = [{transform_indices = @transform_0, window_bounds = array<i64: 1, 8, 32>}, {transform_indices = @transform_1, window_bounds = array<i64: 1, 8, 32>}, {transform_indices = @transform_2, window_bounds = array<i64: 1, 1, 8>}, {pipeline_mode = #tpu.pipeline_mode<synchronous>, transform_indices = @transform_3, window_bounds = array<i64: 32, 32>}, {pipeline_mode = #tpu.pipeline_mode<synchronous>, transform_indices = @transform_4, window_bounds = array<i64: 1, 32>}, {pipeline_mode = #tpu.pipeline_mode<synchronous>, transform_indices = @transform_5, window_bounds = array<i64: 32, 64>}, {pipeline_mode = #tpu.pipeline_mode<synchronous>, transform_indices = @transform_6, window_bounds = array<i64: 1, 64>}, {pipeline_mode = #tpu.pipeline_mode<synchronous>, transform_indices = @transform_7, window_bounds = array<i64: 32, 32>}, {pipeline_mode = #tpu.pipeline_mode<synchronous>, transform_indices = @transform_8, window_bounds = array<i64: 1, 32>}, {pipeline_mode = #tpu.pipeline_mode<synchronous>, transform_indices = @transform_9, window_bounds = array<i64: 32, 64>}, {pipeline_mode = #tpu.pipeline_mode<synchronous>, transform_indices = @transform_10, window_bounds = array<i64: 1, 64>}, {pipeline_mode = #tpu.pipeline_mode<synchronous>, transform_indices = @transform_11, window_bounds = array<i64: 64, 32>}, {pipeline_mode = #tpu.pipeline_mode<synchronous>, transform_indices = @transform_12, window_bounds = array<i64: 1, 32>}, {pipeline_mode = #tpu.pipeline_mode<synchronous>, transform_indices = @transform_13, window_bounds = array<i64: 1, 32>}, {pipeline_mode = #tpu.pipeline_mode<synchronous>, transform_indices = @transform_14, window_bounds = array<i64: 1, 32>}, {pipeline_mode = #tpu.pipeline_mode<synchronous>, transform_indices = @transform_15, window_bounds = array<i64: 1, 32>}, {pipeline_mode = #tpu.pipeline_mode<synchronous>, transform_indices = @transform_16, window_bounds = array<i64: 1, 32>}, {transform_indices = @transform_17, window_bounds = array<i64: 1, 8, 32>}]} {
    %c0_i32 = arith.constant 0 : i32
    %0 = arith.cmpi eq, %arg1, %c0_i32 : i32
    %1 = arith.extui %0 : i1 to i32
    %c0_i32_0 = arith.constant 0 : i32
    %2 = arith.cmpi ne, %1, %c0_i32_0 : i32
    scf.if %2 {
      %c0_60 = arith.constant 0 : index
      %c0_61 = arith.constant 0 : index
      %c0_62 = arith.constant 0 : index
      %114 = vector.load %arg2[%c0_60, %c0_61, %c0_62] : memref<1x8x32xf32, #tpu.memory_space<vmem>>, vector<1x8x32xf32>
      %115 = vector.shape_cast %114 : vector<1x8x32xf32> to vector<8x32xf32>
      %116 = arith.truncf %115 : vector<8x32xf32> to vector<8x32xbf16>
      %c0_63 = arith.constant 0 : index
      %c0_64 = arith.constant 0 : index
      %117 = vector.load %arg7[%c0_63, %c0_64] : memref<32x64xbf16, #tpu.memory_space<vmem>>, vector<32x64xbf16>
      %cst_65 = arith.constant dense<0.000000e+00> : vector<8x64xf32>
      %118 = tpu.matmul %116, %117, %cst_65 {dimension_numbers = #tpu.dot_dimension_numbers<[1], [0], [0], [1], [0, 0, 1, 1], [], []>} : vector<8x32xbf16>, vector<32x64xbf16>, vector<8x64xf32> -> vector<8x64xf32>
      %c0_66 = arith.constant 0 : index
      %c0_67 = arith.constant 0 : index
      %119 = vector.load %arg8[%c0_66, %c0_67] : memref<1x64xf32, #tpu.memory_space<vmem>>, vector<1x64xf32>
      %120 = vector.broadcast %119 : vector<1x64xf32> to vector<8x64xf32>
      %121 = arith.addf %118, %120 : vector<8x64xf32>
      %122 = arith.truncf %121 : vector<8x64xf32> to vector<8x64xbf16>
      %123 = vector.extract_strided_slice %122 {offsets = [0, 0], sizes = [8, 32], strides = [1, 1]} : vector<8x64xbf16> to vector<8x32xbf16>
      %124 = vector.shape_cast %123 : vector<8x32xbf16> to vector<8x4x8xbf16>
      %125 = tpu.transpose %124, [1, 0, 2] : vector<8x4x8xbf16> -> vector<4x8x8xbf16>
      %c0_68 = arith.constant 0 : index
      %c0_69 = arith.constant 0 : index
      %c0_70 = arith.constant 0 : index
      %126 = vector.load %arg20[%c0_68, %c0_69, %c0_70] : memref<4x8x8xbf16, #tpu.memory_space<vmem>>, vector<4x8x8xbf16>
      tpu.vector_store %arg20[%c0_68, %c0_69, %c0_70], %125 {strides = array<i32>} : memref<4x8x8xbf16, #tpu.memory_space<vmem>>, vector<4x8x8xbf16>,
      %127 = vector.extract_strided_slice %122 {offsets = [0, 32], sizes = [8, 32], strides = [1, 1]} : vector<8x64xbf16> to vector<8x32xbf16>
      %128 = vector.shape_cast %127 : vector<8x32xbf16> to vector<8x4x8xbf16>
      %129 = tpu.transpose %128, [1, 0, 2] : vector<8x4x8xbf16> -> vector<4x8x8xbf16>
      %c0_71 = arith.constant 0 : index
      %c0_72 = arith.constant 0 : index
      %c0_73 = arith.constant 0 : index
      %130 = vector.load %arg21[%c0_71, %c0_72, %c0_73] : memref<4x8x8xbf16, #tpu.memory_space<vmem>>, vector<4x8x8xbf16>
      tpu.vector_store %arg21[%c0_71, %c0_72, %c0_73], %129 {strides = array<i32>} : memref<4x8x8xbf16, #tpu.memory_space<vmem>>, vector<4x8x8xbf16>,
    } else {
    }
    %c0 = arith.constant 0 : index
    %c0_1 = arith.constant 0 : index
    %c0_2 = arith.constant 0 : index
    %3 = vector.load %arg3[%c0, %c0_1, %c0_2] : memref<1x8x32xf32, #tpu.memory_space<vmem>>, vector<1x8x32xf32>
    %4 = vector.shape_cast %3 : vector<1x8x32xf32> to vector<8x32xf32>
    %5 = arith.truncf %4 : vector<8x32xf32> to vector<8x32xbf16>
    %c0_3 = arith.constant 0 : index
    %c0_4 = arith.constant 0 : index
    %6 = vector.load %arg5[%c0_3, %c0_4] : memref<32x32xbf16, #tpu.memory_space<vmem>>, vector<32x32xbf16>
    %cst = arith.constant dense<0.000000e+00> : vector<8x32xf32>
    %7 = tpu.matmul %5, %6, %cst {dimension_numbers = #tpu.dot_dimension_numbers<[1], [0], [0], [1], [0, 0, 1, 1], [], []>} : vector<8x32xbf16>, vector<32x32xbf16>, vector<8x32xf32> -> vector<8x32xf32>
    %c0_5 = arith.constant 0 : index
    %c0_6 = arith.constant 0 : index
    %8 = vector.load %arg6[%c0_5, %c0_6] : memref<1x32xf32, #tpu.memory_space<vmem>>, vector<1x32xf32>
    %9 = vector.broadcast %8 : vector<1x32xf32> to vector<8x32xf32>
    %10 = arith.addf %7, %9 : vector<8x32xf32>
    %11 = arith.truncf %10 : vector<8x32xf32> to vector<8x32xbf16>
    %12 = vector.shape_cast %11 : vector<8x32xbf16> to vector<8x4x8xbf16>
    %13 = tpu.transpose %12, [1, 0, 2] : vector<8x4x8xbf16> -> vector<4x8x8xbf16>
    %c0_7 = arith.constant 0 : index
    %c0_8 = arith.constant 0 : index
    %c0_9 = arith.constant 0 : index
    %14 = vector.load %arg20[%c0_7, %c0_8, %c0_9] : memref<4x8x8xbf16, #tpu.memory_space<vmem>>, vector<4x8x8xbf16>
    "tpu.trace_start"() <{level = 10 : i32, message = "hqd,hkd->hqk"}> : () -> ()
    %cst_10 = arith.constant dense<0.000000e+00> : vector<4x8x8xf32>
    %15 = tpu.matmul %13, %14, %cst_10 {dimension_numbers = #tpu.dot_dimension_numbers<[2], [2], [1], [1], [0, 0, 0, 1, 1, 1], [0], [0]>} : vector<4x8x8xbf16>, vector<4x8x8xbf16>, vector<4x8x8xf32> -> vector<4x8x8xf32>
    "tpu.trace_stop"() : () -> ()
    %c0_11 = arith.constant 0 : index
    %c0_12 = arith.constant 0 : index
    %c0_13 = arith.constant 0 : index
    %16 = vector.load %arg4[%c0_11, %c0_12, %c0_13] : memref<1x1x8xf32, #tpu.memory_space<vmem>>, vector<1x1x8xf32>
    %17 = vector.shape_cast %16 : vector<1x1x8xf32> to vector<1x8xf32>
    %cst_14 = arith.constant 0.000000e+00 : f32
    %18 = vector.broadcast %cst_14 : f32 to vector<1x8xf32>
    %19 = arith.cmpf ogt, %17, %18 : vector<1x8xf32>
    %cst_15 = arith.constant 0.000000e+00 : f32
    %cst_16 = arith.constant -1.000000e+09 : f32
    %20 = vector.broadcast %cst_15 : f32 to vector<1x8xf32>
    %21 = vector.broadcast %cst_16 : f32 to vector<1x8xf32>
    %22 = arith.select %19, %20, %21 : vector<1x8xi1>, vector<1x8xf32>
    %23 = vector.shape_cast %22 : vector<1x8xf32> to vector<1x1x8xf32>
    %24 = vector.broadcast %23 : vector<1x1x8xf32> to vector<4x8x8xf32>
    %25 = arith.addf %15, %24 : vector<4x8x8xf32>
    %cst_17 = arith.constant dense<0xFF800000> : vector<4x8xf32>
    %26 = vector.multi_reduction <maximumf>, %25, %cst_17 [2] : vector<4x8x8xf32> to vector<4x8xf32>
    %27 = vector.shape_cast %26 : vector<4x8xf32> to vector<4x8x1xf32>
    %28 = vector.broadcast %27 : vector<4x8x1xf32> to vector<4x8x8xf32>
    %29 = arith.subf %25, %28 : vector<4x8x8xf32>
    %30 = math.exp %29 : vector<4x8x8xf32>
    %cst_18 = arith.constant dense<0.000000e+00> : vector<4x8xf32>
    %31 = vector.multi_reduction <add>, %30, %cst_18 [2] : vector<4x8x8xf32> to vector<4x8xf32>
    %32 = vector.shape_cast %31 : vector<4x8xf32> to vector<4x8x1xf32>
    %33 = arith.truncf %30 : vector<4x8x8xf32> to vector<4x8x8xbf16>
    %c0_19 = arith.constant 0 : index
    %c0_20 = arith.constant 0 : index
    %c0_21 = arith.constant 0 : index
    %34 = vector.load %arg21[%c0_19, %c0_20, %c0_21] : memref<4x8x8xbf16, #tpu.memory_space<vmem>>, vector<4x8x8xbf16>
    "tpu.trace_start"() <{level = 10 : i32, message = "hqk,hkd->hqd"}> : () -> ()
    %cst_22 = arith.constant dense<0.000000e+00> : vector<4x8x8xf32>
    %35 = tpu.matmul %33, %34, %cst_22 {dimension_numbers = #tpu.dot_dimension_numbers<[2], [1], [1], [2], [0, 0, 0, 1, 1, 2], [0], [0]>} : vector<4x8x8xbf16>, vector<4x8x8xbf16>, vector<4x8x8xf32> -> vector<4x8x8xf32>
    "tpu.trace_stop"() : () -> ()
    %36 = tpu.reciprocal %32 {approx = true} : vector<4x8x1xf32> -> vector<4x8x1xf32>
    %37 = vector.broadcast %36 : vector<4x8x1xf32> to vector<4x8x8xf32>
    %38 = arith.mulf %35, %37 : vector<4x8x8xf32>
    %39 = tpu.transpose %38, [1, 0, 2] : vector<4x8x8xf32> -> vector<8x4x8xf32>
    %40 = vector.shape_cast %39 : vector<8x4x8xf32> to vector<8x32xf32>
    %41 = arith.truncf %40 : vector<8x32xf32> to vector<8x32xbf16>
    %c0_23 = arith.constant 0 : index
    %c0_24 = arith.constant 0 : index
    %42 = vector.load %arg9[%c0_23, %c0_24] : memref<32x32xbf16, #tpu.memory_space<vmem>>, vector<32x32xbf16>
    %cst_25 = arith.constant dense<0.000000e+00> : vector<8x32xf32>
    %43 = tpu.matmul %41, %42, %cst_25 {dimension_numbers = #tpu.dot_dimension_numbers<[1], [0], [0], [1], [0, 0, 1, 1], [], []>} : vector<8x32xbf16>, vector<32x32xbf16>, vector<8x32xf32> -> vector<8x32xf32>
    %c0_26 = arith.constant 0 : index
    %c0_27 = arith.constant 0 : index
    %44 = vector.load %arg10[%c0_26, %c0_27] : memref<1x32xf32, #tpu.memory_space<vmem>>, vector<1x32xf32>
    %45 = vector.broadcast %44 : vector<1x32xf32> to vector<8x32xf32>
    %46 = arith.addf %43, %45 : vector<8x32xf32>
    %47 = arith.addf %4, %46 : vector<8x32xf32>
    %c0_28 = arith.constant 0 : index
    %c0_29 = arith.constant 0 : index
    %48 = vector.load %arg15[%c0_28, %c0_29] : memref<1x32xf32, #tpu.memory_space<vmem>>, vector<1x32xf32>
    %c0_30 = arith.constant 0 : index
    %c0_31 = arith.constant 0 : index
    %49 = vector.load %arg16[%c0_30, %c0_31] : memref<1x32xf32, #tpu.memory_space<vmem>>, vector<1x32xf32>
    %cst_32 = arith.constant dense<0.000000e+00> : vector<8xf32>
    %50 = vector.multi_reduction <add>, %47, %cst_32 [1] : vector<8x32xf32> to vector<8xf32>
    %51 = vector.shape_cast %50 : vector<8xf32> to vector<8x1xf32>
    %cst_33 = arith.constant 3.200000e+01 : f32
    %52 = vector.broadcast %cst_33 : f32 to vector<8x1xf32>
    %53 = arith.divf %51, %52 : vector<8x1xf32>
    %54 = vector.broadcast %53 : vector<8x1xf32> to vector<8x32xf32>
    %55 = arith.subf %47, %54 : vector<8x32xf32>
    %56 = arith.mulf %55, %55 : vector<8x32xf32>
    %cst_34 = arith.constant dense<0.000000e+00> : vector<8xf32>
    %57 = vector.multi_reduction <add>, %56, %cst_34 [1] : vector<8x32xf32> to vector<8xf32>
    %58 = vector.shape_cast %57 : vector<8xf32> to vector<8x1xf32>
    %cst_35 = arith.constant 3.200000e+01 : f32
    %59 = vector.broadcast %cst_35 : f32 to vector<8x1xf32>
    %60 = arith.divf %58, %59 : vector<8x1xf32>
    %61 = vector.broadcast %53 : vector<8x1xf32> to vector<8x32xf32>
    %62 = arith.subf %47, %61 : vector<8x32xf32>
    %cst_36 = arith.constant 9.99999974E-6 : f32
    %63 = vector.broadcast %cst_36 : f32 to vector<8x1xf32>
    %64 = arith.addf %60, %63 : vector<8x1xf32>
    %65 = math.rsqrt %64 : vector<8x1xf32>
    %66 = vector.broadcast %65 : vector<8x1xf32> to vector<8x32xf32>
    %67 = arith.mulf %62, %66 : vector<8x32xf32>
    %68 = vector.broadcast %48 : vector<1x32xf32> to vector<8x32xf32>
    %69 = arith.mulf %67, %68 : vector<8x32xf32>
    %70 = vector.broadcast %49 : vector<1x32xf32> to vector<8x32xf32>
    %71 = arith.addf %69, %70 : vector<8x32xf32>
    %72 = arith.truncf %71 : vector<8x32xf32> to vector<8x32xbf16>
    %c0_37 = arith.constant 0 : index
    %c0_38 = arith.constant 0 : index
    %73 = vector.load %arg11[%c0_37, %c0_38] : memref<32x64xbf16, #tpu.memory_space<vmem>>, vector<32x64xbf16>
    %cst_39 = arith.constant dense<0.000000e+00> : vector<8x64xf32>
    %74 = tpu.matmul %72, %73, %cst_39 {dimension_numbers = #tpu.dot_dimension_numbers<[1], [0], [0], [1], [0, 0, 1, 1], [], []>} : vector<8x32xbf16>, vector<32x64xbf16>, vector<8x64xf32> -> vector<8x64xf32>
    %c0_40 = arith.constant 0 : index
    %c0_41 = arith.constant 0 : index
    %75 = vector.load %arg12[%c0_40, %c0_41] : memref<1x64xf32, #tpu.memory_space<vmem>>, vector<1x64xf32>
    %76 = vector.broadcast %75 : vector<1x64xf32> to vector<8x64xf32>
    %77 = arith.addf %74, %76 : vector<8x64xf32>
    %cst_42 = arith.constant 0.000000e+00 : f32
    %78 = vector.broadcast %cst_42 : f32 to vector<8x64xf32>
    %79 = arith.maximumf %77, %78 : vector<8x64xf32>
    %80 = arith.truncf %79 : vector<8x64xf32> to vector<8x64xbf16>
    %c0_43 = arith.constant 0 : index
    %c0_44 = arith.constant 0 : index
    %81 = vector.load %arg13[%c0_43, %c0_44] : memref<64x32xbf16, #tpu.memory_space<vmem>>, vector<64x32xbf16>
    %cst_45 = arith.constant dense<0.000000e+00> : vector<8x32xf32>
    %82 = tpu.matmul %80, %81, %cst_45 {dimension_numbers = #tpu.dot_dimension_numbers<[1], [0], [0], [1], [0, 0, 1, 1], [], []>} : vector<8x64xbf16>, vector<64x32xbf16>, vector<8x32xf32> -> vector<8x32xf32>
    %c0_46 = arith.constant 0 : index
    %c0_47 = arith.constant 0 : index
    %83 = vector.load %arg14[%c0_46, %c0_47] : memref<1x32xf32, #tpu.memory_space<vmem>>, vector<1x32xf32>
    %84 = vector.broadcast %83 : vector<1x32xf32> to vector<8x32xf32>
    %85 = arith.addf %82, %84 : vector<8x32xf32>
    %86 = arith.addf %71, %85 : vector<8x32xf32>
    %c0_48 = arith.constant 0 : index
    %c0_49 = arith.constant 0 : index
    %87 = vector.load %arg17[%c0_48, %c0_49] : memref<1x32xf32, #tpu.memory_space<vmem>>, vector<1x32xf32>
    %c0_50 = arith.constant 0 : index
    %c0_51 = arith.constant 0 : index
    %88 = vector.load %arg18[%c0_50, %c0_51] : memref<1x32xf32, #tpu.memory_space<vmem>>, vector<1x32xf32>
    %cst_52 = arith.constant dense<0.000000e+00> : vector<8xf32>
    %89 = vector.multi_reduction <add>, %86, %cst_52 [1] : vector<8x32xf32> to vector<8xf32>
    %90 = vector.shape_cast %89 : vector<8xf32> to vector<8x1xf32>
    %cst_53 = arith.constant 3.200000e+01 : f32
    %91 = vector.broadcast %cst_53 : f32 to vector<8x1xf32>
    %92 = arith.divf %90, %91 : vector<8x1xf32>
    %93 = vector.broadcast %92 : vector<8x1xf32> to vector<8x32xf32>
    %94 = arith.subf %86, %93 : vector<8x32xf32>
    %95 = arith.mulf %94, %94 : vector<8x32xf32>
    %cst_54 = arith.constant dense<0.000000e+00> : vector<8xf32>
    %96 = vector.multi_reduction <add>, %95, %cst_54 [1] : vector<8x32xf32> to vector<8xf32>
    %97 = vector.shape_cast %96 : vector<8xf32> to vector<8x1xf32>
    %cst_55 = arith.constant 3.200000e+01 : f32
    %98 = vector.broadcast %cst_55 : f32 to vector<8x1xf32>
    %99 = arith.divf %97, %98 : vector<8x1xf32>
    %100 = vector.broadcast %92 : vector<8x1xf32> to vector<8x32xf32>
    %101 = arith.subf %86, %100 : vector<8x32xf32>
    %cst_56 = arith.constant 9.99999974E-6 : f32
    %102 = vector.broadcast %cst_56 : f32 to vector<8x1xf32>
    %103 = arith.addf %99, %102 : vector<8x1xf32>
    %104 = math.rsqrt %103 : vector<8x1xf32>
    %105 = vector.broadcast %104 : vector<8x1xf32> to vector<8x32xf32>
    %106 = arith.mulf %101, %105 : vector<8x32xf32>
    %107 = vector.broadcast %87 : vector<1x32xf32> to vector<8x32xf32>
    %108 = arith.mulf %106, %107 : vector<8x32xf32>
    %109 = vector.broadcast %88 : vector<1x32xf32> to vector<8x32xf32>
    %110 = arith.addf %108, %109 : vector<8x32xf32>
    %c0_57 = arith.constant 0 : index
    %c0_58 = arith.constant 0 : index
    %c0_59 = arith.constant 0 : index
    %111 = vector.load %arg19[%c0_57, %c0_58, %c0_59] : memref<1x8x32xf32, #tpu.memory_space<vmem>>, vector<1x8x32xf32>
    %112 = vector.shape_cast %111 : vector<1x8x32xf32> to vector<8x32xf32>
    %113 = vector.shape_cast %110 : vector<8x32xf32> to vector<1x8x32xf32>
    tpu.vector_store %arg19[%c0_57, %c0_58, %c0_59], %113 {strides = array<i32>} : memref<1x8x32xf32, #tpu.memory_space<vmem>>, vector<1x8x32xf32>,
    return
  }
  func.func @transform_0(%arg0: i32, %arg1: i32) -> (i32, i32, i32) {
    %c0_i32 = arith.constant 0 : i32
    %c0_i32_0 = arith.constant 0 : i32
    %c0_i32_1 = arith.constant 0 : i32
    return %arg0, %c0_i32, %c0_i32_0 : i32, i32, i32
  }
  func.func @transform_1(%arg0: i32, %arg1: i32) -> (i32, i32, i32) {
    %c0_i32 = arith.constant 0 : i32
    %c0_i32_0 = arith.constant 0 : i32
    return %arg0, %arg1, %c0_i32 : i32, i32, i32
  }
  func.func @transform_2(%arg0: i32, %arg1: i32) -> (i32, i32, i32) {
    %c0_i32 = arith.constant 0 : i32
    %c0_i32_0 = arith.constant 0 : i32
    %c0_i32_1 = arith.constant 0 : i32
    return %arg0, %c0_i32, %c0_i32_0 : i32, i32, i32
  }
  func.func @transform_3(%arg0: i32, %arg1: i32) -> (i32, i32) {
    %c0_i32 = arith.constant 0 : i32
    %c0_i32_0 = arith.constant 0 : i32
    %c0_i32_1 = arith.constant 0 : i32
    return %c0_i32, %c0_i32_0 : i32, i32
  }
  func.func @transform_4(%arg0: i32, %arg1: i32) -> (i32, i32) {
    %c0_i32 = arith.constant 0 : i32
    %c0_i32_0 = arith.constant 0 : i32
    %c0_i32_1 = arith.constant 0 : i32
    return %c0_i32, %c0_i32_0 : i32, i32
  }
  func.func @transform_5(%arg0: i32, %arg1: i32) -> (i32, i32) {
    %c0_i32 = arith.constant 0 : i32
    %c0_i32_0 = arith.constant 0 : i32
    %c0_i32_1 = arith.constant 0 : i32
    return %c0_i32, %c0_i32_0 : i32, i32
  }
  func.func @transform_6(%arg0: i32, %arg1: i32) -> (i32, i32) {
    %c0_i32 = arith.constant 0 : i32
    %c0_i32_0 = arith.constant 0 : i32
    %c0_i32_1 = arith.constant 0 : i32
    return %c0_i32, %c0_i32_0 : i32, i32
  }
  func.func @transform_7(%arg0: i32, %arg1: i32) -> (i32, i32) {
    %c0_i32 = arith.constant 0 : i32
    %c0_i32_0 = arith.constant 0 : i32
    %c0_i32_1 = arith.constant 0 : i32
    return %c0_i32, %c0_i32_0 : i32, i32
  }
  func.func @transform_8(%arg0: i32, %arg1: i32) -> (i32, i32) {
    %c0_i32 = arith.constant 0 : i32
    %c0_i32_0 = arith.constant 0 : i32
    %c0_i32_1 = arith.constant 0 : i32
    return %c0_i32, %c0_i32_0 : i32, i32
  }
  func.func @transform_9(%arg0: i32, %arg1: i32) -> (i32, i32) {
    %c0_i32 = arith.constant 0 : i32
    %c0_i32_0 = arith.constant 0 : i32
    %c0_i32_1 = arith.constant 0 : i32
    return %c0_i32, %c0_i32_0 : i32, i32
  }
  func.func @transform_10(%arg0: i32, %arg1: i32) -> (i32, i32) {
    %c0_i32 = arith.constant 0 : i32
    %c0_i32_0 = arith.constant 0 : i32
    %c0_i32_1 = arith.constant 0 : i32
    return %c0_i32, %c0_i32_0 : i32, i32
  }
  func.func @transform_11(%arg0: i32, %arg1: i32) -> (i32, i32) {
    %c0_i32 = arith.constant 0 : i32
    %c0_i32_0 = arith.constant 0 : i32
    %c0_i32_1 = arith.constant 0 : i32
    return %c0_i32, %c0_i32_0 : i32, i32
  }
  func.func @transform_12(%arg0: i32, %arg1: i32) -> (i32, i32) {
    %c0_i32 = arith.constant 0 : i32
    %c0_i32_0 = arith.constant 0 : i32
    %c0_i32_1 = arith.constant 0 : i32
    return %c0_i32, %c0_i32_0 : i32, i32
  }
  func.func @transform_13(%arg0: i32, %arg1: i32) -> (i32, i32) {
    %c0_i32 = arith.constant 0 : i32
    %c0_i32_0 = arith.constant 0 : i32
    %c0_i32_1 = arith.constant 0 : i32
    return %c0_i32, %c0_i32_0 : i32, i32
  }
  func.func @transform_14(%arg0: i32, %arg1: i32) -> (i32, i32) {
    %c0_i32 = arith.constant 0 : i32
    %c0_i32_0 = arith.constant 0 : i32
    %c0_i32_1 = arith.constant 0 : i32
    return %c0_i32, %c0_i32_0 : i32, i32
  }
  func.func @transform_15(%arg0: i32, %arg1: i32) -> (i32, i32) {
    %c0_i32 = arith.constant 0 : i32
    %c0_i32_0 = arith.constant 0 : i32
    %c0_i32_1 = arith.constant 0 : i32
    return %c0_i32, %c0_i32_0 : i32, i32
  }
  func.func @transform_16(%arg0: i32, %arg1: i32) -> (i32, i32) {
    %c0_i32 = arith.constant 0 : i32
    %c0_i32_0 = arith.constant 0 : i32
    %c0_i32_1 = arith.constant 0 : i32
    return %c0_i32, %c0_i32_0 : i32, i32
  }
  func.func @transform_17(%arg0: i32, %arg1: i32) -> (i32, i32, i32) {
    %c0_i32 = arith.constant 0 : i32
    %c0_i32_0 = arith.constant 0 : i32
    return %arg0, %arg1, %c0_i32 : i32, i32, i32
  }
}

</mosaic_0001>

<llo_original>
// kernel: tpu_custom_call.1
$region0: #{tpu_custom_call.1}
  #allocation0 [shape = 'u32[]', space=smem, size = 0x4, offset = 0x4, fixed_abs, tag = 'smem constant byte address 0x4 - core index']
  #allocation1 [shape = 'u32[144,128]{1,0:T(1,128)}', space=vmem, size = 0x12000, scoped, tag = 'internal scratch']
  #allocation2 [shape = 'bf16[4,8,8]{2,1,0:T(8,128)(2,1)}', space=vmem, size = 0x2000, scoped, tag = 'scratch operand']
  #allocation3 [shape = 'bf16[4,8,8]{2,1,0:T(8,128)(2,1)}', space=vmem, size = 0x2000, scoped, tag = 'scratch operand']
  %s0 = inlined_call_operand.vmem [shape: f32[2,8,32], index: 0, kind: input, shape index: {}]
  %s1 = inlined_call_operand.vmem [shape: f32[2,8,32], index: 1, kind: input, shape index: {}]
  %s2 = inlined_call_operand.vmem [shape: f32[2,1,8], index: 2, kind: input, shape index: {}]
  %s3 = inlined_call_operand.vmem [shape: bf16[32,32], index: 3, kind: input, shape index: {}]
  %s4 = inlined_call_operand.hbm [shape: f32[1,32], index: 4, kind: input, shape index: {}]
  %s5 = inlined_call_operand.hbm [shape: bf16[32,64], index: 5, kind: input, shape index: {}]
  %s6 = inlined_call_operand.hbm [shape: f32[1,64], index: 6, kind: input, shape index: {}]
  %s7 = inlined_call_operand.hbm [shape: bf16[32,32], index: 7, kind: input, shape index: {}]
  %s8 = inlined_call_operand.hbm [shape: f32[1,32], index: 8, kind: input, shape index: {}]
  %s9 = inlined_call_operand.vmem [shape: bf16[32,64], index: 9, kind: input, shape index: {}]
  %s10 = inlined_call_operand.vmem [shape: f32[1,64], index: 10, kind: input, shape index: {}]
  %s11 = inlined_call_operand.vmem [shape: bf16[64,32], index: 11, kind: input, shape index: {}]
  %s12 = inlined_call_operand.vmem [shape: f32[1,32], index: 12, kind: input, shape index: {}]
  %s13 = inlined_call_operand.vmem [shape: f32[1,32], index: 13, kind: input, shape index: {}]
  %s14 = inlined_call_operand.vmem [shape: f32[1,32], index: 14, kind: input, shape index: {}]
  %s15 = inlined_call_operand.vmem [shape: f32[1,32], index: 15, kind: input, shape index: {}]
  %s16 = inlined_call_operand.vmem [shape: f32[1,32], index: 16, kind: input, shape index: {}]
  %s17 = inlined_call_operand.hbm [shape: f32[2,8,32], index: 17, kind: output, shape index: {}]
  %s18 = sld [smem:[#allocation0]]
  $region125: #{tpu_custom_call.1} parent=0
    _
  %s20 = ssub.s32 1, %s18
  %s21 = scalar_select 0, %s20, %s18
  $region1: #{tpu_custom_call.1} parent=0
    #allocation4 [shape = 'u8[512]{0}', space=vmem, size = 0x400, scoped, tag = 'input window, operand 4, single buffered']
    #allocation5 [shape = 's32[2]{0}', space=sflag, size = 0x8, scoped, tag = 'scoped memory for tpu_custom_call.1']
    #allocation6 [shape = 's32[2]{0}', space=sflag, size = 0x8, scoped, tag = 'scoped memory for tpu_custom_call.1']
    #allocation7 [shape = 'u8[8192]{0}', space=vmem, size = 0x2000, scoped, tag = 'input window, operand 5, single buffered']
    #allocation8 [shape = 's32[1]{0}', space=sflag, size = 0x4, scoped, tag = 'scoped memory for tpu_custom_call.1']
    #allocation9 [shape = 'u8[512]{0}', space=vmem, size = 0x400, scoped, tag = 'input window, operand 6, single buffered']
    #allocation10 [shape = 'u8[8192]{0}', space=vmem, size = 0x2000, scoped, tag = 'input window, operand 7, single buffered']
    #allocation11 [shape = 's32[1]{0}', space=sflag, size = 0x4, scoped, tag = 'scoped memory for tpu_custom_call.1']
    #allocation12 [shape = 'u8[512]{0}', space=vmem, size = 0x400, scoped, tag = 'input window, operand 8, single buffered']
    #allocation13 [shape = 'u8[8192]{0}', space=vmem, size = 0x2000, scoped, tag = 'output window, operand 0']
    %22 = vsyncpa [#allocation5], 0
    %23 = vsyncpa [#allocation8], 0
    %24 = vsyncpa [#allocation11], 0
    %25 = vsyncpa [#allocation6], 0
    %s26 = scalar_lea.sflag [#allocation6], 1
    %27 = vsyncpa %s26, 0
    loop: start=0, step=1, limit=4
    $region2: #{tpu_custom_call.1} parent=1 // loop_pre_header
      _
    $region3: #{tpu_custom_call.1} parent=1 // loop_header
      %s29 = sphi 0, %s33
      %p30 = scmp.ge.s32.totalorder %s29, 4
      %s36 = sphi 0, %s48
      %s37 = sphi 0, %s44
      %s38 = sphi 0, %s36
      %s39 = sphi 0, %s37
      %s40 = sphi 0, %s38
      %s41 = sphi 0, %s39
      %s51 = sphi 0, %s53
      %s54 = sphi 0, %s51
      %s55 = sphi 0, %s54
      %s71 = sphi 0, %s55
      %s79 = sphi 0, %s81
      %s82 = sphi 0, %s79
      %s83 = sphi 0, %s82
      %s99 = sphi 0, %s83
      %s105 = sphi 0, %s107
      %s108 = sphi 0, %s105
      %s109 = sphi 0, %s108
      %s125 = sphi 0, %s109
      %s129 = sphi 0, %s129
      %s131 = sphi 0, %s129
      %s132 = sphi 0, %s131
      %s146 = sphi 0, %s132
      %s150 = sphi 0, %s150
      %s152 = sphi 0, %s150
      %s153 = sphi 0, %s152
      %s167 = sphi 0, %s153
      %s171 = sphi 0, %s171
      %s173 = sphi 0, %s171
      %s174 = sphi 0, %s173
      %s188 = sphi 0, %s174
      %s192 = sphi 0, %s192
      %s194 = sphi 0, %s192
      %s195 = sphi 0, %s194
      %s209 = sphi 0, %s195
      %s213 = sphi 0, %s213
      %s215 = sphi 0, %s213
      %s216 = sphi 0, %s215
      %s230 = sphi 0, %s216
      %s234 = sphi 0, %s234
      %s236 = sphi 0, %s234
      %s237 = sphi 0, %s236
      %s251 = sphi 0, %s237
      %s255 = sphi 0, %s255
      %s257 = sphi 0, %s255
      %s258 = sphi 0, %s257
      %s272 = sphi 0, %s258
      %s276 = sphi 0, %s276
      %s278 = sphi 0, %s276
      %s279 = sphi 0, %s278
      %s293 = sphi 0, %s279
      %s297 = sphi 0, %s297
      %s299 = sphi 0, %s297
      %s300 = sphi 0, %s299
      %s314 = sphi 0, %s300
      %s318 = sphi 0, %s318
      %s320 = sphi 0, %s318
      %s321 = sphi 0, %s320
      %s335 = sphi 0, %s321
      %s339 = sphi 0, %s339
      %s341 = sphi 0, %s339
      %s342 = sphi 0, %s341
      %s356 = sphi 0, %s342
      %s360 = sphi 0, %s360
      %s362 = sphi 0, %s360
      %s363 = sphi 0, %s362
      %s377 = sphi 0, %s363
      %s381 = sphi 0, %s381
      %s383 = sphi 0, %s381
      %s384 = sphi 0, %s383
      %s398 = sphi 0, %s384
      %s402 = sphi 0, %s402
      %s404 = sphi 0, %s402
      %s405 = sphi 0, %s404
      %s419 = sphi 0, %s405
      %s427 = sphi 0, %s429
      %s430 = sphi 0, %s427
      %s431 = sphi 0, %s430
      %s447 = sphi 0, %s431
    $region4: #{tpu_custom_call.1} parent=1 // loop_header_branch
      %32 = sbr.rel (%p30) target = $region8
    $region5: #{tpu_custom_call.1} parent=1 // loop_body
      %s34 = ssub.s32 %s29, 1
      %s35 = ssub.s32 %s29, 2
      %s42 = sadd.s32 1, %s37
      %p43 = scmp.ge.s32.totalorder %s42, 1
      %s44 = scalar_select %p43, 0, %s42
      %s45 = sadd.s32 1, %s36
      %s46 = scalar_select %p43, %s45, %s36
      %p47 = scmp.ge.s32.totalorder %s46, 2
      %s48 = scalar_select %p47, 0, %s46
      %s49 = ssub.s32 %s36, %s48
      %p50 = scmp.eq.s32.totalorder %s49, 0
      %s52 = sadd.s32 %s51, 1
      %s53 = scalar_select %p50, %s51, %s52
      %p56 = pneg %p50
      %p57 = scmp.eq.s32.totalorder %s29, 1
      %p58 = por %p56, %p57
      %p59 = scmp.ne.s32.totalorder %s51, %s54
      %p60 = scmp.eq.s32.totalorder %s29, 0
      %p61 = por %p59, %p60
      %p62 = scmp.ne.s32.totalorder %s51, %s54
      %p63 = scmp.eq.s32.totalorder %s34, 1
      %p64 = por %p62, %p63
      %p65 = scmp.ne.s32.totalorder %s54, %s55
      %p66 = scmp.eq.s32.totalorder %s34, 0
      %p67 = por %p65, %p66
      %p68 = scmp.ne.s32.totalorder %s54, %s55
      %p69 = scmp.eq.s32.totalorder %s35, 1
      %p70 = por %p68, %p69
      %p72 = scmp.ne.s32.totalorder %s55, %s71
      %p73 = scmp.eq.s32.totalorder %s35, 0
      %p74 = por %p72, %p73
      %s75 = ssub.s32 %s36, %s48
      %s76 = ssub.s32 %s37, %s44
      %s77 = sor.u32 %s75, %s76
      %p78 = scmp.eq.s32.totalorder %s77, 0
      %s80 = sadd.s32 %s79, 1
      %s81 = scalar_select %p78, %s79, %s80
      %p84 = pneg %p78
      %p85 = scmp.eq.s32.totalorder %s29, 1
      %p86 = por %p84, %p85
      %p87 = scmp.ne.s32.totalorder %s79, %s82
      %p88 = scmp.eq.s32.totalorder %s29, 0
      %p89 = por %p87, %p88
      %p90 = scmp.ne.s32.totalorder %s79, %s82
      %p91 = scmp.eq.s32.totalorder %s34, 1
      %p92 = por %p90, %p91
      %p93 = scmp.ne.s32.totalorder %s82, %s83
      %p94 = scmp.eq.s32.totalorder %s34, 0
      %p95 = por %p93, %p94
      %p96 = scmp.ne.s32.totalorder %s82, %s83
      %p97 = scmp.eq.s32.totalorder %s35, 1
      %p98 = por %p96, %p97
      %p100 = scmp.ne.s32.totalorder %s83, %s99
      %p101 = scmp.eq.s32.totalorder %s35, 0
      %p102 = por %p100, %p101
      %s103 = ssub.s32 %s36, %s48
      %p104 = scmp.eq.s32.totalorder %s103, 0
      %s106 = sadd.s32 %s105, 1
      %s107 = scalar_select %p104, %s105, %s106
      %p110 = pneg %p104
      %p111 = scmp.eq.s32.totalorder %s29, 1
      %p112 = por %p110, %p111
      %p113 = scmp.ne.s32.totalorder %s105, %s108
      %p114 = scmp.eq.s32.totalorder %s29, 0
      %p115 = por %p113, %p114
      %p116 = scmp.ne.s32.totalorder %s105, %s108
      %p117 = scmp.eq.s32.totalorder %s34, 1
      %p118 = por %p116, %p117
      %p119 = scmp.ne.s32.totalorder %s108, %s109
      %p120 = scmp.eq.s32.totalorder %s34, 0
      %p121 = por %p119, %p120
      %p122 = scmp.ne.s32.totalorder %s108, %s109
      %p123 = scmp.eq.s32.totalorder %s35, 1
      %p124 = por %p122, %p123
      %p126 = scmp.ne.s32.totalorder %s109, %s125
      %p127 = scmp.eq.s32.totalorder %s35, 0
      %p128 = por %p126, %p127
      %s130 = sadd.s32 %s129, 1
      %p133 = scmp.eq.s32.totalorder %s29, 1
      %p134 = scmp.ne.s32.totalorder %s129, %s131
      %p135 = scmp.eq.s32.totalorder %s29, 0
      %p136 = por %p134, %p135
      %p137 = scmp.ne.s32.totalorder %s129, %s131
      %p138 = scmp.eq.s32.totalorder %s34, 1
      %p139 = por %p137, %p138
      %p140 = scmp.ne.s32.totalorder %s131, %s132
      %p141 = scmp.eq.s32.totalorder %s34, 0
      %p142 = por %p140, %p141
      %p143 = scmp.ne.s32.totalorder %s131, %s132
      %p144 = scmp.eq.s32.totalorder %s35, 1
      %p145 = por %p143, %p144
      %p147 = scmp.ne.s32.totalorder %s132, %s146
      %p148 = scmp.eq.s32.totalorder %s35, 0
      %p149 = por %p147, %p148
      %s151 = sadd.s32 %s150, 1
      %p154 = scmp.eq.s32.totalorder %s29, 1
      %p155 = scmp.ne.s32.totalorder %s150, %s152
      %p156 = scmp.eq.s32.totalorder %s29, 0
      %p157 = por %p155, %p156
      %p158 = scmp.ne.s32.totalorder %s150, %s152
      %p159 = scmp.eq.s32.totalorder %s34, 1
      %p160 = por %p158, %p159
      %p161 = scmp.ne.s32.totalorder %s152, %s153
      %p162 = scmp.eq.s32.totalorder %s34, 0
      %p163 = por %p161, %p162
      %p164 = scmp.ne.s32.totalorder %s152, %s153
      %p165 = scmp.eq.s32.totalorder %s35, 1
      %p166 = por %p164, %p165
      %p168 = scmp.ne.s32.totalorder %s153, %s167
      %p169 = scmp.eq.s32.totalorder %s35, 0
      %p170 = por %p168, %p169
      %s172 = sadd.s32 %s171, 1
      %p175 = scmp.eq.s32.totalorder %s29, 1
      %p176 = scmp.ne.s32.totalorder %s171, %s173
      %p177 = scmp.eq.s32.totalorder %s29, 0
      %p178 = por %p176, %p177
      %p179 = scmp.ne.s32.totalorder %s171, %s173
      %p180 = scmp.eq.s32.totalorder %s34, 1
      %p181 = por %p179, %p180
      %p182 = scmp.ne.s32.totalorder %s173, %s174
      %p183 = scmp.eq.s32.totalorder %s34, 0
      %p184 = por %p182, %p183
      %p185 = scmp.ne.s32.totalorder %s173, %s174
      %p186 = scmp.eq.s32.totalorder %s35, 1
      %p187 = por %p185, %p186
      %p189 = scmp.ne.s32.totalorder %s174, %s188
      %p190 = scmp.eq.s32.totalorder %s35, 0
      %p191 = por %p189, %p190
      %s193 = sadd.s32 %s192, 1
      %p196 = scmp.eq.s32.totalorder %s29, 1
      %p197 = scmp.ne.s32.totalorder %s192, %s194
      %p198 = scmp.eq.s32.totalorder %s29, 0
      %p199 = por %p197, %p198
      %p200 = scmp.ne.s32.totalorder %s192, %s194
      %p201 = scmp.eq.s32.totalorder %s34, 1
      %p202 = por %p200, %p201
      %p203 = scmp.ne.s32.totalorder %s194, %s195
      %p204 = scmp.eq.s32.totalorder %s34, 0
      %p205 = por %p203, %p204
      %p206 = scmp.ne.s32.totalorder %s194, %s195
      %p207 = scmp.eq.s32.totalorder %s35, 1
      %p208 = por %p206, %p207
      %p210 = scmp.ne.s32.totalorder %s195, %s209
      %p211 = scmp.eq.s32.totalorder %s35, 0
      %p212 = por %p210, %p211
      %s214 = sadd.s32 %s213, 1
      %p217 = scmp.eq.s32.totalorder %s29, 1
      %p218 = scmp.ne.s32.totalorder %s213, %s215
      %p219 = scmp.eq.s32.totalorder %s29, 0
      %p220 = por %p218, %p219
      %p221 = scmp.ne.s32.totalorder %s213, %s215
      %p222 = scmp.eq.s32.totalorder %s34, 1
      %p223 = por %p221, %p222
      %p224 = scmp.ne.s32.totalorder %s215, %s216
      %p225 = scmp.eq.s32.totalorder %s34, 0
      %p226 = por %p224, %p225
      %p227 = scmp.ne.s32.totalorder %s215, %s216
      %p228 = scmp.eq.s32.totalorder %s35, 1
      %p229 = por %p227, %p228
      %p231 = scmp.ne.s32.totalorder %s216, %s230
      %p232 = scmp.eq.s32.totalorder %s35, 0
      %p233 = por %p231, %p232
      %s235 = sadd.s32 %s234, 1
      %p238 = scmp.eq.s32.totalorder %s29, 1
      %p239 = scmp.ne.s32.totalorder %s234, %s236
      %p240 = scmp.eq.s32.totalorder %s29, 0
      %p241 = por %p239, %p240
      %p242 = scmp.ne.s32.totalorder %s234, %s236
      %p243 = scmp.eq.s32.totalorder %s34, 1
      %p244 = por %p242, %p243
      %p245 = scmp.ne.s32.totalorder %s236, %s237
      %p246 = scmp.eq.s32.totalorder %s34, 0
      %p247 = por %p245, %p246
      %p248 = scmp.ne.s32.totalorder %s236, %s237
      %p249 = scmp.eq.s32.totalorder %s35, 1
      %p250 = por %p248, %p249
      %p252 = scmp.ne.s32.totalorder %s237, %s251
      %p253 = scmp.eq.s32.totalorder %s35, 0
      %p254 = por %p252, %p253
      %s256 = sadd.s32 %s255, 1
      %p259 = scmp.eq.s32.totalorder %s29, 1
      %p260 = scmp.ne.s32.totalorder %s255, %s257
      %p261 = scmp.eq.s32.totalorder %s29, 0
      %p262 = por %p260, %p261
      %p263 = scmp.ne.s32.totalorder %s255, %s257
      %p264 = scmp.eq.s32.totalorder %s34, 1
      %p265 = por %p263, %p264
      %p266 = scmp.ne.s32.totalorder %s257, %s258
      %p267 = scmp.eq.s32.totalorder %s34, 0
      %p268 = por %p266, %p267
      %p269 = scmp.ne.s32.totalorder %s257, %s258
      %p270 = scmp.eq.s32.totalorder %s35, 1
      %p271 = por %p269, %p270
      %p273 = scmp.ne.s32.totalorder %s258, %s272
      %p274 = scmp.eq.s32.totalorder %s35, 0
      %p275 = por %p273, %p274
      %s277 = sadd.s32 %s276, 1
      %p280 = scmp.eq.s32.totalorder %s29, 1
      %p281 = scmp.ne.s32.totalorder %s276, %s278
      %p282 = scmp.eq.s32.totalorder %s29, 0
      %p283 = por %p281, %p282
      %p284 = scmp.ne.s32.totalorder %s276, %s278
      %p285 = scmp.eq.s32.totalorder %s34, 1
      %p286 = por %p284, %p285
      %p287 = scmp.ne.s32.totalorder %s278, %s279
      %p288 = scmp.eq.s32.totalorder %s34, 0
      %p289 = por %p287, %p288
      %p290 = scmp.ne.s32.totalorder %s278, %s279
      %p291 = scmp.eq.s32.totalorder %s35, 1
      %p292 = por %p290, %p291
      %p294 = scmp.ne.s32.totalorder %s279, %s293
      %p295 = scmp.eq.s32.totalorder %s35, 0
      %p296 = por %p294, %p295
      %s298 = sadd.s32 %s297, 1
      %p301 = scmp.eq.s32.totalorder %s29, 1
      %p302 = scmp.ne.s32.totalorder %s297, %s299
      %p303 = scmp.eq.s32.totalorder %s29, 0
      %p304 = por %p302, %p303
      %p305 = scmp.ne.s32.totalorder %s297, %s299
      %p306 = scmp.eq.s32.totalorder %s34, 1
      %p307 = por %p305, %p306
      %p308 = scmp.ne.s32.totalorder %s299, %s300
      %p309 = scmp.eq.s32.totalorder %s34, 0
      %p310 = por %p308, %p309
      %p311 = scmp.ne.s32.totalorder %s299, %s300
      %p312 = scmp.eq.s32.totalorder %s35, 1
      %p313 = por %p311, %p312
      %p315 = scmp.ne.s32.totalorder %s300, %s314
      %p316 = scmp.eq.s32.totalorder %s35, 0
      %p317 = por %p315, %p316
      %s319 = sadd.s32 %s318, 1
      %p322 = scmp.eq.s32.totalorder %s29, 1
      %p323 = scmp.ne.s32.totalorder %s318, %s320
      %p324 = scmp.eq.s32.totalorder %s29, 0
      %p325 = por %p323, %p324
      %p326 = scmp.ne.s32.totalorder %s318, %s320
      %p327 = scmp.eq.s32.totalorder %s34, 1
      %p328 = por %p326, %p327
      %p329 = scmp.ne.s32.totalorder %s320, %s321
      %p330 = scmp.eq.s32.totalorder %s34, 0
      %p331 = por %p329, %p330
      %p332 = scmp.ne.s32.totalorder %s320, %s321
      %p333 = scmp.eq.s32.totalorder %s35, 1
      %p334 = por %p332, %p333
      %p336 = scmp.ne.s32.totalorder %s321, %s335
      %p337 = scmp.eq.s32.totalorder %s35, 0
      %p338 = por %p336, %p337
      %s340 = sadd.s32 %s339, 1
      %p343 = scmp.eq.s32.totalorder %s29, 1
      %p344 = scmp.ne.s32.totalorder %s339, %s341
      %p345 = scmp.eq.s32.totalorder %s29, 0
      %p346 = por %p344, %p345
      %p347 = scmp.ne.s32.totalorder %s339, %s341
      %p348 = scmp.eq.s32.totalorder %s34, 1
      %p349 = por %p347, %p348
      %p350 = scmp.ne.s32.totalorder %s341, %s342
      %p351 = scmp.eq.s32.totalorder %s34, 0
      %p352 = por %p350, %p351
      %p353 = scmp.ne.s32.totalorder %s341, %s342
      %p354 = scmp.eq.s32.totalorder %s35, 1
      %p355 = por %p353, %p354
      %p357 = scmp.ne.s32.totalorder %s342, %s356
      %p358 = scmp.eq.s32.totalorder %s35, 0
      %p359 = por %p357, %p358
      %s361 = sadd.s32 %s360, 1
      %p364 = scmp.eq.s32.totalorder %s29, 1
      %p365 = scmp.ne.s32.totalorder %s360, %s362
      %p366 = scmp.eq.s32.totalorder %s29, 0
      %p367 = por %p365, %p366
      %p368 = scmp.ne.s32.totalorder %s360, %s362
      %p369 = scmp.eq.s32.totalorder %s34, 1
      %p370 = por %p368, %p369
      %p371 = scmp.ne.s32.totalorder %s362, %s363
      %p372 = scmp.eq.s32.totalorder %s34, 0
      %p373 = por %p371, %p372
      %p374 = scmp.ne.s32.totalorder %s362, %s363
      %p375 = scmp.eq.s32.totalorder %s35, 1
      %p376 = por %p374, %p375
      %p378 = scmp.ne.s32.totalorder %s363, %s377
      %p379 = scmp.eq.s32.totalorder %s35, 0
      %p380 = por %p378, %p379
      %s382 = sadd.s32 %s381, 1
      %p385 = scmp.eq.s32.totalorder %s29, 1
      %p386 = scmp.ne.s32.totalorder %s381, %s383
      %p387 = scmp.eq.s32.totalorder %s29, 0
      %p388 = por %p386, %p387
      %p389 = scmp.ne.s32.totalorder %s381, %s383
      %p390 = scmp.eq.s32.totalorder %s34, 1
      %p391 = por %p389, %p390
      %p392 = scmp.ne.s32.totalorder %s383, %s384
      %p393 = scmp.eq.s32.totalorder %s34, 0
      %p394 = por %p392, %p393
      %p395 = scmp.ne.s32.totalorder %s383, %s384
      %p396 = scmp.eq.s32.totalorder %s35, 1
      %p397 = por %p395, %p396
      %p399 = scmp.ne.s32.totalorder %s384, %s398
      %p400 = scmp.eq.s32.totalorder %s35, 0
      %p401 = por %p399, %p400
      %s403 = sadd.s32 %s402, 1
      %p406 = scmp.eq.s32.totalorder %s29, 1
      %p407 = scmp.ne.s32.totalorder %s402, %s404
      %p408 = scmp.eq.s32.totalorder %s29, 0
      %p409 = por %p407, %p408
      %p410 = scmp.ne.s32.totalorder %s402, %s404
      %p411 = scmp.eq.s32.totalorder %s34, 1
      %p412 = por %p410, %p411
      %p413 = scmp.ne.s32.totalorder %s404, %s405
      %p414 = scmp.eq.s32.totalorder %s34, 0
      %p415 = por %p413, %p414
      %p416 = scmp.ne.s32.totalorder %s404, %s405
      %p417 = scmp.eq.s32.totalorder %s35, 1
      %p418 = por %p416, %p417
      %p420 = scmp.ne.s32.totalorder %s405, %s419
      %p421 = scmp.eq.s32.totalorder %s35, 0
      %p422 = por %p420, %p421
      %s423 = ssub.s32 %s36, %s48
      %s424 = ssub.s32 %s37, %s44
      %s425 = sor.u32 %s423, %s424
      %p426 = scmp.eq.s32.totalorder %s425, 0
      %s428 = sadd.s32 %s427, 1
      %s429 = scalar_select %p426, %s427, %s428
      %p432 = pneg %p426
      %p433 = scmp.eq.s32.totalorder %s29, 1
      %p434 = por %p432, %p433
      %p435 = scmp.ne.s32.totalorder %s427, %s430
      %p436 = scmp.eq.s32.totalorder %s29, 0
      %p437 = por %p435, %p436
      %p438 = scmp.ne.s32.totalorder %s427, %s430
      %p439 = scmp.eq.s32.totalorder %s34, 1
      %p440 = por %p438, %p439
      %p441 = scmp.ne.s32.totalorder %s430, %s431
      %p442 = scmp.eq.s32.totalorder %s34, 0
      %p443 = por %p441, %p442
      %p444 = scmp.ne.s32.totalorder %s430, %s431
      %p445 = scmp.eq.s32.totalorder %s35, 1
      %p446 = por %p444, %p445
      %p448 = scmp.ne.s32.totalorder %s431, %s447
      %p449 = scmp.eq.s32.totalorder %s35, 0
      %p450 = por %p448, %p449
      %p451 = scmp.le.s32.totalorder 1, %s29
      %p452 = scmp.lt.s32.totalorder %s29, 3
      %p453 = pnand %p451, %p452
      %p454 = pneg %p453
      // Predicated region
      $region9: #{tpu_custom_call.1} parent=5 // pred_check
        _
      $region10: #{tpu_custom_call.1} parent=5 // pred_check_branch
        %456 = sbr.rel (%p453) target = $region12
      $region11: #{tpu_custom_call.1} parent=5 // pred_region
        %s457 = ssub.s32 %s29, 1
        // Predicated region
        $region13: #{tpu_custom_call.1} parent=11 // pred_check
          %p458 = pneg %p142
        $region14: #{tpu_custom_call.1} parent=11 // pred_check_branch
          %460 = sbr.rel (%p458) target = $region16
        $region15: #{tpu_custom_call.1} parent=11 // pred_region
          _
        $region16: #{tpu_custom_call.1} parent=11 // pred_fallthru
          _
        // Predicated region
        $region17: #{tpu_custom_call.1} parent=11 // pred_check
          %p461 = pneg %p163
        $region18: #{tpu_custom_call.1} parent=11 // pred_check_branch
          %463 = sbr.rel (%p461) target = $region20
        $region19: #{tpu_custom_call.1} parent=11 // pred_region
          %s465 = ssub.s32 16, 16
          %466 = vsyncadd [#allocation5], %s465
          %s468 = sshll.u32 [#allocation4], 4
          %s469 = int_to_ptr.vmem [resolvable:$true] %s468
          %471 = dma.hbm_to_vmem [thread:$0]  %s4, 16, %s469, [#allocation5]
        $region20: #{tpu_custom_call.1} parent=11 // pred_fallthru
          _
        // Predicated region
        $region21: #{tpu_custom_call.1} parent=11 // pred_check
          %p472 = pneg %p184
        $region22: #{tpu_custom_call.1} parent=11 // pred_check_branch
          %474 = sbr.rel (%p472) target = $region24
        $region23: #{tpu_custom_call.1} parent=11 // pred_region
          %s476 = ssub.s32 256, 256
          %477 = vsyncadd [#allocation8], %s476
          %s478 = sshll.u32 [#allocation7], 4
          %s479 = int_to_ptr.vmem [resolvable:$true] %s478
          %484 = dma.hbm_to_vmem [thread:$0]  %s5, 256, %s479, [#allocation8], 64, 64, 4
        $region24: #{tpu_custom_call.1} parent=11 // pred_fallthru
          _
        // Predicated region
        $region25: #{tpu_custom_call.1} parent=11 // pred_check
          %p485 = pneg %p205
        $region26: #{tpu_custom_call.1} parent=11 // pred_check_branch
          %487 = sbr.rel (%p485) target = $region28
        $region27: #{tpu_custom_call.1} parent=11 // pred_region
          %s489 = ssub.s32 16, 16
          %490 = vsyncadd [#allocation8], %s489
          %s492 = sshll.u32 [#allocation9], 4
          %s493 = int_to_ptr.vmem [resolvable:$true] %s492
          %495 = dma.hbm_to_vmem [thread:$0]  %s6, 16, %s493, [#allocation8]
        $region28: #{tpu_custom_call.1} parent=11 // pred_fallthru
          _
        // Predicated region
        $region29: #{tpu_custom_call.1} parent=11 // pred_check
          %p496 = pneg %p226
        $region30: #{tpu_custom_call.1} parent=11 // pred_check_branch
          %498 = sbr.rel (%p496) target = $region32
        $region31: #{tpu_custom_call.1} parent=11 // pred_region
          %s500 = ssub.s32 256, 256
          %501 = vsyncadd [#allocation11], %s500
          %s502 = sshll.u32 [#allocation10], 4
          %s503 = int_to_ptr.vmem [resolvable:$true] %s502
          %508 = dma.hbm_to_vmem [thread:$0]  %s7, 256, %s503, [#allocation11], 64, 64, 4
        $region32: #{tpu_custom_call.1} parent=11 // pred_fallthru
          _
        // Predicated region
        $region33: #{tpu_custom_call.1} parent=11 // pred_check
          %p509 = pneg %p247
        $region34: #{tpu_custom_call.1} parent=11 // pred_check_branch
          %511 = sbr.rel (%p509) target = $region36
        $region35: #{tpu_custom_call.1} parent=11 // pred_region
          %s513 = ssub.s32 16, 16
          %514 = vsyncadd [#allocation11], %s513
          %s516 = sshll.u32 [#allocation12], 4
          %s517 = int_to_ptr.vmem [resolvable:$true] %s516
          %519 = dma.hbm_to_vmem [thread:$0]  %s8, 16, %s517, [#allocation11]
        $region36: #{tpu_custom_call.1} parent=11 // pred_fallthru
          _
        // Predicated region
        $region37: #{tpu_custom_call.1} parent=11 // pred_check
          %p520 = pneg %p268
        $region38: #{tpu_custom_call.1} parent=11 // pred_check_branch
          %522 = sbr.rel (%p520) target = $region40
        $region39: #{tpu_custom_call.1} parent=11 // pred_region
          _
        $region40: #{tpu_custom_call.1} parent=11 // pred_fallthru
          _
        // Predicated region
        $region41: #{tpu_custom_call.1} parent=11 // pred_check
          %p523 = pneg %p289
        $region42: #{tpu_custom_call.1} parent=11 // pred_check_branch
          %525 = sbr.rel (%p523) target = $region44
        $region43: #{tpu_custom_call.1} parent=11 // pred_region
          _
        $region44: #{tpu_custom_call.1} parent=11 // pred_fallthru
          _
        // Predicated region
        $region45: #{tpu_custom_call.1} parent=11 // pred_check
          %p526 = pneg %p310
        $region46: #{tpu_custom_call.1} parent=11 // pred_check_branch
          %528 = sbr.rel (%p526) target = $region48
        $region47: #{tpu_custom_call.1} parent=11 // pred_region
          _
        $region48: #{tpu_custom_call.1} parent=11 // pred_fallthru
          _
        // Predicated region
        $region49: #{tpu_custom_call.1} parent=11 // pred_check
          %p529 = pneg %p331
        $region50: #{tpu_custom_call.1} parent=11 // pred_check_branch
          %531 = sbr.rel (%p529) target = $region52
        $region51: #{tpu_custom_call.1} parent=11 // pred_region
          _
        $region52: #{tpu_custom_call.1} parent=11 // pred_fallthru
          _
        // Predicated region
        $region53: #{tpu_custom_call.1} parent=11 // pred_check
          %p532 = pneg %p352
        $region54: #{tpu_custom_call.1} parent=11 // pred_check_branch
          %534 = sbr.rel (%p532) target = $region56
        $region55: #{tpu_custom_call.1} parent=11 // pred_region
          _
        $region56: #{tpu_custom_call.1} parent=11 // pred_fallthru
          _
        // Predicated region
        $region57: #{tpu_custom_call.1} parent=11 // pred_check
          %p535 = pneg %p373
        $region58: #{tpu_custom_call.1} parent=11 // pred_check_branch
          %537 = sbr.rel (%p535) target = $region60
        $region59: #{tpu_custom_call.1} parent=11 // pred_region
          _
        $region60: #{tpu_custom_call.1} parent=11 // pred_fallthru
          _
        // Predicated region
        $region61: #{tpu_custom_call.1} parent=11 // pred_check
          %p538 = pneg %p394
        $region62: #{tpu_custom_call.1} parent=11 // pred_check_branch
          %540 = sbr.rel (%p538) target = $region64
        $region63: #{tpu_custom_call.1} parent=11 // pred_region
          _
        $region64: #{tpu_custom_call.1} parent=11 // pred_fallthru
          _
        // Predicated region
        $region65: #{tpu_custom_call.1} parent=11 // pred_check
          %p541 = pneg %p415
        $region66: #{tpu_custom_call.1} parent=11 // pred_check_branch
          %543 = sbr.rel (%p541) target = $region68
        $region67: #{tpu_custom_call.1} parent=11 // pred_region
          _
        $region68: #{tpu_custom_call.1} parent=11 // pred_fallthru
          _
      $region12: #{tpu_custom_call.1} parent=5 // pred_fallthru
        _
      %p544 = scmp.lt.s32.totalorder %s29, 2
      // Predicated region
      $region69: #{tpu_custom_call.1} parent=5 // pred_check
        %p545 = pneg %p544
      $region70: #{tpu_custom_call.1} parent=5 // pred_check_branch
        %547 = sbr.rel (%p545) target = $region72
      $region71: #{tpu_custom_call.1} parent=5 // pred_region
        // Predicated region
        $region73: #{tpu_custom_call.1} parent=71 // pred_check
          %p548 = pneg %p61
        $region74: #{tpu_custom_call.1} parent=71 // pred_check_branch
          %550 = sbr.rel (%p548) target = $region76
        $region75: #{tpu_custom_call.1} parent=71 // pred_region
          %p551 = scmp.lt.s32.totalorder %s36, 1
          %s552 = scalar_select %p551, %s36, 1
          %s553 = smul.addr %s552, 8
          %s554 = scalar_lea.vmem %s0, %s553
        $region76: #{tpu_custom_call.1} parent=71 // pred_fallthru
          _
        // Predicated region
        $region77: #{tpu_custom_call.1} parent=71 // pred_check
          %p555 = pneg %p89
        $region78: #{tpu_custom_call.1} parent=71 // pred_check_branch
          %557 = sbr.rel (%p555) target = $region80
        $region79: #{tpu_custom_call.1} parent=71 // pred_region
          %p558 = scmp.lt.s32.totalorder %s36, 1
          %s559 = scalar_select %p558, %s36, 1
          %p560 = scmp.lt.s32.totalorder %s37, 0
          %s561 = scalar_select %p560, %s37, 0
          %s562 = sadd.s32 %s561, %s559
          %s563 = smul.addr %s562, 8
          %s564 = scalar_lea.vmem %s1, %s563
        $region80: #{tpu_custom_call.1} parent=71 // pred_fallthru
          _
        // Predicated region
        $region81: #{tpu_custom_call.1} parent=71 // pred_check
          %p565 = pneg %p115
        $region82: #{tpu_custom_call.1} parent=71 // pred_check_branch
          %567 = sbr.rel (%p565) target = $region84
        $region83: #{tpu_custom_call.1} parent=71 // pred_region
          %p568 = scmp.lt.s32.totalorder %s36, 1
          %s569 = scalar_select %p568, %s36, 1
          %s570 = scalar_lea.vmem %s2, %s569
        $region84: #{tpu_custom_call.1} parent=71 // pred_fallthru
          _
      $region72: #{tpu_custom_call.1} parent=5 // pred_fallthru
        _
      %p571 = scmp.le.s32.totalorder 1, %s29
      %p572 = scmp.lt.s32.totalorder %s29, 3
      %p573 = pnand %p571, %p572
      %p574 = pneg %p573
      // Predicated region
      $region85: #{tpu_custom_call.1} parent=5 // pred_check
        _
      $region86: #{tpu_custom_call.1} parent=5 // pred_check_branch
        %576 = sbr.rel (%p573) target = $region88
      $region87: #{tpu_custom_call.1} parent=5 // pred_region
        %s577 = ssub.s32 %s29, 1
        // Predicated region
        $region89: #{tpu_custom_call.1} parent=87 // pred_check
          %p578 = pneg %p163
        $region90: #{tpu_custom_call.1} parent=87 // pred_check_branch
          %580 = sbr.rel (%p578) target = $region92
        $region91: #{tpu_custom_call.1} parent=87 // pred_region
          %581 = dma.done [#allocation5], 16
        $region92: #{tpu_custom_call.1} parent=87 // pred_fallthru
          _
        // Predicated region
        $region93: #{tpu_custom_call.1} parent=87 // pred_check
          %p582 = pneg %p184
        $region94: #{tpu_custom_call.1} parent=87 // pred_check_branch
          %584 = sbr.rel (%p582) target = $region96
        $region95: #{tpu_custom_call.1} parent=87 // pred_region
          %585 = dma.done [#allocation8], 256
        $region96: #{tpu_custom_call.1} parent=87 // pred_fallthru
          _
        // Predicated region
        $region97: #{tpu_custom_call.1} parent=87 // pred_check
          %p586 = pneg %p205
        $region98: #{tpu_custom_call.1} parent=87 // pred_check_branch
          %588 = sbr.rel (%p586) target = $region100
        $region99: #{tpu_custom_call.1} parent=87 // pred_region
          %589 = dma.done [#allocation8], 16
        $region100: #{tpu_custom_call.1} parent=87 // pred_fallthru
          _
        // Predicated region
        $region101: #{tpu_custom_call.1} parent=87 // pred_check
          %p590 = pneg %p226
        $region102: #{tpu_custom_call.1} parent=87 // pred_check_branch
          %592 = sbr.rel (%p590) target = $region104
        $region103: #{tpu_custom_call.1} parent=87 // pred_region
          %593 = dma.done [#allocation11], 256
        $region104: #{tpu_custom_call.1} parent=87 // pred_fallthru
          _
        // Predicated region
        $region105: #{tpu_custom_call.1} parent=87 // pred_check
          %p594 = pneg %p247
        $region106: #{tpu_custom_call.1} parent=87 // pred_check_branch
          %596 = sbr.rel (%p594) target = $region108
        $region107: #{tpu_custom_call.1} parent=87 // pred_region
          %597 = dma.done [#allocation11], 16
        $region108: #{tpu_custom_call.1} parent=87 // pred_fallthru
          _
        %p598 = scmp.lt.s32.totalorder %s38, 1
        %s599 = scalar_select %p598, %s38, 1
        %s600 = smul.addr %s599, 8
        %s601 = scalar_lea.vmem %s0, %s600
        %p602 = pneg %p67
        %p603 = pneg %p64
        %p604 = scmp.lt.s32.totalorder %s38, 1
        %s605 = scalar_select %p604, %s38, 1
        %p606 = scmp.lt.s32.totalorder %s39, 0
        %s607 = scalar_select %p606, %s39, 0
        %s608 = sadd.s32 %s607, %s605
        %s609 = smul.addr %s608, 8
        %s610 = scalar_lea.vmem %s1, %s609
        %p611 = pneg %p95
        %p612 = pneg %p92
        %p613 = scmp.lt.s32.totalorder %s38, 1
        %s614 = scalar_select %p613, %s38, 1
        %s615 = scalar_lea.vmem %s2, %s614
        %p616 = pneg %p121
        %p617 = pneg %p118
        %p618 = pneg %p142
        %p619 = pneg %p139
        %p620 = pneg %p163
        %p621 = pneg %p160
        %p622 = pneg %p184
        %p623 = pneg %p181
        %p624 = pneg %p205
        %p625 = pneg %p202
        %p626 = pneg %p226
        %p627 = pneg %p223
        %p628 = pneg %p247
        %p629 = pneg %p244
        %p630 = pneg %p268
        %p631 = pneg %p265
        %p632 = pneg %p289
        %p633 = pneg %p286
        %p634 = pneg %p310
        %p635 = pneg %p307
        %p636 = pneg %p331
        %p637 = pneg %p328
        %p638 = pneg %p352
        %p639 = pneg %p349
        %p640 = pneg %p373
        %p641 = pneg %p370
        %p642 = pneg %p394
        %p643 = pneg %p391
        %p644 = pneg %p415
        %p645 = pneg %p412
        %p646 = pneg %p443
        %p647 = pneg %p440
        %s648 = sand.u32 %s430, 1
        %s649 = scalar_lea.sflag [#allocation6], %s648
        %s650 = sand.u32 %s430, 1
        %s651 = smul.addr %s650, 8
        %s652 = scalar_lea.vmem [#allocation13], %s651
        %p653 = scmp.lt.s32.totalorder %s38, 1
        %s654 = scalar_select %p653, %s38, 1
        %s655 = smul.addr %s654, 8
        %s656 = scalar_lea.vmem %s0, %s655
        %p657 = scmp.lt.s32.totalorder %s38, 1
        %s658 = scalar_select %p657, %s38, 1
        %p659 = scmp.lt.s32.totalorder %s39, 0
        %s660 = scalar_select %p659, %s39, 0
        %s661 = sadd.s32 %s660, %s658
        %s662 = smul.addr %s661, 8
        %s663 = scalar_lea.vmem %s1, %s662
        %p664 = scmp.lt.s32.totalorder %s38, 1
        %s665 = scalar_select %p664, %s38, 1
        %s666 = scalar_lea.vmem %s2, %s665
        %p668 = scmp.eq.s32.totalorder %s39, 0
        // Predicated region
        $region109: #{tpu_custom_call.1} parent=87 // pred_check
          %p669 = pneg %p668
        $region110: #{tpu_custom_call.1} parent=87 // pred_check_branch
          %671 = sbr.rel (%p669) target = $region112
        $region111: #{tpu_custom_call.1} parent=87 // pred_region
          %v672 = vld [vmem:[%s656] sm:$0xff]
          %v673 = vpack.c.bf16 %v672, %v672
          %v674 = vld [vmem:[#allocation7] sm:$0xf]
          %v675 = vld [vmem:[#allocation7 + $0x4] sm:$0xf]
          %v676 = vld [vmem:[#allocation7 + $0x8] sm:$0xf]
          %v677 = vld [vmem:[#allocation7 + $0xc] sm:$0xf]
          %v678 = vld [vmem:[#allocation9] sm:$0x1]
          %v680 = vlaneseq
          %v681 = vshrl.u32 %v680, 7
          %v682 = vsub.s32 0, %v681
          %v683 = vrot.slane %v678, %v682
          %v689 = vunpack.c.l.b16 %v674
          %v690 = vunpack.c.l.b16 %v675
          %v691 = vunpack.c.l.b16 %v676
          %v692 = vunpack.c.l.b16 %v677
          %v693 = vpack.c.b16 %v690, %v689
          %v694 = vpack.c.b16 %v692, %v691
          %vm697 = vcmask 261120
          %v699 = vsel %vm697, %v673, 0
          %701 = vmatprep.subr.bf16.mxu0 0
          %702 = vmatpush1.bf16.msra.mxu0 %v693
          %703 = vmatprep.subr.bf16.mxu0 0
          %704 = vmatpush1.bf16.msra.mxu0 %v694
          %705 = vmatprep.subr.bf16.mxu0 0
          %706 = vmatpush1.bf16.msra.mxu0 0
          %707 = vmatprep.subr.bf16.mxu0 0
          %708 = vmatpush1.bf16.msra.mxu0 0
          %709 = vmatprep.subr.bf16.mxu0 0
          %710 = vmatpush1.bf16.msra.mxu0 0
          %711 = vmatprep.subr.bf16.mxu0 0
          %712 = vmatpush1.bf16.msra.mxu0 0
          %713 = vmatprep.subr.bf16.mxu0 0
          %714 = vmatpush1.bf16.msra.mxu0 0
          %715 = vmatprep.subr.bf16.mxu0 0
          %716 = vmatpush1.bf16.msra.mxu0 0
          %717 = vmatprep.subr.bf16.mxu0 0
          %718 = vmatpush1.bf16.msra.mxu0 0
          %719 = vmatprep.subr.bf16.mxu0 0
          %720 = vmatpush1.bf16.msra.mxu0 0
          %721 = vmatprep.subr.bf16.mxu0 0
          %722 = vmatpush1.bf16.msra.mxu0 0
          %723 = vmatprep.subr.bf16.mxu0 0
          %724 = vmatpush1.bf16.msra.mxu0 0
          %725 = vmatprep.subr.bf16.mxu0 0
          %726 = vmatpush1.bf16.msra.mxu0 0
          %727 = vmatprep.subr.bf16.mxu0 0
          %728 = vmatpush1.bf16.msra.mxu0 0
          %729 = vmatprep.subr.bf16.mxu0 0
          %730 = vmatpush1.bf16.msra.mxu0 0
          %731 = vmatprep.subr.bf16.mxu0 0
          %732 = vmatpush1.bf16.msra.mxu0 0
          %733 = vmatprep.mubr.bf16.mxu0 0
          %734 = vmatmul.mubr.bf16.gmra.mrb[0].mxu0 %v699
          %v735 = vpop.f32.mrb[0].mxu0
          %v736 = vadd.f32 %v683, %v735
          %v737 = vpop.f32.mrb[0].mxu0
          %v738 = vpop.f32.mrb[0].mxu0
          %v739 = vpop.f32.mrb[0].mxu0
          %740 = vdwg.mxu0
          %v741 = vpack.c.bf16 %v736, %v736
          %743 = vrot.lane.b32.xlu0 %v741, 120
          %v744 = vpop.permute.xlu0 %743
          %745 = vrot.lane.b32.xlu0 %v741, 112
          %v746 = vpop.permute.xlu0 %745
          %747 = vrot.lane.b32.xlu0 %v741, 104
          %v748 = vpop.permute.xlu0 %747
          %v750 = vunpack.c.l.s4 1983009808
          %v751 = vunpack.c.0.s8 %v750
          %v752 = vlaneseq
          %v753 = vshrl.u32 %v752, 7
          %v754 = vsub.s32 %v751, %v753
          %v755 = vrot.slane %v741, %v754
          %v758 = vunpack.c.l.s4 1983009808
          %v759 = vunpack.c.0.s8 %v758
          %v760 = vlaneseq
          %v761 = vshrl.u32 %v760, 7
          %v762 = vsub.s32 %v759, %v761
          %v763 = vrot.slane %v746, %v762
          %v764 = vcombine.low %v755, %v763
          %v765 = vcombine.high %v755, %v763
          %v767 = vunpack.c.l.s4 1934713408
          %v768 = vunpack.c.0.s8 %v767
          %v769 = vlaneseq
          %v770 = vshrl.u32 %v769, 7
          %v771 = vsub.s32 %v768, %v770
          %v772 = vrot.slane %v764, %v771
          %v774 = vunpack.c.l.s4 1934713408
          %v775 = vunpack.c.0.s8 %v774
          %v776 = vlaneseq
          %v777 = vshrl.u32 %v776, 7
          %v778 = vsub.s32 %v775, %v777
          %v779 = vrot.slane %v765, %v778
          %v780 = vcombine.high %v772, 0
          %v781 = vcombine.high %v779, 0
          %v784 = vunpack.c.l.s4 1983009808
          %v785 = vunpack.c.0.s8 %v784
          %v786 = vlaneseq
          %v787 = vshrl.u32 %v786, 7
          %v788 = vsub.s32 %v785, %v787
          %v789 = vrot.slane %v744, %v788
          %v792 = vunpack.c.l.s4 1983009808
          %v793 = vunpack.c.0.s8 %v792
          %v794 = vlaneseq
          %v795 = vshrl.u32 %v794, 7
          %v796 = vsub.s32 %v793, %v795
          %v797 = vrot.slane %v748, %v796
          %v798 = vcombine.low %v789, %v797
          %v799 = vcombine.high %v789, %v797
          %v801 = vunpack.c.l.s4 1934713408
          %v802 = vunpack.c.0.s8 %v801
          %v803 = vlaneseq
          %v804 = vshrl.u32 %v803, 7
          %v805 = vsub.s32 %v802, %v804
          %v806 = vrot.slane %v798, %v805
          %v808 = vunpack.c.l.s4 1934713408
          %v809 = vunpack.c.0.s8 %v808
          %v810 = vlaneseq
          %v811 = vshrl.u32 %v810, 7
          %v812 = vsub.s32 %v809, %v811
          %v813 = vrot.slane %v799, %v812
          %v814 = vcombine.high %v806, 0
          %v815 = vcombine.high %v813, 0
          %v818 = vpack.i.b16 %v806, %v772
          %v820 = vshrl.u32 %v772, 16
          %v821 = vshrl.u32 %v806, 16
          %v822 = vpack.i.b16 %v821, %v820
          %v826 = vpack.i.b16 %v814, %v780
          %v828 = vshrl.u32 %v780, 16
          %v829 = vshrl.u32 %v814, 16
          %v830 = vpack.i.b16 %v829, %v828
          %v834 = vpack.i.b16 %v813, %v779
          %v836 = vshrl.u32 %v779, 16
          %v837 = vshrl.u32 %v813, 16
          %v838 = vpack.i.b16 %v837, %v836
          %v842 = vpack.i.b16 %v815, %v781
          %v844 = vshrl.u32 %v781, 16
          %v845 = vshrl.u32 %v815, 16
          %v846 = vpack.i.b16 %v845, %v844
          %v848 = vcombine.low %v818, %v834
          %v850 = vunpack.c.l.s4 1983009808
          %v851 = vunpack.c.0.s8 %v850
          %v852 = vlaneseq
          %v853 = vshrl.u32 %v852, 7
          %v854 = vsub.s32 %v851, %v853
          %v855 = vrot.slane %v848, %v854
          %v856 = vcombine.low %v826, %v842
          %v858 = vunpack.c.l.s4 1983009808
          %v859 = vunpack.c.0.s8 %v858
          %v860 = vlaneseq
          %v861 = vshrl.u32 %v860, 7
          %v862 = vsub.s32 %v859, %v861
          %v863 = vrot.slane %v856, %v862
          %v864 = vcombine.low %v855, %v863
          %v866 = vunpack.c.l.s4 1934713408
          %v867 = vunpack.c.0.s8 %v866
          %v868 = vlaneseq
          %v869 = vshrl.u32 %v868, 7
          %v870 = vsub.s32 %v867, %v869
          %v871 = vrot.slane %v864, %v870
          %v872 = vcombine.high %v871, 0
          %v873 = vcombine.low %v822, %v838
          %v875 = vunpack.c.l.s4 1983009808
          %v876 = vunpack.c.0.s8 %v875
          %v877 = vlaneseq
          %v878 = vshrl.u32 %v877, 7
          %v879 = vsub.s32 %v876, %v878
          %v880 = vrot.slane %v873, %v879
          %v881 = vcombine.low %v830, %v846
          %v883 = vunpack.c.l.s4 1983009808
          %v884 = vunpack.c.0.s8 %v883
          %v885 = vlaneseq
          %v886 = vshrl.u32 %v885, 7
          %v887 = vsub.s32 %v884, %v886
          %v888 = vrot.slane %v881, %v887
          %v889 = vcombine.low %v880, %v888
          %v891 = vunpack.c.l.s4 1934713408
          %v892 = vunpack.c.0.s8 %v891
          %v893 = vlaneseq
          %v894 = vshrl.u32 %v893, 7
          %v895 = vsub.s32 %v892, %v894
          %v896 = vrot.slane %v889, %v895
          %v897 = vcombine.high %v896, 0
          %v900 = vpack.i.b16 %v896, %v871
          %v902 = vshrl.u32 %v871, 16
          %v903 = vshrl.u32 %v896, 16
          %v904 = vpack.i.b16 %v903, %v902
          %v908 = vpack.i.b16 %v897, %v872
          %v910 = vshrl.u32 %v872, 16
          %v911 = vshrl.u32 %v897, 16
          %v912 = vpack.i.b16 %v911, %v910
          %vm914 = vcmask 60416
          %915 = vst.msk [vmem:[#allocation2] sm:$0xf] %vm914, %v900
          %916 = vst.msk [vmem:[#allocation2 + $0x4] sm:$0xf] %vm914, %v904
          %917 = vst.msk [vmem:[#allocation2 + $0x8] sm:$0xf] %vm914, %v908
          %918 = vst.msk [vmem:[#allocation2 + $0xc] sm:$0xf] %vm914, %v912
          %919 = vrot.lane.b32.xlu0 %v741, 96
          %v920 = vpop.permute.xlu0 %919
          %921 = vrot.lane.b32.xlu0 %v744, 96
          %v922 = vpop.permute.xlu0 %921
          %923 = vrot.lane.b32.xlu0 %v746, 96
          %v924 = vpop.permute.xlu0 %923
          %925 = vrot.lane.b32.xlu0 %v748, 96
          %v926 = vpop.permute.xlu0 %925
          %v929 = vunpack.c.l.s4 1983009808
          %v930 = vunpack.c.0.s8 %v929
          %v931 = vlaneseq
          %v932 = vshrl.u32 %v931, 7
          %v933 = vsub.s32 %v930, %v932
          %v934 = vrot.slane %v920, %v933
          %v937 = vunpack.c.l.s4 1983009808
          %v938 = vunpack.c.0.s8 %v937
          %v939 = vlaneseq
          %v940 = vshrl.u32 %v939, 7
          %v941 = vsub.s32 %v938, %v940
          %v942 = vrot.slane %v924, %v941
          %v943 = vcombine.low %v934, %v942
          %v944 = vcombine.high %v934, %v942
          %v946 = vunpack.c.l.s4 1934713408
          %v947 = vunpack.c.0.s8 %v946
          %v948 = vlaneseq
          %v949 = vshrl.u32 %v948, 7
          %v950 = vsub.s32 %v947, %v949
          %v951 = vrot.slane %v943, %v950
          %v953 = vunpack.c.l.s4 1934713408
          %v954 = vunpack.c.0.s8 %v953
          %v955 = vlaneseq
          %v956 = vshrl.u32 %v955, 7
          %v957 = vsub.s32 %v954, %v956
          %v958 = vrot.slane %v944, %v957
          %v959 = vcombine.high %v951, 0
          %v960 = vcombine.high %v958, 0
          %v963 = vunpack.c.l.s4 1983009808
          %v964 = vunpack.c.0.s8 %v963
          %v965 = vlaneseq
          %v966 = vshrl.u32 %v965, 7
          %v967 = vsub.s32 %v964, %v966
          %v968 = vrot.slane %v922, %v967
          %v971 = vunpack.c.l.s4 1983009808
          %v972 = vunpack.c.0.s8 %v971
          %v973 = vlaneseq
          %v974 = vshrl.u32 %v973, 7
          %v975 = vsub.s32 %v972, %v974
          %v976 = vrot.slane %v926, %v975
          %v977 = vcombine.low %v968, %v976
          %v978 = vcombine.high %v968, %v976
          %v980 = vunpack.c.l.s4 1934713408
          %v981 = vunpack.c.0.s8 %v980
          %v982 = vlaneseq
          %v983 = vshrl.u32 %v982, 7
          %v984 = vsub.s32 %v981, %v983
          %v985 = vrot.slane %v977, %v984
          %v987 = vunpack.c.l.s4 1934713408
          %v988 = vunpack.c.0.s8 %v987
          %v989 = vlaneseq
          %v990 = vshrl.u32 %v989, 7
          %v991 = vsub.s32 %v988, %v990
          %v992 = vrot.slane %v978, %v991
          %v993 = vcombine.high %v985, 0
          %v994 = vcombine.high %v992, 0
          %v997 = vpack.i.b16 %v985, %v951
          %v999 = vshrl.u32 %v951, 16
          %v1000 = vshrl.u32 %v985, 16
          %v1001 = vpack.i.b16 %v1000, %v999
          %v1005 = vpack.i.b16 %v993, %v959
          %v1007 = vshrl.u32 %v959, 16
          %v1008 = vshrl.u32 %v993, 16
          %v1009 = vpack.i.b16 %v1008, %v1007
          %v1013 = vpack.i.b16 %v992, %v958
          %v1015 = vshrl.u32 %v958, 16
          %v1016 = vshrl.u32 %v992, 16
          %v1017 = vpack.i.b16 %v1016, %v1015
          %v1021 = vpack.i.b16 %v994, %v960
          %v1023 = vshrl.u32 %v960, 16
          %v1024 = vshrl.u32 %v994, 16
          %v1025 = vpack.i.b16 %v1024, %v1023
          %v1027 = vcombine.low %v997, %v1013
          %v1029 = vunpack.c.l.s4 1983009808
          %v1030 = vunpack.c.0.s8 %v1029
          %v1031 = vlaneseq
          %v1032 = vshrl.u32 %v1031, 7
          %v1033 = vsub.s32 %v1030, %v1032
          %v1034 = vrot.slane %v1027, %v1033
          %v1035 = vcombine.low %v1005, %v1021
          %v1037 = vunpack.c.l.s4 1983009808
          %v1038 = vunpack.c.0.s8 %v1037
          %v1039 = vlaneseq
          %v1040 = vshrl.u32 %v1039, 7
          %v1041 = vsub.s32 %v1038, %v1040
          %v1042 = vrot.slane %v1035, %v1041
          %v1043 = vcombine.low %v1034, %v1042
          %v1045 = vunpack.c.l.s4 1934713408
          %v1046 = vunpack.c.0.s8 %v1045
          %v1047 = vlaneseq
          %v1048 = vshrl.u32 %v1047, 7
          %v1049 = vsub.s32 %v1046, %v1048
          %v1050 = vrot.slane %v1043, %v1049
          %v1051 = vcombine.high %v1050, 0
          %v1052 = vcombine.low %v1001, %v1017
          %v1054 = vunpack.c.l.s4 1983009808
          %v1055 = vunpack.c.0.s8 %v1054
          %v1056 = vlaneseq
          %v1057 = vshrl.u32 %v1056, 7
          %v1058 = vsub.s32 %v1055, %v1057
          %v1059 = vrot.slane %v1052, %v1058
          %v1060 = vcombine.low %v1009, %v1025
          %v1062 = vunpack.c.l.s4 1983009808
          %v1063 = vunpack.c.0.s8 %v1062
          %v1064 = vlaneseq
          %v1065 = vshrl.u32 %v1064, 7
          %v1066 = vsub.s32 %v1063, %v1065
          %v1067 = vrot.slane %v1060, %v1066
          %v1068 = vcombine.low %v1059, %v1067
          %v1070 = vunpack.c.l.s4 1934713408
          %v1071 = vunpack.c.0.s8 %v1070
          %v1072 = vlaneseq
          %v1073 = vshrl.u32 %v1072, 7
          %v1074 = vsub.s32 %v1071, %v1073
          %v1075 = vrot.slane %v1068, %v1074
          %v1076 = vcombine.high %v1075, 0
          %v1079 = vpack.i.b16 %v1075, %v1050
          %v1081 = vshrl.u32 %v1050, 16
          %v1082 = vshrl.u32 %v1075, 16
          %v1083 = vpack.i.b16 %v1082, %v1081
          %v1087 = vpack.i.b16 %v1076, %v1051
          %v1089 = vshrl.u32 %v1051, 16
          %v1090 = vshrl.u32 %v1076, 16
          %v1091 = vpack.i.b16 %v1090, %v1089
          %1093 = vst.msk [vmem:[#allocation3] sm:$0xf] %vm914, %v1079
          %1094 = vst.msk [vmem:[#allocation3 + $0x4] sm:$0xf] %vm914, %v1083
          %1095 = vst.msk [vmem:[#allocation3 + $0x8] sm:$0xf] %vm914, %v1087
          %1096 = vst.msk [vmem:[#allocation3 + $0xc] sm:$0xf] %vm914, %v1091
        $region112: #{tpu_custom_call.1} parent=87 // pred_fallthru
          _
        %v1097 = vld [vmem:[%s663] sm:$0xff]
        %v1098 = vpack.c.bf16 %v1097, %v1097
        %v1099 = vld [vmem:[%s3] sm:$0xf]
        %v1100 = vld [vmem:[%s3 + $0x4] sm:$0xf]
        %v1101 = vld [vmem:[%s3 + $0x8] sm:$0xf]
        %v1102 = vld [vmem:[%s3 + $0xc] sm:$0xf]
        %v1103 = vld [vmem:[#allocation4] sm:$0x1]
        %v1105 = vlaneseq
        %v1106 = vshrl.u32 %v1105, 7
        %v1107 = vsub.s32 0, %v1106
        %v1108 = vrot.slane %v1103, %v1107
        %v1114 = vunpack.c.l.b16 %v1099
        %v1115 = vunpack.c.l.b16 %v1100
        %v1116 = vunpack.c.l.b16 %v1101
        %v1117 = vunpack.c.l.b16 %v1102
        %v1118 = vpack.c.b16 %v1115, %v1114
        %v1119 = vpack.c.b16 %v1117, %v1116
        %vm1122 = vcmask 261120
        %v1124 = vsel %vm1122, %v1098, 0
        %1126 = vmatprep.subr.bf16.mxu0 0
        %1127 = vmatpush1.bf16.msra.mxu0 %v1118
        %1128 = vmatprep.subr.bf16.mxu0 0
        %1129 = vmatpush1.bf16.msra.mxu0 %v1119
        %1130 = vmatprep.subr.bf16.mxu0 0
        %1131 = vmatpush1.bf16.msra.mxu0 0
        %1132 = vmatprep.subr.bf16.mxu0 0
        %1133 = vmatpush1.bf16.msra.mxu0 0
        %1134 = vmatprep.subr.bf16.mxu0 0
        %1135 = vmatpush1.bf16.msra.mxu0 0
        %1136 = vmatprep.subr.bf16.mxu0 0
        %1137 = vmatpush1.bf16.msra.mxu0 0
        %1138 = vmatprep.subr.bf16.mxu0 0
        %1139 = vmatpush1.bf16.msra.mxu0 0
        %1140 = vmatprep.subr.bf16.mxu0 0
        %1141 = vmatpush1.bf16.msra.mxu0 0
        %1142 = vmatprep.subr.bf16.mxu0 0
        %1143 = vmatpush1.bf16.msra.mxu0 0
        %1144 = vmatprep.subr.bf16.mxu0 0
        %1145 = vmatpush1.bf16.msra.mxu0 0
        %1146 = vmatprep.subr.bf16.mxu0 0
        %1147 = vmatpush1.bf16.msra.mxu0 0
        %1148 = vmatprep.subr.bf16.mxu0 0
        %1149 = vmatpush1.bf16.msra.mxu0 0
        %1150 = vmatprep.subr.bf16.mxu0 0
        %1151 = vmatpush1.bf16.msra.mxu0 0
        %1152 = vmatprep.subr.bf16.mxu0 0
        %1153 = vmatpush1.bf16.msra.mxu0 0
        %1154 = vmatprep.subr.bf16.mxu0 0
        %1155 = vmatpush1.bf16.msra.mxu0 0
        %1156 = vmatprep.subr.bf16.mxu0 0
        %1157 = vmatpush1.bf16.msra.mxu0 0
        %1158 = vmatprep.mubr.bf16.mxu0 0
        %1159 = vmatmul.mubr.bf16.gmra.mrb[0].mxu0 %v1124
        %v1160 = vpop.f32.mrb[0].mxu0
        %v1161 = vadd.f32 %v1108, %v1160
        %v1162 = vpop.f32.mrb[0].mxu0
        %v1163 = vpop.f32.mrb[0].mxu0
        %v1164 = vpop.f32.mrb[0].mxu0
        %1165 = vdwg.mxu0
        %v1166 = vpack.c.bf16 %v1161, %v1161
        %1168 = vrot.lane.b32.xlu0 %v1166, 120
        %v1169 = vpop.permute.xlu0 %1168
        %1170 = vrot.lane.b32.xlu0 %v1166, 112
        %v1171 = vpop.permute.xlu0 %1170
        %1172 = vrot.lane.b32.xlu0 %v1166, 104
        %v1173 = vpop.permute.xlu0 %1172
        %v1175 = vunpack.c.l.s4 1983009808
        %v1176 = vunpack.c.0.s8 %v1175
        %v1177 = vlaneseq
        %v1178 = vshrl.u32 %v1177, 7
        %v1179 = vsub.s32 %v1176, %v1178
        %v1180 = vrot.slane %v1166, %v1179
        %v1183 = vunpack.c.l.s4 1983009808
        %v1184 = vunpack.c.0.s8 %v1183
        %v1185 = vlaneseq
        %v1186 = vshrl.u32 %v1185, 7
        %v1187 = vsub.s32 %v1184, %v1186
        %v1188 = vrot.slane %v1171, %v1187
        %v1189 = vcombine.low %v1180, %v1188
        %v1190 = vcombine.high %v1180, %v1188
        %v1192 = vunpack.c.l.s4 1934713408
        %v1193 = vunpack.c.0.s8 %v1192
        %v1194 = vlaneseq
        %v1195 = vshrl.u32 %v1194, 7
        %v1196 = vsub.s32 %v1193, %v1195
        %v1197 = vrot.slane %v1189, %v1196
        %v1199 = vunpack.c.l.s4 1934713408
        %v1200 = vunpack.c.0.s8 %v1199
        %v1201 = vlaneseq
        %v1202 = vshrl.u32 %v1201, 7
        %v1203 = vsub.s32 %v1200, %v1202
        %v1204 = vrot.slane %v1190, %v1203
        %v1205 = vcombine.high %v1197, 0
        %v1206 = vcombine.high %v1204, 0
        %v1209 = vunpack.c.l.s4 1983009808
        %v1210 = vunpack.c.0.s8 %v1209
        %v1211 = vlaneseq
        %v1212 = vshrl.u32 %v1211, 7
        %v1213 = vsub.s32 %v1210, %v1212
        %v1214 = vrot.slane %v1169, %v1213
        %v1217 = vunpack.c.l.s4 1983009808
        %v1218 = vunpack.c.0.s8 %v1217
        %v1219 = vlaneseq
        %v1220 = vshrl.u32 %v1219, 7
        %v1221 = vsub.s32 %v1218, %v1220
        %v1222 = vrot.slane %v1173, %v1221
        %v1223 = vcombine.low %v1214, %v1222
        %v1224 = vcombine.high %v1214, %v1222
        %v1226 = vunpack.c.l.s4 1934713408
        %v1227 = vunpack.c.0.s8 %v1226
        %v1228 = vlaneseq
        %v1229 = vshrl.u32 %v1228, 7
        %v1230 = vsub.s32 %v1227, %v1229
        %v1231 = vrot.slane %v1223, %v1230
        %v1233 = vunpack.c.l.s4 1934713408
        %v1234 = vunpack.c.0.s8 %v1233
        %v1235 = vlaneseq
        %v1236 = vshrl.u32 %v1235, 7
        %v1237 = vsub.s32 %v1234, %v1236
        %v1238 = vrot.slane %v1224, %v1237
        %v1239 = vcombine.high %v1231, 0
        %v1240 = vcombine.high %v1238, 0
        %v1243 = vpack.i.b16 %v1231, %v1197
        %v1245 = vshrl.u32 %v1197, 16
        %v1246 = vshrl.u32 %v1231, 16
        %v1247 = vpack.i.b16 %v1246, %v1245
        %v1251 = vpack.i.b16 %v1239, %v1205
        %v1253 = vshrl.u32 %v1205, 16
        %v1254 = vshrl.u32 %v1239, 16
        %v1255 = vpack.i.b16 %v1254, %v1253
        %v1259 = vpack.i.b16 %v1238, %v1204
        %v1261 = vshrl.u32 %v1204, 16
        %v1262 = vshrl.u32 %v1238, 16
        %v1263 = vpack.i.b16 %v1262, %v1261
        %v1267 = vpack.i.b16 %v1240, %v1206
        %v1269 = vshrl.u32 %v1206, 16
        %v1270 = vshrl.u32 %v1240, 16
        %v1271 = vpack.i.b16 %v1270, %v1269
        %v1273 = vcombine.low %v1243, %v1259
        %v1275 = vunpack.c.l.s4 1983009808
        %v1276 = vunpack.c.0.s8 %v1275
        %v1277 = vlaneseq
        %v1278 = vshrl.u32 %v1277, 7
        %v1279 = vsub.s32 %v1276, %v1278
        %v1280 = vrot.slane %v1273, %v1279
        %v1281 = vcombine.low %v1251, %v1267
        %v1283 = vunpack.c.l.s4 1983009808
        %v1284 = vunpack.c.0.s8 %v1283
        %v1285 = vlaneseq
        %v1286 = vshrl.u32 %v1285, 7
        %v1287 = vsub.s32 %v1284, %v1286
        %v1288 = vrot.slane %v1281, %v1287
        %v1289 = vcombine.low %v1280, %v1288
        %v1291 = vunpack.c.l.s4 1934713408
        %v1292 = vunpack.c.0.s8 %v1291
        %v1293 = vlaneseq
        %v1294 = vshrl.u32 %v1293, 7
        %v1295 = vsub.s32 %v1292, %v1294
        %v1296 = vrot.slane %v1289, %v1295
        %v1297 = vcombine.high %v1296, 0
        %v1298 = vcombine.low %v1247, %v1263
        %v1300 = vunpack.c.l.s4 1983009808
        %v1301 = vunpack.c.0.s8 %v1300
        %v1302 = vlaneseq
        %v1303 = vshrl.u32 %v1302, 7
        %v1304 = vsub.s32 %v1301, %v1303
        %v1305 = vrot.slane %v1298, %v1304
        %v1306 = vcombine.low %v1255, %v1271
        %v1308 = vunpack.c.l.s4 1983009808
        %v1309 = vunpack.c.0.s8 %v1308
        %v1310 = vlaneseq
        %v1311 = vshrl.u32 %v1310, 7
        %v1312 = vsub.s32 %v1309, %v1311
        %v1313 = vrot.slane %v1306, %v1312
        %v1314 = vcombine.low %v1305, %v1313
        %v1316 = vunpack.c.l.s4 1934713408
        %v1317 = vunpack.c.0.s8 %v1316
        %v1318 = vlaneseq
        %v1319 = vshrl.u32 %v1318, 7
        %v1320 = vsub.s32 %v1317, %v1319
        %v1321 = vrot.slane %v1314, %v1320
        %v1322 = vcombine.high %v1321, 0
        %v1325 = vpack.i.b16 %v1321, %v1296
        %v1326 = vshrl.u32 %v1296, 16
        %v1327 = vshrl.u32 %v1321, 16
        %v1328 = vpack.i.b16 %v1327, %v1326
        %v1331 = vpack.i.b16 %v1322, %v1297
        %v1332 = vshrl.u32 %v1297, 16
        %v1333 = vshrl.u32 %v1322, 16
        %v1334 = vpack.i.b16 %v1333, %v1332
        %v1335 = vld [vmem:[#allocation2] sm:$0xf]
        %v1336 = vld [vmem:[#allocation2 + $0x4] sm:$0xf]
        %v1337 = vld [vmem:[#allocation2 + $0x8] sm:$0xf]
        %v1338 = vld [vmem:[#allocation2 + $0xc] sm:$0xf]
        %v1339 = vld [vmem:[%s666] sm:$0x1]
        %vm1340 = vcmp.gt.f32.partialorder %v1339, 0.0
        %v1341 = vsel %vm1340, 0.0, -1e+09
        %v1343 = vlaneseq
        %v1344 = vshrl.u32 %v1343, 7
        %v1345 = vsub.s32 0, %v1344
        %v1346 = vrot.slane %v1341, %v1345
        %vm1348 = vcmask 64512
        %v1350 = vsel %vm1348, %v1325, 0
        %v1353 = vsel %vm1348, %v1335, 0
        %1355 = vmatprep.subr.bf16.mxu0 0
        %1356 = vmatpush1.bf16.xpose.msra.mxu0 %v1353
        %1357 = vmatprep.subr.bf16.mxu0 0
        %1358 = vmatpush1.bf16.xpose.msra.mxu0 0
        %1359 = vmatprep.subr.bf16.mxu0 0
        %1360 = vmatpush1.bf16.xpose.msra.mxu0 0
        %1361 = vmatprep.subr.bf16.mxu0 0
        %1362 = vmatpush1.bf16.xpose.msra.mxu0 0
        %1363 = vmatprep.subr.bf16.mxu0 0
        %1364 = vmatpush1.bf16.xpose.msra.mxu0 0
        %1365 = vmatprep.subr.bf16.mxu0 0
        %1366 = vmatpush1.bf16.xpose.msra.mxu0 0
        %1367 = vmatprep.subr.bf16.mxu0 0
        %1368 = vmatpush1.bf16.xpose.msra.mxu0 0
        %1369 = vmatprep.subr.bf16.mxu0 0
        %1370 = vmatpush1.bf16.xpose.msra.mxu0 0
        %1371 = vmatprep.subr.bf16.mxu0 0
        %1372 = vmatpush1.bf16.xpose.msra.mxu0 0
        %1373 = vmatprep.subr.bf16.mxu0 0
        %1374 = vmatpush1.bf16.xpose.msra.mxu0 0
        %1375 = vmatprep.subr.bf16.mxu0 0
        %1376 = vmatpush1.bf16.xpose.msra.mxu0 0
        %1377 = vmatprep.subr.bf16.mxu0 0
        %1378 = vmatpush1.bf16.xpose.msra.mxu0 0
        %1379 = vmatprep.subr.bf16.mxu0 0
        %1380 = vmatpush1.bf16.xpose.msra.mxu0 0
        %1381 = vmatprep.subr.bf16.mxu0 0
        %1382 = vmatpush1.bf16.xpose.msra.mxu0 0
        %1383 = vmatprep.subr.bf16.mxu0 0
        %1384 = vmatpush1.bf16.xpose.msra.mxu0 0
        %1385 = vmatprep.subr.bf16.mxu0 0
        %1386 = vmatpush1.bf16.xpose.msra.mxu0 0
        %1387 = vmatprep.mubr.bf16.mxu0 0
        %1388 = vmatmul.mubr.bf16.gmra.mrb[0].mxu0 %v1350
        %v1389 = vpop.f32.mrb[0].mxu0
        %v1390 = vadd.f32 %v1346, %v1389
        %v1391 = vpop.f32.mrb[0].mxu0
        %v1392 = vpop.f32.mrb[0].mxu0
        %v1393 = vpop.f32.mrb[0].mxu0
        %1394 = vdwg.mxu0
        %v1396 = vsel %vm1348, %v1328, 0
        %v1399 = vsel %vm1348, %v1336, 0
        %1401 = vmatprep.subr.bf16.mxu0 0
        %1402 = vmatpush1.bf16.xpose.msra.mxu0 %v1399
        %1403 = vmatprep.subr.bf16.mxu0 0
        %1404 = vmatpush1.bf16.xpose.msra.mxu0 0
        %1405 = vmatprep.subr.bf16.mxu0 0
        %1406 = vmatpush1.bf16.xpose.msra.mxu0 0
        %1407 = vmatprep.subr.bf16.mxu0 0
        %1408 = vmatpush1.bf16.xpose.msra.mxu0 0
        %1409 = vmatprep.subr.bf16.mxu0 0
        %1410 = vmatpush1.bf16.xpose.msra.mxu0 0
        %1411 = vmatprep.subr.bf16.mxu0 0
        %1412 = vmatpush1.bf16.xpose.msra.mxu0 0
        %1413 = vmatprep.subr.bf16.mxu0 0
        %1414 = vmatpush1.bf16.xpose.msra.mxu0 0
        %1415 = vmatprep.subr.bf16.mxu0 0
        %1416 = vmatpush1.bf16.xpose.msra.mxu0 0
        %1417 = vmatprep.subr.bf16.mxu0 0
        %1418 = vmatpush1.bf16.xpose.msra.mxu0 0
        %1419 = vmatprep.subr.bf16.mxu0 0
        %1420 = vmatpush1.bf16.xpose.msra.mxu0 0
        %1421 = vmatprep.subr.bf16.mxu0 0
        %1422 = vmatpush1.bf16.xpose.msra.mxu0 0
        %1423 = vmatprep.subr.bf16.mxu0 0
        %1424 = vmatpush1.bf16.xpose.msra.mxu0 0
        %1425 = vmatprep.subr.bf16.mxu0 0
        %1426 = vmatpush1.bf16.xpose.msra.mxu0 0
        %1427 = vmatprep.subr.bf16.mxu0 0
        %1428 = vmatpush1.bf16.xpose.msra.mxu0 0
        %1429 = vmatprep.subr.bf16.mxu0 0
        %1430 = vmatpush1.bf16.xpose.msra.mxu0 0
        %1431 = vmatprep.subr.bf16.mxu0 0
        %1432 = vmatpush1.bf16.xpose.msra.mxu0 0
        %1433 = vmatprep.mubr.bf16.mxu0 0
        %1434 = vmatmul.mubr.bf16.gmra.mrb[0].mxu0 %v1396
        %v1435 = vpop.f32.mrb[0].mxu0
        %v1436 = vadd.f32 %v1346, %v1435
        %v1437 = vpop.f32.mrb[0].mxu0
        %v1438 = vpop.f32.mrb[0].mxu0
        %v1439 = vpop.f32.mrb[0].mxu0
        %1440 = vdwg.mxu0
        %v1442 = vsel %vm1348, %v1331, 0
        %v1445 = vsel %vm1348, %v1337, 0
        %1447 = vmatprep.subr.bf16.mxu0 0
        %1448 = vmatpush1.bf16.xpose.msra.mxu0 %v1445
        %1449 = vmatprep.subr.bf16.mxu0 0
        %1450 = vmatpush1.bf16.xpose.msra.mxu0 0
        %1451 = vmatprep.subr.bf16.mxu0 0
        %1452 = vmatpush1.bf16.xpose.msra.mxu0 0
        %1453 = vmatprep.subr.bf16.mxu0 0
        %1454 = vmatpush1.bf16.xpose.msra.mxu0 0
        %1455 = vmatprep.subr.bf16.mxu0 0
        %1456 = vmatpush1.bf16.xpose.msra.mxu0 0
        %1457 = vmatprep.subr.bf16.mxu0 0
        %1458 = vmatpush1.bf16.xpose.msra.mxu0 0
        %1459 = vmatprep.subr.bf16.mxu0 0
        %1460 = vmatpush1.bf16.xpose.msra.mxu0 0
        %1461 = vmatprep.subr.bf16.mxu0 0
        %1462 = vmatpush1.bf16.xpose.msra.mxu0 0
        %1463 = vmatprep.subr.bf16.mxu0 0
        %1464 = vmatpush1.bf16.xpose.msra.mxu0 0
        %1465 = vmatprep.subr.bf16.mxu0 0
        %1466 = vmatpush1.bf16.xpose.msra.mxu0 0
        %1467 = vmatprep.subr.bf16.mxu0 0
        %1468 = vmatpush1.bf16.xpose.msra.mxu0 0
        %1469 = vmatprep.subr.bf16.mxu0 0
        %1470 = vmatpush1.bf16.xpose.msra.mxu0 0
        %1471 = vmatprep.subr.bf16.mxu0 0
        %1472 = vmatpush1.bf16.xpose.msra.mxu0 0
        %1473 = vmatprep.subr.bf16.mxu0 0
        %1474 = vmatpush1.bf16.xpose.msra.mxu0 0
        %1475 = vmatprep.subr.bf16.mxu0 0
        %1476 = vmatpush1.bf16.xpose.msra.mxu0 0
        %1477 = vmatprep.subr.bf16.mxu0 0
        %1478 = vmatpush1.bf16.xpose.msra.mxu0 0
        %1479 = vmatprep.mubr.bf16.mxu0 0
        %1480 = vmatmul.mubr.bf16.gmra.mrb[0].mxu0 %v1442
        %v1481 = vpop.f32.mrb[0].mxu0
        %v1482 = vadd.f32 %v1346, %v1481
        %v1483 = vpop.f32.mrb[0].mxu0
        %v1484 = vpop.f32.mrb[0].mxu0
        %v1485 = vpop.f32.mrb[0].mxu0
        %1486 = vdwg.mxu0
        %v1488 = vsel %vm1348, %v1334, 0
        %v1491 = vsel %vm1348, %v1338, 0
        %1493 = vmatprep.subr.bf16.mxu0 0
        %1494 = vmatpush1.bf16.xpose.msra.mxu0 %v1491
        %1495 = vmatprep.subr.bf16.mxu0 0
        %1496 = vmatpush1.bf16.xpose.msra.mxu0 0
        %1497 = vmatprep.subr.bf16.mxu0 0
        %1498 = vmatpush1.bf16.xpose.msra.mxu0 0
        %1499 = vmatprep.subr.bf16.mxu0 0
        %1500 = vmatpush1.bf16.xpose.msra.mxu0 0
        %1501 = vmatprep.subr.bf16.mxu0 0
        %1502 = vmatpush1.bf16.xpose.msra.mxu0 0
        %1503 = vmatprep.subr.bf16.mxu0 0
        %1504 = vmatpush1.bf16.xpose.msra.mxu0 0
        %1505 = vmatprep.subr.bf16.mxu0 0
        %1506 = vmatpush1.bf16.xpose.msra.mxu0 0
        %1507 = vmatprep.subr.bf16.mxu0 0
        %1508 = vmatpush1.bf16.xpose.msra.mxu0 0
        %1509 = vmatprep.subr.bf16.mxu0 0
        %1510 = vmatpush1.bf16.xpose.msra.mxu0 0
        %1511 = vmatprep.subr.bf16.mxu0 0
        %1512 = vmatpush1.bf16.xpose.msra.mxu0 0
        %1513 = vmatprep.subr.bf16.mxu0 0
        %1514 = vmatpush1.bf16.xpose.msra.mxu0 0
        %1515 = vmatprep.subr.bf16.mxu0 0
        %1516 = vmatpush1.bf16.xpose.msra.mxu0 0
        %1517 = vmatprep.subr.bf16.mxu0 0
        %1518 = vmatpush1.bf16.xpose.msra.mxu0 0
        %1519 = vmatprep.subr.bf16.mxu0 0
        %1520 = vmatpush1.bf16.xpose.msra.mxu0 0
        %1521 = vmatprep.subr.bf16.mxu0 0
        %1522 = vmatpush1.bf16.xpose.msra.mxu0 0
        %1523 = vmatprep.subr.bf16.mxu0 0
        %1524 = vmatpush1.bf16.xpose.msra.mxu0 0
        %1525 = vmatprep.mubr.bf16.mxu0 0
        %1526 = vmatmul.mubr.bf16.gmra.mrb[0].mxu0 %v1488
        %v1527 = vpop.f32.mrb[0].mxu0
        %v1528 = vadd.f32 %v1346, %v1527
        %v1529 = vpop.f32.mrb[0].mxu0
        %v1530 = vpop.f32.mrb[0].mxu0
        %v1531 = vpop.f32.mrb[0].mxu0
        %1532 = vdwg.mxu0
        %v1533 = vsel %vm1348, %v1390, -inf
        %1534 = vmax.xlane.f32.xlu0 %v1533
        %v1535 = vpop.xlane.xlu0 %1534
        %v1536 = vsel %vm1348, %v1436, -inf
        %1537 = vmax.xlane.f32.xlu0 %v1536
        %v1538 = vpop.xlane.xlu0 %1537
        %v1539 = vsel %vm1348, %v1482, -inf
        %1540 = vmax.xlane.f32.xlu0 %v1539
        %v1541 = vpop.xlane.xlu0 %1540
        %v1542 = vsel %vm1348, %v1528, -inf
        %1543 = vmax.xlane.f32.xlu0 %v1542
        %v1544 = vpop.xlane.xlu0 %1543
        %v1545 = vsub.f32 %v1390, %v1535
        %v1546 = vsub.f32 %v1436, %v1538
        %v1547 = vsub.f32 %v1482, %v1541
        %v1548 = vsub.f32 %v1528, %v1544
        %v1549 = vmul.f32 %v1545, 1.442695
        %v1550 = vpow.pop %v1549
        %v1551 = vmul.f32 %v1546, 1.442695
        %v1552 = vpow.pop %v1551
        %v1553 = vmul.f32 %v1547, 1.442695
        %v1554 = vpow.pop %v1553
        %v1555 = vmul.f32 %v1548, 1.442695
        %v1556 = vpow.pop %v1555
        %v1557 = vsel %vm1348, %v1550, 0.0
        %1558 = vadd.xlane.f32.xlu0 %v1557
        %v1559 = vpop.xlane.xlu0 %1558
        %v1560 = vsel %vm1348, %v1552, 0.0
        %1561 = vadd.xlane.f32.xlu0 %v1560
        %v1562 = vpop.xlane.xlu0 %1561
        %v1563 = vsel %vm1348, %v1554, 0.0
        %1564 = vadd.xlane.f32.xlu0 %v1563
        %v1565 = vpop.xlane.xlu0 %1564
        %v1566 = vsel %vm1348, %v1556, 0.0
        %1567 = vadd.xlane.f32.xlu0 %v1566
        %v1568 = vpop.xlane.xlu0 %1567
        %v1569 = vpack.c.bf16 %v1550, %v1550
        %v1570 = vpack.c.bf16 %v1552, %v1552
        %v1571 = vpack.c.bf16 %v1554, %v1554
        %v1572 = vpack.c.bf16 %v1556, %v1556
        %v1573 = vld [vmem:[#allocation3] sm:$0xf]
        %v1574 = vld [vmem:[#allocation3 + $0x4] sm:$0xf]
        %v1575 = vld [vmem:[#allocation3 + $0x8] sm:$0xf]
        %v1576 = vld [vmem:[#allocation3 + $0xc] sm:$0xf]
        %v1578 = vsel %vm1348, %v1569, 0
        %vm1580 = vcmask 1043456
        %v1582 = vsel %vm1580, %v1573, 0
        %1584 = vmatprep.subr.bf16.mxu0 0
        %1585 = vmatpush1.bf16.msra.mxu0 %v1582
        %1586 = vmatprep.subr.bf16.mxu0 0
        %1587 = vmatpush1.bf16.msra.mxu0 0
        %1588 = vmatprep.subr.bf16.mxu0 0
        %1589 = vmatpush1.bf16.msra.mxu0 0
        %1590 = vmatprep.subr.bf16.mxu0 0
        %1591 = vmatpush1.bf16.msra.mxu0 0
        %1592 = vmatprep.subr.bf16.mxu0 0
        %1593 = vmatpush1.bf16.msra.mxu0 0
        %1594 = vmatprep.subr.bf16.mxu0 0
        %1595 = vmatpush1.bf16.msra.mxu0 0
        %1596 = vmatprep.subr.bf16.mxu0 0
        %1597 = vmatpush1.bf16.msra.mxu0 0
        %1598 = vmatprep.subr.bf16.mxu0 0
        %1599 = vmatpush1.bf16.msra.mxu0 0
        %1600 = vmatprep.subr.bf16.mxu0 0
        %1601 = vmatpush1.bf16.msra.mxu0 0
        %1602 = vmatprep.subr.bf16.mxu0 0
        %1603 = vmatpush1.bf16.msra.mxu0 0
        %1604 = vmatprep.subr.bf16.mxu0 0
        %1605 = vmatpush1.bf16.msra.mxu0 0
        %1606 = vmatprep.subr.bf16.mxu0 0
        %1607 = vmatpush1.bf16.msra.mxu0 0
        %1608 = vmatprep.subr.bf16.mxu0 0
        %1609 = vmatpush1.bf16.msra.mxu0 0
        %1610 = vmatprep.subr.bf16.mxu0 0
        %1611 = vmatpush1.bf16.msra.mxu0 0
        %1612 = vmatprep.subr.bf16.mxu0 0
        %1613 = vmatpush1.bf16.msra.mxu0 0
        %1614 = vmatprep.subr.bf16.mxu0 0
        %1615 = vmatpush1.bf16.msra.mxu0 0
        %1616 = vmatprep.mubr.bf16.mxu0 0
        %1617 = vmatmul.mubr.bf16.gmra.mrb[0].mxu0 %v1578
        %v1618 = vpop.f32.mrb[0].mxu0
        %v1619 = vadd.f32 0.0, %v1618
        %v1620 = vpop.f32.mrb[0].mxu0
        %v1621 = vpop.f32.mrb[0].mxu0
        %v1622 = vpop.f32.mrb[0].mxu0
        %1623 = vdwg.mxu0
        %v1625 = vsel %vm1348, %v1570, 0
        %v1628 = vsel %vm1580, %v1574, 0
        %1630 = vmatprep.subr.bf16.mxu0 0
        %1631 = vmatpush1.bf16.msra.mxu0 %v1628
        %1632 = vmatprep.subr.bf16.mxu0 0
        %1633 = vmatpush1.bf16.msra.mxu0 0
        %1634 = vmatprep.subr.bf16.mxu0 0
        %1635 = vmatpush1.bf16.msra.mxu0 0
        %1636 = vmatprep.subr.bf16.mxu0 0
        %1637 = vmatpush1.bf16.msra.mxu0 0
        %1638 = vmatprep.subr.bf16.mxu0 0
        %1639 = vmatpush1.bf16.msra.mxu0 0
        %1640 = vmatprep.subr.bf16.mxu0 0
        %1641 = vmatpush1.bf16.msra.mxu0 0
        %1642 = vmatprep.subr.bf16.mxu0 0
        %1643 = vmatpush1.bf16.msra.mxu0 0
        %1644 = vmatprep.subr.bf16.mxu0 0
        %1645 = vmatpush1.bf16.msra.mxu0 0
        %1646 = vmatprep.subr.bf16.mxu0 0
        %1647 = vmatpush1.bf16.msra.mxu0 0
        %1648 = vmatprep.subr.bf16.mxu0 0
        %1649 = vmatpush1.bf16.msra.mxu0 0
        %1650 = vmatprep.subr.bf16.mxu0 0
        %1651 = vmatpush1.bf16.msra.mxu0 0
        %1652 = vmatprep.subr.bf16.mxu0 0
        %1653 = vmatpush1.bf16.msra.mxu0 0
        %1654 = vmatprep.subr.bf16.mxu0 0
        %1655 = vmatpush1.bf16.msra.mxu0 0
        %1656 = vmatprep.subr.bf16.mxu0 0
        %1657 = vmatpush1.bf16.msra.mxu0 0
        %1658 = vmatprep.subr.bf16.mxu0 0
        %1659 = vmatpush1.bf16.msra.mxu0 0
        %1660 = vmatprep.subr.bf16.mxu0 0
        %1661 = vmatpush1.bf16.msra.mxu0 0
        %1662 = vmatprep.mubr.bf16.mxu0 0
        %1663 = vmatmul.mubr.bf16.gmra.mrb[0].mxu0 %v1625
        %v1664 = vpop.f32.mrb[0].mxu0
        %v1665 = vadd.f32 0.0, %v1664
        %v1666 = vpop.f32.mrb[0].mxu0
        %v1667 = vpop.f32.mrb[0].mxu0
        %v1668 = vpop.f32.mrb[0].mxu0
        %1669 = vdwg.mxu0
        %v1671 = vsel %vm1348, %v1571, 0
        %v1674 = vsel %vm1580, %v1575, 0
        %1676 = vmatprep.subr.bf16.mxu0 0
        %1677 = vmatpush1.bf16.msra.mxu0 %v1674
        %1678 = vmatprep.subr.bf16.mxu0 0
        %1679 = vmatpush1.bf16.msra.mxu0 0
        %1680 = vmatprep.subr.bf16.mxu0 0
        %1681 = vmatpush1.bf16.msra.mxu0 0
        %1682 = vmatprep.subr.bf16.mxu0 0
        %1683 = vmatpush1.bf16.msra.mxu0 0
        %1684 = vmatprep.subr.bf16.mxu0 0
        %1685 = vmatpush1.bf16.msra.mxu0 0
        %1686 = vmatprep.subr.bf16.mxu0 0
        %1687 = vmatpush1.bf16.msra.mxu0 0
        %1688 = vmatprep.subr.bf16.mxu0 0
        %1689 = vmatpush1.bf16.msra.mxu0 0
        %1690 = vmatprep.subr.bf16.mxu0 0
        %1691 = vmatpush1.bf16.msra.mxu0 0
        %1692 = vmatprep.subr.bf16.mxu0 0
        %1693 = vmatpush1.bf16.msra.mxu0 0
        %1694 = vmatprep.subr.bf16.mxu0 0
        %1695 = vmatpush1.bf16.msra.mxu0 0
        %1696 = vmatprep.subr.bf16.mxu0 0
        %1697 = vmatpush1.bf16.msra.mxu0 0
        %1698 = vmatprep.subr.bf16.mxu0 0
        %1699 = vmatpush1.bf16.msra.mxu0 0
        %1700 = vmatprep.subr.bf16.mxu0 0
        %1701 = vmatpush1.bf16.msra.mxu0 0
        %1702 = vmatprep.subr.bf16.mxu0 0
        %1703 = vmatpush1.bf16.msra.mxu0 0
        %1704 = vmatprep.subr.bf16.mxu0 0
        %1705 = vmatpush1.bf16.msra.mxu0 0
        %1706 = vmatprep.subr.bf16.mxu0 0
        %1707 = vmatpush1.bf16.msra.mxu0 0
        %1708 = vmatprep.mubr.bf16.mxu0 0
        %1709 = vmatmul.mubr.bf16.gmra.mrb[0].mxu0 %v1671
        %v1710 = vpop.f32.mrb[0].mxu0
        %v1711 = vadd.f32 0.0, %v1710
        %v1712 = vpop.f32.mrb[0].mxu0
        %v1713 = vpop.f32.mrb[0].mxu0
        %v1714 = vpop.f32.mrb[0].mxu0
        %1715 = vdwg.mxu0
        %v1717 = vsel %vm1348, %v1572, 0
        %v1720 = vsel %vm1580, %v1576, 0
        %1722 = vmatprep.subr.bf16.mxu0 0
        %1723 = vmatpush1.bf16.msra.mxu0 %v1720
        %1724 = vmatprep.subr.bf16.mxu0 0
        %1725 = vmatpush1.bf16.msra.mxu0 0
        %1726 = vmatprep.subr.bf16.mxu0 0
        %1727 = vmatpush1.bf16.msra.mxu0 0
        %1728 = vmatprep.subr.bf16.mxu0 0
        %1729 = vmatpush1.bf16.msra.mxu0 0
        %1730 = vmatprep.subr.bf16.mxu0 0
        %1731 = vmatpush1.bf16.msra.mxu0 0
        %1732 = vmatprep.subr.bf16.mxu0 0
        %1733 = vmatpush1.bf16.msra.mxu0 0
        %1734 = vmatprep.subr.bf16.mxu0 0
        %1735 = vmatpush1.bf16.msra.mxu0 0
        %1736 = vmatprep.subr.bf16.mxu0 0
        %1737 = vmatpush1.bf16.msra.mxu0 0
        %1738 = vmatprep.subr.bf16.mxu0 0
        %1739 = vmatpush1.bf16.msra.mxu0 0
        %1740 = vmatprep.subr.bf16.mxu0 0
        %1741 = vmatpush1.bf16.msra.mxu0 0
        %1742 = vmatprep.subr.bf16.mxu0 0
        %1743 = vmatpush1.bf16.msra.mxu0 0
        %1744 = vmatprep.subr.bf16.mxu0 0
        %1745 = vmatpush1.bf16.msra.mxu0 0
        %1746 = vmatprep.subr.bf16.mxu0 0
        %1747 = vmatpush1.bf16.msra.mxu0 0
        %1748 = vmatprep.subr.bf16.mxu0 0
        %1749 = vmatpush1.bf16.msra.mxu0 0
        %1750 = vmatprep.subr.bf16.mxu0 0
        %1751 = vmatpush1.bf16.msra.mxu0 0
        %1752 = vmatprep.subr.bf16.mxu0 0
        %1753 = vmatpush1.bf16.msra.mxu0 0
        %1754 = vmatprep.mubr.bf16.mxu0 0
        %1755 = vmatmul.mubr.bf16.gmra.mrb[0].mxu0 %v1717
        %v1756 = vpop.f32.mrb[0].mxu0
        %v1757 = vadd.f32 0.0, %v1756
        %v1758 = vpop.f32.mrb[0].mxu0
        %v1759 = vpop.f32.mrb[0].mxu0
        %v1760 = vpop.f32.mrb[0].mxu0
        %1761 = vdwg.mxu0
        %v1762 = vrcp.pop %v1559
        %v1763 = vrcp.pop %v1562
        %v1764 = vrcp.pop %v1565
        %v1765 = vrcp.pop %v1568
        %v1766 = vmul.f32 %v1619, %v1762
        %v1767 = vmul.f32 %v1665, %v1763
        %v1768 = vmul.f32 %v1711, %v1764
        %v1769 = vmul.f32 %v1757, %v1765
        %v1770 = vcombine.low %v1766, %v1768
        %v1771 = vcombine.high %v1766, %v1768
        %v1773 = vunpack.c.l.s4 1983009808
        %v1774 = vunpack.c.0.s8 %v1773
        %v1775 = vlaneseq
        %v1776 = vshrl.u32 %v1775, 7
        %v1777 = vsub.s32 %v1774, %v1776
        %v1778 = vrot.slane %v1770, %v1777
        %v1780 = vunpack.c.l.s4 1983009808
        %v1781 = vunpack.c.0.s8 %v1780
        %v1782 = vlaneseq
        %v1783 = vshrl.u32 %v1782, 7
        %v1784 = vsub.s32 %v1781, %v1783
        %v1785 = vrot.slane %v1771, %v1784
        %v1786 = vcombine.low %v1767, %v1769
        %v1787 = vcombine.high %v1767, %v1769
        %v1789 = vunpack.c.l.s4 1983009808
        %v1790 = vunpack.c.0.s8 %v1789
        %v1791 = vlaneseq
        %v1792 = vshrl.u32 %v1791, 7
        %v1793 = vsub.s32 %v1790, %v1792
        %v1794 = vrot.slane %v1786, %v1793
        %v1796 = vunpack.c.l.s4 1983009808
        %v1797 = vunpack.c.0.s8 %v1796
        %v1798 = vlaneseq
        %v1799 = vshrl.u32 %v1798, 7
        %v1800 = vsub.s32 %v1797, %v1799
        %v1801 = vrot.slane %v1787, %v1800
        %v1802 = vcombine.low %v1778, %v1794
        %v1803 = vcombine.high %v1778, %v1794
        %v1805 = vunpack.c.l.s4 1934713408
        %v1806 = vunpack.c.0.s8 %v1805
        %v1807 = vlaneseq
        %v1808 = vshrl.u32 %v1807, 7
        %v1809 = vsub.s32 %v1806, %v1808
        %v1810 = vrot.slane %v1802, %v1809
        %v1812 = vunpack.c.l.s4 1934713408
        %v1813 = vunpack.c.0.s8 %v1812
        %v1814 = vlaneseq
        %v1815 = vshrl.u32 %v1814, 7
        %v1816 = vsub.s32 %v1813, %v1815
        %v1817 = vrot.slane %v1803, %v1816
        %v1818 = vcombine.low %v1785, %v1801
        %v1819 = vcombine.high %v1785, %v1801
        %v1821 = vunpack.c.l.s4 1934713408
        %v1822 = vunpack.c.0.s8 %v1821
        %v1823 = vlaneseq
        %v1824 = vshrl.u32 %v1823, 7
        %v1825 = vsub.s32 %v1822, %v1824
        %v1826 = vrot.slane %v1818, %v1825
        %v1828 = vunpack.c.l.s4 1934713408
        %v1829 = vunpack.c.0.s8 %v1828
        %v1830 = vlaneseq
        %v1831 = vshrl.u32 %v1830, 7
        %v1832 = vsub.s32 %v1829, %v1831
        %v1833 = vrot.slane %v1819, %v1832
        %v1834 = vcombine.high %v1810, 0.0
        %v1835 = vcombine.high %v1817, 0.0
        %v1836 = vcombine.high %v1826, 0.0
        %v1837 = vcombine.high %v1833, 0.0
        %v1838 = vcombine.low %v1810, %v1817
        %v1840 = vunpack.c.l.s4 1983009808
        %v1841 = vunpack.c.0.s8 %v1840
        %v1842 = vlaneseq
        %v1843 = vshrl.u32 %v1842, 7
        %v1844 = vsub.s32 %v1841, %v1843
        %v1845 = vrot.slane %v1838, %v1844
        %v1846 = vcombine.low %v1834, %v1835
        %v1848 = vunpack.c.l.s4 1983009808
        %v1849 = vunpack.c.0.s8 %v1848
        %v1850 = vlaneseq
        %v1851 = vshrl.u32 %v1850, 7
        %v1852 = vsub.s32 %v1849, %v1851
        %v1853 = vrot.slane %v1846, %v1852
        %v1854 = vcombine.low %v1826, %v1833
        %v1856 = vunpack.c.l.s4 1983009808
        %v1857 = vunpack.c.0.s8 %v1856
        %v1858 = vlaneseq
        %v1859 = vshrl.u32 %v1858, 7
        %v1860 = vsub.s32 %v1857, %v1859
        %v1861 = vrot.slane %v1854, %v1860
        %v1862 = vcombine.low %v1836, %v1837
        %v1864 = vunpack.c.l.s4 1983009808
        %v1865 = vunpack.c.0.s8 %v1864
        %v1866 = vlaneseq
        %v1867 = vshrl.u32 %v1866, 7
        %v1868 = vsub.s32 %v1865, %v1867
        %v1869 = vrot.slane %v1862, %v1868
        %v1870 = vcombine.low %v1845, %v1853
        %v1871 = vcombine.high %v1845, %v1853
        %v1873 = vunpack.c.l.s4 1934713408
        %v1874 = vunpack.c.0.s8 %v1873
        %v1875 = vlaneseq
        %v1876 = vshrl.u32 %v1875, 7
        %v1877 = vsub.s32 %v1874, %v1876
        %v1878 = vrot.slane %v1870, %v1877
        %v1880 = vunpack.c.l.s4 1934713408
        %v1881 = vunpack.c.0.s8 %v1880
        %v1882 = vlaneseq
        %v1883 = vshrl.u32 %v1882, 7
        %v1884 = vsub.s32 %v1881, %v1883
        %v1885 = vrot.slane %v1871, %v1884
        %v1886 = vcombine.low %v1861, %v1869
        %v1887 = vcombine.high %v1861, %v1869
        %v1889 = vunpack.c.l.s4 1934713408
        %v1890 = vunpack.c.0.s8 %v1889
        %v1891 = vlaneseq
        %v1892 = vshrl.u32 %v1891, 7
        %v1893 = vsub.s32 %v1890, %v1892
        %v1894 = vrot.slane %v1886, %v1893
        %v1896 = vunpack.c.l.s4 1934713408
        %v1897 = vunpack.c.0.s8 %v1896
        %v1898 = vlaneseq
        %v1899 = vshrl.u32 %v1898, 7
        %v1900 = vsub.s32 %v1897, %v1899
        %v1901 = vrot.slane %v1887, %v1900
        %v1902 = vcombine.low %v1878, %v1894
        %v1903 = vcombine.high %v1878, %v1894
        %v1904 = vcombine.low %v1885, %v1901
        %v1905 = vcombine.high %v1885, %v1901
        %1907 = vrot.lane.b32.xlu0 %v1903, 8
        %v1908 = vpop.permute.xlu0 %1907
        %1911 = vrot.lane.b32.xlu0 %v1904, 16
        %v1912 = vpop.permute.xlu0 %1911
        %1915 = vrot.lane.b32.xlu0 %v1905, 24
        %v1916 = vpop.permute.xlu0 %1915
        %v1918 = vsel %vm1348, %v1902, %v1908
        %vm1919 = vcmask 130048
        %v1920 = vsel %vm1919, %v1918, %v1912
        %vm1921 = vcmask 195584
        %v1922 = vsel %vm1921, %v1920, %v1916
        %v1923 = vpack.c.bf16 %v1922, %v1922
        %v1924 = vld [vmem:[#allocation10] sm:$0xf]
        %v1925 = vld [vmem:[#allocation10 + $0x4] sm:$0xf]
        %v1926 = vld [vmem:[#allocation10 + $0x8] sm:$0xf]
        %v1927 = vld [vmem:[#allocation10 + $0xc] sm:$0xf]
        %v1928 = vld [vmem:[#allocation12] sm:$0x1]
        %v1930 = vlaneseq
        %v1931 = vshrl.u32 %v1930, 7
        %v1932 = vsub.s32 0, %v1931
        %v1933 = vrot.slane %v1928, %v1932
        %v1939 = vunpack.c.l.b16 %v1924
        %v1940 = vunpack.c.l.b16 %v1925
        %v1941 = vunpack.c.l.b16 %v1926
        %v1942 = vunpack.c.l.b16 %v1927
        %v1943 = vpack.c.b16 %v1940, %v1939
        %v1944 = vpack.c.b16 %v1942, %v1941
        %v1948 = vsel %vm1122, %v1923, 0
        %1950 = vmatprep.subr.bf16.mxu0 0
        %1951 = vmatpush1.bf16.msra.mxu0 %v1943
        %1952 = vmatprep.subr.bf16.mxu0 0
        %1953 = vmatpush1.bf16.msra.mxu0 %v1944
        %1954 = vmatprep.subr.bf16.mxu0 0
        %1955 = vmatpush1.bf16.msra.mxu0 0
        %1956 = vmatprep.subr.bf16.mxu0 0
        %1957 = vmatpush1.bf16.msra.mxu0 0
        %1958 = vmatprep.subr.bf16.mxu0 0
        %1959 = vmatpush1.bf16.msra.mxu0 0
        %1960 = vmatprep.subr.bf16.mxu0 0
        %1961 = vmatpush1.bf16.msra.mxu0 0
        %1962 = vmatprep.subr.bf16.mxu0 0
        %1963 = vmatpush1.bf16.msra.mxu0 0
        %1964 = vmatprep.subr.bf16.mxu0 0
        %1965 = vmatpush1.bf16.msra.mxu0 0
        %1966 = vmatprep.subr.bf16.mxu0 0
        %1967 = vmatpush1.bf16.msra.mxu0 0
        %1968 = vmatprep.subr.bf16.mxu0 0
        %1969 = vmatpush1.bf16.msra.mxu0 0
        %1970 = vmatprep.subr.bf16.mxu0 0
        %1971 = vmatpush1.bf16.msra.mxu0 0
        %1972 = vmatprep.subr.bf16.mxu0 0
        %1973 = vmatpush1.bf16.msra.mxu0 0
        %1974 = vmatprep.subr.bf16.mxu0 0
        %1975 = vmatpush1.bf16.msra.mxu0 0
        %1976 = vmatprep.subr.bf16.mxu0 0
        %1977 = vmatpush1.bf16.msra.mxu0 0
        %1978 = vmatprep.subr.bf16.mxu0 0
        %1979 = vmatpush1.bf16.msra.mxu0 0
        %1980 = vmatprep.subr.bf16.mxu0 0
        %1981 = vmatpush1.bf16.msra.mxu0 0
        %1982 = vmatprep.mubr.bf16.mxu0 0
        %1983 = vmatmul.mubr.bf16.gmra.mrb[0].mxu0 %v1948
        %v1984 = vpop.f32.mrb[0].mxu0
        %v1985 = vadd.f32 %v1933, %v1984
        %v1986 = vpop.f32.mrb[0].mxu0
        %v1987 = vpop.f32.mrb[0].mxu0
        %v1988 = vpop.f32.mrb[0].mxu0
        %1989 = vdwg.mxu0
        %v1990 = vadd.f32 %v1097, %v1985
        %v1991 = vld [vmem:[%s13] sm:$0x1]
        %v1992 = vld [vmem:[%s14] sm:$0x1]
        %v1993 = vsel %vm1122, %v1990, 0.0
        %1994 = vadd.xlane.f32.xlu0 %v1993
        %v1995 = vpop.xlane.xlu0 %1994
        %v1996 = vrcp.pop 32.0
        %v1997 = vmul.f32 %v1995, %v1996
        %v1998 = vsub.f32 %v1990, %v1997
        %v1999 = vmul.f32 %v1998, %v1998
        %v2000 = vsel %vm1122, %v1999, 0.0
        %2001 = vadd.xlane.f32.xlu0 %v2000
        %v2002 = vpop.xlane.xlu0 %2001
        %v2003 = vmul.f32 %v2002, %v1996
        %v2004 = vadd.f32 %v2003, 1e-05
        %v2005 = vrsqrt.pop %v2004
        %v2006 = vmul.f32 %v1998, %v2005
        %v2008 = vlaneseq
        %v2009 = vshrl.u32 %v2008, 7
        %v2010 = vsub.s32 0, %v2009
        %v2011 = vrot.slane %v1991, %v2010
        %v2013 = vmul.f32 %v2006, %v2011
        %v2015 = vlaneseq
        %v2016 = vshrl.u32 %v2015, 7
        %v2017 = vsub.s32 0, %v2016
        %v2018 = vrot.slane %v1992, %v2017
        %v2020 = vadd.f32 %v2013, %v2018
        %v2021 = vpack.c.bf16 %v2020, %v2020
        %v2022 = vld [vmem:[%s9] sm:$0xf]
        %v2023 = vld [vmem:[%s9 + $0x4] sm:$0xf]
        %v2024 = vld [vmem:[%s9 + $0x8] sm:$0xf]
        %v2025 = vld [vmem:[%s9 + $0xc] sm:$0xf]
        %v2026 = vld [vmem:[%s10] sm:$0x1]
        %v2028 = vlaneseq
        %v2029 = vshrl.u32 %v2028, 7
        %v2030 = vsub.s32 0, %v2029
        %v2031 = vrot.slane %v2026, %v2030
        %v2037 = vunpack.c.l.b16 %v2022
        %v2038 = vunpack.c.l.b16 %v2023
        %v2039 = vunpack.c.l.b16 %v2024
        %v2040 = vunpack.c.l.b16 %v2025
        %v2041 = vpack.c.b16 %v2038, %v2037
        %v2042 = vpack.c.b16 %v2040, %v2039
        %v2046 = vsel %vm1122, %v2021, 0
        %2048 = vmatprep.subr.bf16.mxu0 0
        %2049 = vmatpush1.bf16.msra.mxu0 %v2041
        %2050 = vmatprep.subr.bf16.mxu0 0
        %2051 = vmatpush1.bf16.msra.mxu0 %v2042
        %2052 = vmatprep.subr.bf16.mxu0 0
        %2053 = vmatpush1.bf16.msra.mxu0 0
        %2054 = vmatprep.subr.bf16.mxu0 0
        %2055 = vmatpush1.bf16.msra.mxu0 0
        %2056 = vmatprep.subr.bf16.mxu0 0
        %2057 = vmatpush1.bf16.msra.mxu0 0
        %2058 = vmatprep.subr.bf16.mxu0 0
        %2059 = vmatpush1.bf16.msra.mxu0 0
        %2060 = vmatprep.subr.bf16.mxu0 0
        %2061 = vmatpush1.bf16.msra.mxu0 0
        %2062 = vmatprep.subr.bf16.mxu0 0
        %2063 = vmatpush1.bf16.msra.mxu0 0
        %2064 = vmatprep.subr.bf16.mxu0 0
        %2065 = vmatpush1.bf16.msra.mxu0 0
        %2066 = vmatprep.subr.bf16.mxu0 0
        %2067 = vmatpush1.bf16.msra.mxu0 0
        %2068 = vmatprep.subr.bf16.mxu0 0
        %2069 = vmatpush1.bf16.msra.mxu0 0
        %2070 = vmatprep.subr.bf16.mxu0 0
        %2071 = vmatpush1.bf16.msra.mxu0 0
        %2072 = vmatprep.subr.bf16.mxu0 0
        %2073 = vmatpush1.bf16.msra.mxu0 0
        %2074 = vmatprep.subr.bf16.mxu0 0
        %2075 = vmatpush1.bf16.msra.mxu0 0
        %2076 = vmatprep.subr.bf16.mxu0 0
        %2077 = vmatpush1.bf16.msra.mxu0 0
        %2078 = vmatprep.subr.bf16.mxu0 0
        %2079 = vmatpush1.bf16.msra.mxu0 0
        %2080 = vmatprep.mubr.bf16.mxu0 0
        %2081 = vmatmul.mubr.bf16.gmra.mrb[0].mxu0 %v2046
        %v2082 = vpop.f32.mrb[0].mxu0
        %v2083 = vadd.f32 %v2031, %v2082
        %v2084 = vpop.f32.mrb[0].mxu0
        %v2085 = vpop.f32.mrb[0].mxu0
        %v2086 = vpop.f32.mrb[0].mxu0
        %2087 = vdwg.mxu0
        %v2088 = vmax.f32 %v2083, 0.0
        %v2089 = vpack.c.bf16 %v2088, %v2088
        %v2090 = vld [vmem:[%s11] sm:$0xf]
        %v2091 = vld [vmem:[%s11 + $0x4] sm:$0xf]
        %v2092 = vld [vmem:[%s11 + $0x8] sm:$0xf]
        %v2093 = vld [vmem:[%s11 + $0xc] sm:$0xf]
        %v2094 = vld [vmem:[%s11 + $0x10] sm:$0xf]
        %v2095 = vld [vmem:[%s11 + $0x14] sm:$0xf]
        %v2096 = vld [vmem:[%s11 + $0x18] sm:$0xf]
        %v2097 = vld [vmem:[%s11 + $0x1c] sm:$0xf]
        %v2098 = vld [vmem:[%s12] sm:$0x1]
        %v2100 = vlaneseq
        %v2101 = vshrl.u32 %v2100, 7
        %v2102 = vsub.s32 0, %v2101
        %v2103 = vrot.slane %v2098, %v2102
        %v2113 = vunpack.c.l.b16 %v2090
        %v2114 = vunpack.c.l.b16 %v2091
        %v2115 = vunpack.c.l.b16 %v2092
        %v2116 = vunpack.c.l.b16 %v2093
        %v2117 = vunpack.c.l.b16 %v2094
        %v2118 = vunpack.c.l.b16 %v2095
        %v2119 = vunpack.c.l.b16 %v2096
        %v2120 = vunpack.c.l.b16 %v2097
        %v2121 = vpack.c.b16 %v2114, %v2113
        %v2122 = vpack.c.b16 %v2116, %v2115
        %v2123 = vpack.c.b16 %v2118, %v2117
        %v2124 = vpack.c.b16 %v2120, %v2119
        %vm2129 = vcmask 523264
        %v2131 = vsel %vm2129, %v2089, 0
        %2133 = vmatprep.subr.bf16.mxu0 0
        %2134 = vmatpush1.bf16.msra.mxu0 %v2121
        %2135 = vmatprep.subr.bf16.mxu0 0
        %2136 = vmatpush1.bf16.msra.mxu0 %v2122
        %2137 = vmatprep.subr.bf16.mxu0 0
        %2138 = vmatpush1.bf16.msra.mxu0 %v2123
        %2139 = vmatprep.subr.bf16.mxu0 0
        %2140 = vmatpush1.bf16.msra.mxu0 %v2124
        %2141 = vmatprep.subr.bf16.mxu0 0
        %2142 = vmatpush1.bf16.msra.mxu0 0
        %2143 = vmatprep.subr.bf16.mxu0 0
        %2144 = vmatpush1.bf16.msra.mxu0 0
        %2145 = vmatprep.subr.bf16.mxu0 0
        %2146 = vmatpush1.bf16.msra.mxu0 0
        %2147 = vmatprep.subr.bf16.mxu0 0
        %2148 = vmatpush1.bf16.msra.mxu0 0
        %2149 = vmatprep.subr.bf16.mxu0 0
        %2150 = vmatpush1.bf16.msra.mxu0 0
        %2151 = vmatprep.subr.bf16.mxu0 0
        %2152 = vmatpush1.bf16.msra.mxu0 0
        %2153 = vmatprep.subr.bf16.mxu0 0
        %2154 = vmatpush1.bf16.msra.mxu0 0
        %2155 = vmatprep.subr.bf16.mxu0 0
        %2156 = vmatpush1.bf16.msra.mxu0 0
        %2157 = vmatprep.subr.bf16.mxu0 0
        %2158 = vmatpush1.bf16.msra.mxu0 0
        %2159 = vmatprep.subr.bf16.mxu0 0
        %2160 = vmatpush1.bf16.msra.mxu0 0
        %2161 = vmatprep.subr.bf16.mxu0 0
        %2162 = vmatpush1.bf16.msra.mxu0 0
        %2163 = vmatprep.subr.bf16.mxu0 0
        %2164 = vmatpush1.bf16.msra.mxu0 0
        %2165 = vmatprep.mubr.bf16.mxu0 0
        %2166 = vmatmul.mubr.bf16.gmra.mrb[0].mxu0 %v2131
        %v2167 = vpop.f32.mrb[0].mxu0
        %v2168 = vadd.f32 %v2103, %v2167
        %v2169 = vpop.f32.mrb[0].mxu0
        %v2170 = vpop.f32.mrb[0].mxu0
        %v2171 = vpop.f32.mrb[0].mxu0
        %2172 = vdwg.mxu0
        %v2173 = vadd.f32 %v2020, %v2168
        %v2174 = vld [vmem:[%s15] sm:$0x1]
        %v2175 = vld [vmem:[%s16] sm:$0x1]
        %v2176 = vsel %vm1122, %v2173, 0.0
        %2177 = vadd.xlane.f32.xlu0 %v2176
        %v2178 = vpop.xlane.xlu0 %2177
        %v2179 = vmul.f32 %v2178, %v1996
        %v2180 = vsub.f32 %v2173, %v2179
        %v2181 = vmul.f32 %v2180, %v2180
        %v2182 = vsel %vm1122, %v2181, 0.0
        %2183 = vadd.xlane.f32.xlu0 %v2182
        %v2184 = vpop.xlane.xlu0 %2183
        %v2185 = vmul.f32 %v2184, %v1996
        %v2186 = vadd.f32 %v2185, 1e-05
        %v2187 = vrsqrt.pop %v2186
        %v2188 = vmul.f32 %v2180, %v2187
        %v2190 = vlaneseq
        %v2191 = vshrl.u32 %v2190, 7
        %v2192 = vsub.s32 0, %v2191
        %v2193 = vrot.slane %v2174, %v2192
        %v2195 = vmul.f32 %v2188, %v2193
        %v2197 = vlaneseq
        %v2198 = vshrl.u32 %v2197, 7
        %v2199 = vsub.s32 0, %v2198
        %v2200 = vrot.slane %v2175, %v2199
        %v2202 = vadd.f32 %v2195, %v2200
        %2203 = vst.msk [vmem:[%s652] sm:$0xff] %vm1122, %v2202
        %s2204 = sand.u32 %s430, 1
        %s2205 = scalar_lea.sflag [#allocation6], %s2204
        %s2206 = sand.u32 %s430, 1
        %s2207 = smul.addr %s2206, 8
        %s2208 = scalar_lea.vmem [#allocation13], %s2207
        // Predicated region
        $region113: #{tpu_custom_call.1} parent=87 // pred_check
          %p2209 = pneg %p440
        $region114: #{tpu_custom_call.1} parent=87 // pred_check_branch
          %2211 = sbr.rel (%p2209) target = $region116
        $region115: #{tpu_custom_call.1} parent=87 // pred_region
          %s2213 = ssub.s32 128, 128
          %2214 = vsyncadd %s2205, %s2213
          %s2215 = sadd.s32 %s39, %s38
          %s2216 = smul.addr %s2215, 128
          %s2217 = scalar_lea.hbm %s17, %s2216
          %s2219 = sshll.u32 %s2208, 4
          %s2220 = int_to_ptr.vmem [resolvable:$true] %s2219
          %2222 = dma.vmem_to_hbm [thread:$0]  %s2220, 128, %s2217, %s2205
        $region116: #{tpu_custom_call.1} parent=87 // pred_fallthru
          _
      $region88: #{tpu_custom_call.1} parent=5 // pred_fallthru
        _
      %p2223 = scmp.le.s32.totalorder 2, %s29
      // Predicated region
      $region117: #{tpu_custom_call.1} parent=5 // pred_check
        %p2224 = pneg %p2223
      $region118: #{tpu_custom_call.1} parent=5 // pred_check_branch
        %2226 = sbr.rel (%p2224) target = $region120
      $region119: #{tpu_custom_call.1} parent=5 // pred_region
        %s2227 = ssub.s32 %s29, 2
        // Predicated region
        $region121: #{tpu_custom_call.1} parent=119 // pred_check
          %p2228 = pneg %p446
        $region122: #{tpu_custom_call.1} parent=119 // pred_check_branch
          %2230 = sbr.rel (%p2228) target = $region124
        $region123: #{tpu_custom_call.1} parent=119 // pred_region
          %s2231 = sand.u32 %s431, 1
          %s2232 = scalar_lea.sflag [#allocation6], %s2231
          %s2233 = sand.u32 %s431, 1
          %s2234 = smul.addr %s2233, 8
          %s2235 = scalar_lea.vmem [#allocation13], %s2234
          %2236 = dma.done %s2232, 128
        $region124: #{tpu_custom_call.1} parent=119 // pred_fallthru
          _
      $region120: #{tpu_custom_call.1} parent=5 // pred_fallthru
        _
    $region6: #{tpu_custom_call.1} parent=1 // loop_footer
      %s33 = sadd.s32 1, %s29
    $region7: #{tpu_custom_call.1} parent=1 // loop_footer_branch
      %28 = sbr.rel target = $region3
    $region8: #{tpu_custom_call.1} parent=1 // loop_exit
      _
    %2237 = vsyncpa [#allocation5], 1
    %s2238 = scalar_lea.sflag [#allocation5], 1
    %2239 = vsyncpa %s2238, 1
    %2240 = vsyncpa [#allocation8], 1
    %2241 = vsyncpa [#allocation11], 1
    %2242 = vsyncpa [#allocation6], 1
    %s2243 = scalar_lea.sflag [#allocation6], 1
    %2244 = vsyncpa %s2243, 1

// kernel: tpu_custom_call.1
$region0: #{tpu_custom_call.1}
  #allocation0 [shape = 'u32[]', space=smem, size = 0x4, offset = 0x4, fixed_abs, tag = 'smem constant byte address 0x4 - core index']
  #allocation1 [shape = 'u32[144,128]{1,0:T(1,128)}', space=vmem, size = 0x12000, scoped, tag = 'internal scratch']
  #allocation2 [shape = 'bf16[4,8,8]{2,1,0:T(8,128)(2,1)}', space=vmem, size = 0x2000, scoped, tag = 'scratch operand']
  #allocation3 [shape = 'bf16[4,8,8]{2,1,0:T(8,128)(2,1)}', space=vmem, size = 0x2000, scoped, tag = 'scratch operand']
  %s0 = inlined_call_operand.vmem [shape: f32[2,8,32], index: 0, kind: input, shape index: {}]
  %s1 = inlined_call_operand.vmem [shape: f32[2,8,32], index: 1, kind: input, shape index: {}]
  %s2 = inlined_call_operand.vmem [shape: f32[2,1,8], index: 2, kind: input, shape index: {}]
  %s3 = inlined_call_operand.vmem [shape: bf16[32,32], index: 3, kind: input, shape index: {}]
  %s4 = inlined_call_operand.hbm [shape: f32[1,32], index: 4, kind: input, shape index: {}]
  %s5 = inlined_call_operand.hbm [shape: bf16[32,64], index: 5, kind: input, shape index: {}]
  %s6 = inlined_call_operand.hbm [shape: f32[1,64], index: 6, kind: input, shape index: {}]
  %s7 = inlined_call_operand.hbm [shape: bf16[32,32], index: 7, kind: input, shape index: {}]
  %s8 = inlined_call_operand.hbm [shape: f32[1,32], index: 8, kind: input, shape index: {}]
  %s9 = inlined_call_operand.vmem [shape: bf16[32,64], index: 9, kind: input, shape index: {}]
  %s10 = inlined_call_operand.vmem [shape: f32[1,64], index: 10, kind: input, shape index: {}]
  %s11 = inlined_call_operand.vmem [shape: bf16[64,32], index: 11, kind: input, shape index: {}]
  %s12 = inlined_call_operand.vmem [shape: f32[1,32], index: 12, kind: input, shape index: {}]
  %s13 = inlined_call_operand.vmem [shape: f32[1,32], index: 13, kind: input, shape index: {}]
  %s14 = inlined_call_operand.vmem [shape: f32[1,32], index: 14, kind: input, shape index: {}]
  %s15 = inlined_call_operand.vmem [shape: f32[1,32], index: 15, kind: input, shape index: {}]
  %s16 = inlined_call_operand.vmem [shape: f32[1,32], index: 16, kind: input, shape index: {}]
  %s17 = inlined_call_operand.hbm [shape: f32[2,8,32], index: 17, kind: output, shape index: {}]
  %s18 = sld [smem:[#allocation0]]
  $region125: #{tpu_custom_call.1} parent=0
    _
  %s20 = ssub.s32 1, %s18
  %s21 = scalar_select 0, %s20, %s18
  $region1: #{tpu_custom_call.1} parent=0
    #allocation4 [shape = 'u8[512]{0}', space=vmem, size = 0x400, scoped, tag = 'input window, operand 4, single buffered']
    #allocation5 [shape = 's32[2]{0}', space=sflag, size = 0x8, scoped, tag = 'scoped memory for tpu_custom_call.1']
    #allocation6 [shape = 's32[2]{0}', space=sflag, size = 0x8, scoped, tag = 'scoped memory for tpu_custom_call.1']
    #allocation7 [shape = 'u8[8192]{0}', space=vmem, size = 0x2000, scoped, tag = 'input window, operand 5, single buffered']
    #allocation8 [shape = 's32[1]{0}', space=sflag, size = 0x4, scoped, tag = 'scoped memory for tpu_custom_call.1']
    #allocation9 [shape = 'u8[512]{0}', space=vmem, size = 0x400, scoped, tag = 'input window, operand 6, single buffered']
    #allocation10 [shape = 'u8[8192]{0}', space=vmem, size = 0x2000, scoped, tag = 'input window, operand 7, single buffered']
    #allocation11 [shape = 's32[1]{0}', space=sflag, size = 0x4, scoped, tag = 'scoped memory for tpu_custom_call.1']
    #allocation12 [shape = 'u8[512]{0}', space=vmem, size = 0x400, scoped, tag = 'input window, operand 8, single buffered']
    #allocation13 [shape = 'u8[8192]{0}', space=vmem, size = 0x2000, scoped, tag = 'output window, operand 0']
    %22 = vsyncpa [#allocation5], 0
    %23 = vsyncpa [#allocation8], 0
    %24 = vsyncpa [#allocation11], 0
    %25 = vsyncpa [#allocation6], 0
    %s26 = scalar_lea.sflag [#allocation6], 1
    %27 = vsyncpa %s26, 0
    loop: start=0, step=1, limit=4
    $region2: #{tpu_custom_call.1} parent=1 // loop_pre_header
      _
    $region3: #{tpu_custom_call.1} parent=1 // loop_header
      %s29 = sphi 0, %s33
      %p30 = scmp.ge.s32.totalorder %s29, 4
      %s36 = sphi 0, %s48
      %s37 = sphi 0, %s44
      %s38 = sphi 0, %s36
      %s39 = sphi 0, %s37
      %s40 = sphi 0, %s38
      %s41 = sphi 0, %s39
      %s51 = sphi 0, %s53
      %s54 = sphi 0, %s51
      %s55 = sphi 0, %s54
      %s71 = sphi 0, %s55
      %s79 = sphi 0, %s81
      %s82 = sphi 0, %s79
      %s83 = sphi 0, %s82
      %s99 = sphi 0, %s83
      %s105 = sphi 0, %s107
      %s108 = sphi 0, %s105
      %s109 = sphi 0, %s108
      %s125 = sphi 0, %s109
      %s129 = sphi 0, %s129
      %s131 = sphi 0, %s129
      %s132 = sphi 0, %s131
      %s146 = sphi 0, %s132
      %s150 = sphi 0, %s150
      %s152 = sphi 0, %s150
      %s153 = sphi 0, %s152
      %s167 = sphi 0, %s153
      %s171 = sphi 0, %s171
      %s173 = sphi 0, %s171
      %s174 = sphi 0, %s173
      %s188 = sphi 0, %s174
      %s192 = sphi 0, %s192
      %s194 = sphi 0, %s192
      %s195 = sphi 0, %s194
      %s209 = sphi 0, %s195
      %s213 = sphi 0, %s213
      %s215 = sphi 0, %s213
      %s216 = sphi 0, %s215
      %s230 = sphi 0, %s216
      %s234 = sphi 0, %s234
      %s236 = sphi 0, %s234
      %s237 = sphi 0, %s236
      %s251 = sphi 0, %s237
      %s255 = sphi 0, %s255
      %s257 = sphi 0, %s255
      %s258 = sphi 0, %s257
      %s272 = sphi 0, %s258
      %s276 = sphi 0, %s276
      %s278 = sphi 0, %s276
      %s279 = sphi 0, %s278
      %s293 = sphi 0, %s279
      %s297 = sphi 0, %s297
      %s299 = sphi 0, %s297
      %s300 = sphi 0, %s299
      %s314 = sphi 0, %s300
      %s318 = sphi 0, %s318
      %s320 = sphi 0, %s318
      %s321 = sphi 0, %s320
      %s335 = sphi 0, %s321
      %s339 = sphi 0, %s339
      %s341 = sphi 0, %s339
      %s342 = sphi 0, %s341
      %s356 = sphi 0, %s342
      %s360 = sphi 0, %s360
      %s362 = sphi 0, %s360
      %s363 = sphi 0, %s362
      %s377 = sphi 0, %s363
      %s381 = sphi 0, %s381
      %s383 = sphi 0, %s381
      %s384 = sphi 0, %s383
      %s398 = sphi 0, %s384
      %s402 = sphi 0, %s402
      %s404 = sphi 0, %s402
      %s405 = sphi 0, %s404
      %s419 = sphi 0, %s405
      %s427 = sphi 0, %s429
      %s430 = sphi 0, %s427
      %s431 = sphi 0, %s430
      %s447 = sphi 0, %s431
    $region4: #{tpu_custom_call.1} parent=1 // loop_header_branch
      %32 = sbr.rel (%p30) target = $region8
    $region5: #{tpu_custom_call.1} parent=1 // loop_body
      %s34 = ssub.s32 %s29, 1
      %s35 = ssub.s32 %s29, 2
      %s42 = sadd.s32 1, %s37
      %p43 = scmp.ge.s32.totalorder %s42, 1
      %s44 = scalar_select %p43, 0, %s42
      %s45 = sadd.s32 1, %s36
      %s46 = scalar_select %p43, %s45, %s36
      %p47 = scmp.ge.s32.totalorder %s46, 2
      %s48 = scalar_select %p47, 0, %s46
      %s49 = ssub.s32 %s36, %s48
      %p50 = scmp.eq.s32.totalorder %s49, 0
      %s52 = sadd.s32 %s51, 1
      %s53 = scalar_select %p50, %s51, %s52
      %p56 = pneg %p50
      %p57 = scmp.eq.s32.totalorder %s29, 1
      %p58 = por %p56, %p57
      %p59 = scmp.ne.s32.totalorder %s51, %s54
      %p60 = scmp.eq.s32.totalorder %s29, 0
      %p61 = por %p59, %p60
      %p62 = scmp.ne.s32.totalorder %s51, %s54
      %p63 = scmp.eq.s32.totalorder %s34, 1
      %p64 = por %p62, %p63
      %p65 = scmp.ne.s32.totalorder %s54, %s55
      %p66 = scmp.eq.s32.totalorder %s34, 0
      %p67 = por %p65, %p66
      %p68 = scmp.ne.s32.totalorder %s54, %s55
      %p69 = scmp.eq.s32.totalorder %s35, 1
      %p70 = por %p68, %p69
      %p72 = scmp.ne.s32.totalorder %s55, %s71
      %p73 = scmp.eq.s32.totalorder %s35, 0
      %p74 = por %p72, %p73
      %s75 = ssub.s32 %s36, %s48
      %s76 = ssub.s32 %s37, %s44
      %s77 = sor.u32 %s75, %s76
      %p78 = scmp.eq.s32.totalorder %s77, 0
      %s80 = sadd.s32 %s79, 1
      %s81 = scalar_select %p78, %s79, %s80
      %p84 = pneg %p78
      %p85 = scmp.eq.s32.totalorder %s29, 1
      %p86 = por %p84, %p85
      %p87 = scmp.ne.s32.totalorder %s79, %s82
      %p88 = scmp.eq.s32.totalorder %s29, 0
      %p89 = por %p87, %p88
      %p90 = scmp.ne.s32.totalorder %s79, %s82
      %p91 = scmp.eq.s32.totalorder %s34, 1
      %p92 = por %p90, %p91
      %p93 = scmp.ne.s32.totalorder %s82, %s83
      %p94 = scmp.eq.s32.totalorder %s34, 0
      %p95 = por %p93, %p94
      %p96 = scmp.ne.s32.totalorder %s82, %s83
      %p97 = scmp.eq.s32.totalorder %s35, 1
      %p98 = por %p96, %p97
      %p100 = scmp.ne.s32.totalorder %s83, %s99
      %p101 = scmp.eq.s32.totalorder %s35, 0
      %p102 = por %p100, %p101
      %s103 = ssub.s32 %s36, %s48
      %p104 = scmp.eq.s32.totalorder %s103, 0
      %s106 = sadd.s32 %s105, 1
      %s107 = scalar_select %p104, %s105, %s106
      %p110 = pneg %p104
      %p111 = scmp.eq.s32.totalorder %s29, 1
      %p112 = por %p110, %p111
      %p113 = scmp.ne.s32.totalorder %s105, %s108
      %p114 = scmp.eq.s32.totalorder %s29, 0
      %p115 = por %p113, %p114
      %p116 = scmp.ne.s32.totalorder %s105, %s108
      %p117 = scmp.eq.s32.totalorder %s34, 1
      %p118 = por %p116, %p117
      %p119 = scmp.ne.s32.totalorder %s108, %s109
      %p120 = scmp.eq.s32.totalorder %s34, 0
      %p121 = por %p119, %p120
      %p122 = scmp.ne.s32.totalorder %s108, %s109
      %p123 = scmp.eq.s32.totalorder %s35, 1
      %p124 = por %p122, %p123
      %p126 = scmp.ne.s32.totalorder %s109, %s125
      %p127 = scmp.eq.s32.totalorder %s35, 0
      %p128 = por %p126, %p127
      %s130 = sadd.s32 %s129, 1
      %p133 = scmp.eq.s32.totalorder %s29, 1
      %p134 = scmp.ne.s32.totalorder %s129, %s131
      %p135 = scmp.eq.s32.totalorder %s29, 0
      %p136 = por %p134, %p135
      %p137 = scmp.ne.s32.totalorder %s129, %s131
      %p138 = scmp.eq.s32.totalorder %s34, 1
      %p139 = por %p137, %p138
      %p140 = scmp.ne.s32.totalorder %s131, %s132
      %p141 = scmp.eq.s32.totalorder %s34, 0
      %p142 = por %p140, %p141
      %p143 = scmp.ne.s32.totalorder %s131, %s132
      %p144 = scmp.eq.s32.totalorder %s35, 1
      %p145 = por %p143, %p144
      %p147 = scmp.ne.s32.totalorder %s132, %s146
      %p148 = scmp.eq.s32.totalorder %s35, 0
      %p149 = por %p147, %p148
      %s151 = sadd.s32 %s150, 1
      %p154 = scmp.eq.s32.totalorder %s29, 1
      %p155 = scmp.ne.s32.totalorder %s150, %s152
      %p156 = scmp.eq.s32.totalorder %s29, 0
      %p157 = por %p155, %p156
      %p158 = scmp.ne.s32.totalorder %s150, %s152
      %p159 = scmp.eq.s32.totalorder %s34, 1
      %p160 = por %p158, %p159
      %p161 = scmp.ne.s32.totalorder %s152, %s153
      %p162 = scmp.eq.s32.totalorder %s34, 0
      %p163 = por %p161, %p162
      %p164 = scmp.ne.s32.totalorder %s152, %s153
      %p165 = scmp.eq.s32.totalorder %s35, 1
      %p166 = por %p164, %p165
      %p168 = scmp.ne.s32.totalorder %s153, %s167
      %p169 = scmp.eq.s32.totalorder %s35, 0
      %p170 = por %p168, %p169
      %s172 = sadd.s32 %s171, 1
      %p175 = scmp.eq.s32.totalorder %s29, 1
      %p176 = scmp.ne.s32.totalorder %s171, %s173
      %p177 = scmp.eq.s32.totalorder %s29, 0
      %p178 = por %p176, %p177
      %p179 = scmp.ne.s32.totalorder %s171, %s173
      %p180 = scmp.eq.s32.totalorder %s34, 1
      %p181 = por %p179, %p180
      %p182 = scmp.ne.s32.totalorder %s173, %s174
      %p183 = scmp.eq.s32.totalorder %s34, 0
      %p184 = por %p182, %p183
      %p185 = scmp.ne.s32.totalorder %s173, %s174
      %p186 = scmp.eq.s32.totalorder %s35, 1
      %p187 = por %p185, %p186
      %p189 = scmp.ne.s32.totalorder %s174, %s188
      %p190 = scmp.eq.s32.totalorder %s35, 0
      %p191 = por %p189, %p190
      %s193 = sadd.s32 %s192, 1
      %p196 = scmp.eq.s32.totalorder %s29, 1
      %p197 = scmp.ne.s32.totalorder %s192, %s194
      %p198 = scmp.eq.s32.totalorder %s29, 0
      %p199 = por %p197, %p198
      %p200 = scmp.ne.s32.totalorder %s192, %s194
      %p201 = scmp.eq.s32.totalorder %s34, 1
      %p202 = por %p200, %p201
      %p203 = scmp.ne.s32.totalorder %s194, %s195
      %p204 = scmp.eq.s32.totalorder %s34, 0
      %p205 = por %p203, %p204
      %p206 = scmp.ne.s32.totalorder %s194, %s195
      %p207 = scmp.eq.s32.totalorder %s35, 1
      %p208 = por %p206, %p207
      %p210 = scmp.ne.s32.totalorder %s195, %s209
      %p211 = scmp.eq.s32.totalorder %s35, 0
      %p212 = por %p210, %p211
      %s214 = sadd.s32 %s213, 1
      %p217 = scmp.eq.s32.totalorder %s29, 1
      %p218 = scmp.ne.s32.totalorder %s213, %s215
      %p219 = scmp.eq.s32.totalorder %s29, 0
      %p220 = por %p218, %p219
      %p221 = scmp.ne.s32.totalorder %s213, %s215
      %p222 = scmp.eq.s32.totalorder %s34, 1
      %p223 = por %p221, %p222
      %p224 = scmp.ne.s32.totalorder %s215, %s216
      %p225 = scmp.eq.s32.totalorder %s34, 0
      %p226 = por %p224, %p225
      %p227 = scmp.ne.s32.totalorder %s215, %s216
      %p228 = scmp.eq.s32.totalorder %s35, 1
      %p229 = por %p227, %p228
      %p231 = scmp.ne.s32.totalorder %s216, %s230
      %p232 = scmp.eq.s32.totalorder %s35, 0
      %p233 = por %p231, %p232
      %s235 = sadd.s32 %s234, 1
      %p238 = scmp.eq.s32.totalorder %s29, 1
      %p239 = scmp.ne.s32.totalorder %s234, %s236
      %p240 = scmp.eq.s32.totalorder %s29, 0
      %p241 = por %p239, %p240
      %p242 = scmp.ne.s32.totalorder %s234, %s236
      %p243 = scmp.eq.s32.totalorder %s34, 1
      %p244 = por %p242, %p243
      %p245 = scmp.ne.s32.totalorder %s236, %s237
      %p246 = scmp.eq.s32.totalorder %s34, 0
      %p247 = por %p245, %p246
      %p248 = scmp.ne.s32.totalorder %s236, %s237
      %p249 = scmp.eq.s32.totalorder %s35, 1
      %p250 = por %p248, %p249
      %p252 = scmp.ne.s32.totalorder %s237, %s251
      %p253 = scmp.eq.s32.totalorder %s35, 0
      %p254 = por %p252, %p253
      %s256 = sadd.s32 %s255, 1
      %p259 = scmp.eq.s32.totalorder %s29, 1
      %p260 = scmp.ne.s32.totalorder %s255, %s257
      %p261 = scmp.eq.s32.totalorder %s29, 0
      %p262 = por %p260, %p261
      %p263 = scmp.ne.s32.totalorder %s255, %s257
      %p264 = scmp.eq.s32.totalorder %s34, 1
      %p265 = por %p263, %p264
      %p266 = scmp.ne.s32.totalorder %s257, %s258
      %p267 = scmp.eq.s32.totalorder %s34, 0
      %p268 = por %p266, %p267
      %p269 = scmp.ne.s32.totalorder %s257, %s258
      %p270 = scmp.eq.s32.totalorder %s35, 1
      %p271 = por %p269, %p270
      %p273 = scmp.ne.s32.totalorder %s258, %s272
      %p274 = scmp.eq.s32.totalorder %s35, 0
      %p275 = por %p273, %p274
      %s277 = sadd.s32 %s276, 1
      %p280 = scmp.eq.s32.totalorder %s29, 1
      %p281 = scmp.ne.s32.totalorder %s276, %s278
      %p282 = scmp.eq.s32.totalorder %s29, 0
      %p283 = por %p281, %p282
      %p284 = scmp.ne.s32.totalorder %s276, %s278
      %p285 = scmp.eq.s32.totalorder %s34, 1
      %p286 = por %p284, %p285
      %p287 = scmp.ne.s32.totalorder %s278, %s279
      %p288 = scmp.eq.s32.totalorder %s34, 0
      %p289 = por %p287, %p288
      %p290 = scmp.ne.s32.totalorder %s278, %s279
      %p291 = scmp.eq.s32.totalorder %s35, 1
      %p292 = por %p290, %p291
      %p294 = scmp.ne.s32.totalorder %s279, %s293
      %p295 = scmp.eq.s32.totalorder %s35, 0
      %p296 = por %p294, %p295
      %s298 = sadd.s32 %s297, 1
      %p301 = scmp.eq.s32.totalorder %s29, 1
      %p302 = scmp.ne.s32.totalorder %s297, %s299
      %p303 = scmp.eq.s32.totalorder %s29, 0
      %p304 = por %p302, %p303
      %p305 = scmp.ne.s32.totalorder %s297, %s299
      %p306 = scmp.eq.s32.totalorder %s34, 1
      %p307 = por %p305, %p306
      %p308 = scmp.ne.s32.totalorder %s299, %s300
      %p309 = scmp.eq.s32.totalorder %s34, 0
      %p310 = por %p308, %p309
      %p311 = scmp.ne.s32.totalorder %s299, %s300
      %p312 = scmp.eq.s32.totalorder %s35, 1
      %p313 = por %p311, %p312
      %p315 = scmp.ne.s32.totalorder %s300, %s314
      %p316 = scmp.eq.s32.totalorder %s35, 0
      %p317 = por %p315, %p316
      %s319 = sadd.s32 %s318, 1
      %p322 = scmp.eq.s32.totalorder %s29, 1
      %p323 = scmp.ne.s32.totalorder %s318, %s320
      %p324 = scmp.eq.s32.totalorder %s29, 0
      %p325 = por %p323, %p324
      %p326 = scmp.ne.s32.totalorder %s318, %s320
      %p327 = scmp.eq.s32.totalorder %s34, 1
      %p328 = por %p326, %p327
      %p329 = scmp.ne.s32.totalorder %s320, %s321
      %p330 = scmp.eq.s32.totalorder %s34, 0
      %p331 = por %p329, %p330
      %p332 = scmp.ne.s32.totalorder %s320, %s321
      %p333 = scmp.eq.s32.totalorder %s35, 1
      %p334 = por %p332, %p333
      %p336 = scmp.ne.s32.totalorder %s321, %s335
      %p337 = scmp.eq.s32.totalorder %s35, 0
      %p338 = por %p336, %p337
      %s340 = sadd.s32 %s339, 1
      %p343 = scmp.eq.s32.totalorder %s29, 1
      %p344 = scmp.ne.s32.totalorder %s339, %s341
      %p345 = scmp.eq.s32.totalorder %s29, 0
      %p346 = por %p344, %p345
      %p347 = scmp.ne.s32.totalorder %s339, %s341
      %p348 = scmp.eq.s32.totalorder %s34, 1
      %p349 = por %p347, %p348
      %p350 = scmp.ne.s32.totalorder %s341, %s342
      %p351 = scmp.eq.s32.totalorder %s34, 0
      %p352 = por %p350, %p351
      %p353 = scmp.ne.s32.totalorder %s341, %s342
      %p354 = scmp.eq.s32.totalorder %s35, 1
      %p355 = por %p353, %p354
      %p357 = scmp.ne.s32.totalorder %s342, %s356
      %p358 = scmp.eq.s32.totalorder %s35, 0
      %p359 = por %p357, %p358
      %s361 = sadd.s32 %s360, 1
      %p364 = scmp.eq.s32.totalorder %s29, 1
      %p365 = scmp.ne.s32.totalorder %s360, %s362
      %p366 = scmp.eq.s32.totalorder %s29, 0
      %p367 = por %p365, %p366
      %p368 = scmp.ne.s32.totalorder %s360, %s362
      %p369 = scmp.eq.s32.totalorder %s34, 1
      %p370 = por %p368, %p369
      %p371 = scmp.ne.s32.totalorder %s362, %s363
      %p372 = scmp.eq.s32.totalorder %s34, 0
      %p373 = por %p371, %p372
      %p374 = scmp.ne.s32.totalorder %s362, %s363
      %p375 = scmp.eq.s32.totalorder %s35, 1
      %p376 = por %p374, %p375
      %p378 = scmp.ne.s32.totalorder %s363, %s377
      %p379 = scmp.eq.s32.totalorder %s35, 0
      %p380 = por %p378, %p379
      %s382 = sadd.s32 %s381, 1
      %p385 = scmp.eq.s32.totalorder %s29, 1
      %p386 = scmp.ne.s32.totalorder %s381, %s383
      %p387 = scmp.eq.s32.totalorder %s29, 0
      %p388 = por %p386, %p387
      %p389 = scmp.ne.s32.totalorder %s381, %s383
      %p390 = scmp.eq.s32.totalorder %s34, 1
      %p391 = por %p389, %p390
      %p392 = scmp.ne.s32.totalorder %s383, %s384
      %p393 = scmp.eq.s32.totalorder %s34, 0
      %p394 = por %p392, %p393
      %p395 = scmp.ne.s32.totalorder %s383, %s384
      %p396 = scmp.eq.s32.totalorder %s35, 1
      %p397 = por %p395, %p396
      %p399 = scmp.ne.s32.totalorder %s384, %s398
      %p400 = scmp.eq.s32.totalorder %s35, 0
      %p401 = por %p399, %p400
      %s403 = sadd.s32 %s402, 1
      %p406 = scmp.eq.s32.totalorder %s29, 1
      %p407 = scmp.ne.s32.totalorder %s402, %s404
      %p408 = scmp.eq.s32.totalorder %s29, 0
      %p409 = por %p407, %p408
      %p410 = scmp.ne.s32.totalorder %s402, %s404
      %p411 = scmp.eq.s32.totalorder %s34, 1
      %p412 = por %p410, %p411
      %p413 = scmp.ne.s32.totalorder %s404, %s405
      %p414 = scmp.eq.s32.totalorder %s34, 0
      %p415 = por %p413, %p414
      %p416 = scmp.ne.s32.totalorder %s404, %s405
      %p417 = scmp.eq.s32.totalorder %s35, 1
      %p418 = por %p416, %p417
      %p420 = scmp.ne.s32.totalorder %s405, %s419
      %p421 = scmp.eq.s32.totalorder %s35, 0
      %p422 = por %p420, %p421
      %s423 = ssub.s32 %s36, %s48
      %s424 = ssub.s32 %s37, %s44
      %s425 = sor.u32 %s423, %s424
      %p426 = scmp.eq.s32.totalorder %s425, 0
      %s428 = sadd.s32 %s427, 1
      %s429 = scalar_select %p426, %s427, %s428
      %p432 = pneg %p426
      %p433 = scmp.eq.s32.totalorder %s29, 1
      %p434 = por %p432, %p433
      %p435 = scmp.ne.s32.totalorder %s427, %s430
      %p436 = scmp.eq.s32.totalorder %s29, 0
      %p437 = por %p435, %p436
      %p438 = scmp.ne.s32.totalorder %s427, %s430
      %p439 = scmp.eq.s32.totalorder %s34, 1
      %p440 = por %p438, %p439
      %p441 = scmp.ne.s32.totalorder %s430, %s431
      %p442 = scmp.eq.s32.totalorder %s34, 0
      %p443 = por %p441, %p442
      %p444 = scmp.ne.s32.totalorder %s430, %s431
      %p445 = scmp.eq.s32.totalorder %s35, 1
      %p446 = por %p444, %p445
      %p448 = scmp.ne.s32.totalorder %s431, %s447
      %p449 = scmp.eq.s32.totalorder %s35, 0
      %p450 = por %p448, %p449
      %p451 = scmp.le.s32.totalorder 1, %s29
      %p452 = scmp.lt.s32.totalorder %s29, 3
      %p453 = pnand %p451, %p452
      %p454 = pneg %p453
      // Predicated region
      $region9: #{tpu_custom_call.1} parent=5 // pred_check
        _
      $region10: #{tpu_custom_call.1} parent=5 // pred_check_branch
        %456 = sbr.rel (%p453) target = $region12
      $region11: #{tpu_custom_call.1} parent=5 // pred_region
        %s457 = ssub.s32 %s29, 1
        // Predicated region
        $region13: #{tpu_custom_call.1} parent=11 // pred_check
          %p458 = pneg %p142
        $region14: #{tpu_custom_call.1} parent=11 // pred_check_branch
          %460 = sbr.rel (%p458) target = $region16
        $region15: #{tpu_custom_call.1} parent=11 // pred_region
          _
        $region16: #{tpu_custom_call.1} parent=11 // pred_fallthru
          _
        // Predicated region
        $region17: #{tpu_custom_call.1} parent=11 // pred_check
          %p461 = pneg %p163
        $region18: #{tpu_custom_call.1} parent=11 // pred_check_branch
          %463 = sbr.rel (%p461) target = $region20
        $region19: #{tpu_custom_call.1} parent=11 // pred_region
          %s465 = ssub.s32 16, 16
          %466 = vsyncadd [#allocation5], %s465
          %s468 = sshll.u32 [#allocation4], 4
          %s469 = int_to_ptr.vmem [resolvable:$true] %s468
          %471 = dma.hbm_to_vmem [thread:$0]  %s4, 16, %s469, [#allocation5]
        $region20: #{tpu_custom_call.1} parent=11 // pred_fallthru
          _
        // Predicated region
        $region21: #{tpu_custom_call.1} parent=11 // pred_check
          %p472 = pneg %p184
        $region22: #{tpu_custom_call.1} parent=11 // pred_check_branch
          %474 = sbr.rel (%p472) target = $region24
        $region23: #{tpu_custom_call.1} parent=11 // pred_region
          %s476 = ssub.s32 256, 256
          %477 = vsyncadd [#allocation8], %s476
          %s478 = sshll.u32 [#allocation7], 4
          %s479 = int_to_ptr.vmem [resolvable:$true] %s478
          %484 = dma.hbm_to_vmem [thread:$0]  %s5, 256, %s479, [#allocation8], 64, 64, 4
        $region24: #{tpu_custom_call.1} parent=11 // pred_fallthru
          _
        // Predicated region
        $region25: #{tpu_custom_call.1} parent=11 // pred_check
          %p485 = pneg %p205
        $region26: #{tpu_custom_call.1} parent=11 // pred_check_branch
          %487 = sbr.rel (%p485) target = $region28
        $region27: #{tpu_custom_call.1} parent=11 // pred_region
          %s489 = ssub.s32 16, 16
          %490 = vsyncadd [#allocation8], %s489
          %s492 = sshll.u32 [#allocation9], 4
          %s493 = int_to_ptr.vmem [resolvable:$true] %s492
          %495 = dma.hbm_to_vmem [thread:$0]  %s6, 16, %s493, [#allocation8]
        $region28: #{tpu_custom_call.1} parent=11 // pred_fallthru
          _
        // Predicated region
        $region29: #{tpu_custom_call.1} parent=11 // pred_check
          %p496 = pneg %p226
        $region30: #{tpu_custom_call.1} parent=11 // pred_check_branch
          %498 = sbr.rel (%p496) target = $region32
        $region31: #{tpu_custom_call.1} parent=11 // pred_region
          %s500 = ssub.s32 256, 256
          %501 = vsyncadd [#allocation11], %s500
          %s502 = sshll.u32 [#allocation10], 4
          %s503 = int_to_ptr.vmem [resolvable:$true] %s502
          %508 = dma.hbm_to_vmem [thread:$0]  %s7, 256, %s503, [#allocation11], 64, 64, 4
        $region32: #{tpu_custom_call.1} parent=11 // pred_fallthru
          _
        // Predicated region
        $region33: #{tpu_custom_call.1} parent=11 // pred_check
          %p509 = pneg %p247
        $region34: #{tpu_custom_call.1} parent=11 // pred_check_branch
          %511 = sbr.rel (%p509) target = $region36
        $region35: #{tpu_custom_call.1} parent=11 // pred_region
          %s513 = ssub.s32 16, 16
          %514 = vsyncadd [#allocation11], %s513
          %s516 = sshll.u32 [#allocation12], 4
          %s517 = int_to_ptr.vmem [resolvable:$true] %s516
          %519 = dma.hbm_to_vmem [thread:$0]  %s8, 16, %s517, [#allocation11]
        $region36: #{tpu_custom_call.1} parent=11 // pred_fallthru
          _
        // Predicated region
        $region37: #{tpu_custom_call.1} parent=11 // pred_check
          %p520 = pneg %p268
        $region38: #{tpu_custom_call.1} parent=11 // pred_check_branch
          %522 = sbr.rel (%p520) target = $region40
        $region39: #{tpu_custom_call.1} parent=11 // pred_region
          _
        $region40: #{tpu_custom_call.1} parent=11 // pred_fallthru
          _
        // Predicated region
        $region41: #{tpu_custom_call.1} parent=11 // pred_check
          %p523 = pneg %p289
        $region42: #{tpu_custom_call.1} parent=11 // pred_check_branch
          %525 = sbr.rel (%p523) target = $region44
        $region43: #{tpu_custom_call.1} parent=11 // pred_region
          _
        $region44: #{tpu_custom_call.1} parent=11 // pred_fallthru
          _
        // Predicated region
        $region45: #{tpu_custom_call.1} parent=11 // pred_check
          %p526 = pneg %p310
        $region46: #{tpu_custom_call.1} parent=11 // pred_check_branch
          %528 = sbr.rel (%p526) target = $region48
        $region47: #{tpu_custom_call.1} parent=11 // pred_region
          _
        $region48: #{tpu_custom_call.1} parent=11 // pred_fallthru
          _
        // Predicated region
        $region49: #{tpu_custom_call.1} parent=11 // pred_check
          %p529 = pneg %p331
        $region50: #{tpu_custom_call.1} parent=11 // pred_check_branch
          %531 = sbr.rel (%p529) target = $region52
        $region51: #{tpu_custom_call.1} parent=11 // pred_region
          _
        $region52: #{tpu_custom_call.1} parent=11 // pred_fallthru
          _
        // Predicated region
        $region53: #{tpu_custom_call.1} parent=11 // pred_check
          %p532 = pneg %p352
        $region54: #{tpu_custom_call.1} parent=11 // pred_check_branch
          %534 = sbr.rel (%p532) target = $region56
        $region55: #{tpu_custom_call.1} parent=11 // pred_region
          _
        $region56: #{tpu_custom_call.1} parent=11 // pred_fallthru
          _
        // Predicated region
        $region57: #{tpu_custom_call.1} parent=11 // pred_check
          %p535 = pneg %p373
        $region58: #{tpu_custom_call.1} parent=11 // pred_check_branch
          %537 = sbr.rel (%p535) target = $region60
        $region59: #{tpu_custom_call.1} parent=11 // pred_region
          _
        $region60: #{tpu_custom_call.1} parent=11 // pred_fallthru
          _
        // Predicated region
        $region61: #{tpu_custom_call.1} parent=11 // pred_check
          %p538 = pneg %p394
        $region62: #{tpu_custom_call.1} parent=11 // pred_check_branch
          %540 = sbr.rel (%p538) target = $region64
        $region63: #{tpu_custom_call.1} parent=11 // pred_region
          _
        $region64: #{tpu_custom_call.1} parent=11 // pred_fallthru
          _
        // Predicated region
        $region65: #{tpu_custom_call.1} parent=11 // pred_check
          %p541 = pneg %p415
        $region66: #{tpu_custom_call.1} parent=11 // pred_check_branch
          %543 = sbr.rel (%p541) target = $region68
        $region67: #{tpu_custom_call.1} parent=11 // pred_region
          _
        $region68: #{tpu_custom_call.1} parent=11 // pred_fallthru
          _
      $region12: #{tpu_custom_call.1} parent=5 // pred_fallthru
        _
      %p544 = scmp.lt.s32.totalorder %s29, 2
      // Predicated region
      $region69: #{tpu_custom_call.1} parent=5 // pred_check
        %p545 = pneg %p544
      $region70: #{tpu_custom_call.1} parent=5 // pred_check_branch
        %547 = sbr.rel (%p545) target = $region72
      $region71: #{tpu_custom_call.1} parent=5 // pred_region
        // Predicated region
        $region73: #{tpu_custom_call.1} parent=71 // pred_check
          %p548 = pneg %p61
        $region74: #{tpu_custom_call.1} parent=71 // pred_check_branch
          %550 = sbr.rel (%p548) target = $region76
        $region75: #{tpu_custom_call.1} parent=71 // pred_region
          %p551 = scmp.lt.s32.totalorder %s36, 1
          %s552 = scalar_select %p551, %s36, 1
          %s553 = smul.addr %s552, 8
          %s554 = scalar_lea.vmem %s0, %s553
        $region76: #{tpu_custom_call.1} parent=71 // pred_fallthru
          _
        // Predicated region
        $region77: #{tpu_custom_call.1} parent=71 // pred_check
          %p555 = pneg %p89
        $region78: #{tpu_custom_call.1} parent=71 // pred_check_branch
          %557 = sbr.rel (%p555) target = $region80
        $region79: #{tpu_custom_call.1} parent=71 // pred_region
          %p558 = scmp.lt.s32.totalorder %s36, 1
          %s559 = scalar_select %p558, %s36, 1
          %p560 = scmp.lt.s32.totalorder %s37, 0
          %s561 = scalar_select %p560, %s37, 0
          %s562 = sadd.s32 %s561, %s559
          %s563 = smul.addr %s562, 8
          %s564 = scalar_lea.vmem %s1, %s563
        $region80: #{tpu_custom_call.1} parent=71 // pred_fallthru
          _
        // Predicated region
        $region81: #{tpu_custom_call.1} parent=71 // pred_check
          %p565 = pneg %p115
        $region82: #{tpu_custom_call.1} parent=71 // pred_check_branch
          %567 = sbr.rel (%p565) target = $region84
        $region83: #{tpu_custom_call.1} parent=71 // pred_region
          %p568 = scmp.lt.s32.totalorder %s36, 1
          %s569 = scalar_select %p568, %s36, 1
          %s570 = scalar_lea.vmem %s2, %s569
        $region84: #{tpu_custom_call.1} parent=71 // pred_fallthru
          _
      $region72: #{tpu_custom_call.1} parent=5 // pred_fallthru
        _
      %p571 = scmp.le.s32.totalorder 1, %s29
      %p572 = scmp.lt.s32.totalorder %s29, 3
      %p573 = pnand %p571, %p572
      %p574 = pneg %p573
      // Predicated region
      $region85: #{tpu_custom_call.1} parent=5 // pred_check
        _
      $region86: #{tpu_custom_call.1} parent=5 // pred_check_branch
        %576 = sbr.rel (%p573) target = $region88
      $region87: #{tpu_custom_call.1} parent=5 // pred_region
        %s577 = ssub.s32 %s29, 1
        // Predicated region
        $region89: #{tpu_custom_call.1} parent=87 // pred_check
          %p578 = pneg %p163
        $region90: #{tpu_custom_call.1} parent=87 // pred_check_branch
          %580 = sbr.rel (%p578) target = $region92
        $region91: #{tpu_custom_call.1} parent=87 // pred_region
          %581 = dma.done [#allocation5], 16
        $region92: #{tpu_custom_call.1} parent=87 // pred_fallthru
          _
        // Predicated region
        $region93: #{tpu_custom_call.1} parent=87 // pred_check
          %p582 = pneg %p184
        $region94: #{tpu_custom_call.1} parent=87 // pred_check_branch
          %584 = sbr.rel (%p582) target = $region96
        $region95: #{tpu_custom_call.1} parent=87 // pred_region
          %585 = dma.done [#allocation8], 256
        $region96: #{tpu_custom_call.1} parent=87 // pred_fallthru
          _
        // Predicated region
        $region97: #{tpu_custom_call.1} parent=87 // pred_check
          %p586 = pneg %p205
        $region98: #{tpu_custom_call.1} parent=87 // pred_check_branch
          %588 = sbr.rel (%p586) target = $region100
        $region99: #{tpu_custom_call.1} parent=87 // pred_region
          %589 = dma.done [#allocation8], 16
        $region100: #{tpu_custom_call.1} parent=87 // pred_fallthru
          _
        // Predicated region
        $region101: #{tpu_custom_call.1} parent=87 // pred_check
          %p590 = pneg %p226
        $region102: #{tpu_custom_call.1} parent=87 // pred_check_branch
          %592 = sbr.rel (%p590) target = $region104
        $region103: #{tpu_custom_call.1} parent=87 // pred_region
          %593 = dma.done [#allocation11], 256
        $region104: #{tpu_custom_call.1} parent=87 // pred_fallthru
          _
        // Predicated region
        $region105: #{tpu_custom_call.1} parent=87 // pred_check
          %p594 = pneg %p247
        $region106: #{tpu_custom_call.1} parent=87 // pred_check_branch
          %596 = sbr.rel (%p594) target = $region108
        $region107: #{tpu_custom_call.1} parent=87 // pred_region
          %597 = dma.done [#allocation11], 16
        $region108: #{tpu_custom_call.1} parent=87 // pred_fallthru
          _
        %p598 = scmp.lt.s32.totalorder %s38, 1
        %s599 = scalar_select %p598, %s38, 1
        %s600 = smul.addr %s599, 8
        %s601 = scalar_lea.vmem %s0, %s600
        %p602 = pneg %p67
        %p603 = pneg %p64
        %p604 = scmp.lt.s32.totalorder %s38, 1
        %s605 = scalar_select %p604, %s38, 1
        %p606 = scmp.lt.s32.totalorder %s39, 0
        %s607 = scalar_select %p606, %s39, 0
        %s608 = sadd.s32 %s607, %s605
        %s609 = smul.addr %s608, 8
        %s610 = scalar_lea.vmem %s1, %s609
        %p611 = pneg %p95
        %p612 = pneg %p92
        %p613 = scmp.lt.s32.totalorder %s38, 1
        %s614 = scalar_select %p613, %s38, 1
        %s615 = scalar_lea.vmem %s2, %s614
        %p616 = pneg %p121
        %p617 = pneg %p118
        %p618 = pneg %p142
        %p619 = pneg %p139
        %p620 = pneg %p163
        %p621 = pneg %p160
        %p622 = pneg %p184
        %p623 = pneg %p181
        %p624 = pneg %p205
        %p625 = pneg %p202
        %p626 = pneg %p226
        %p627 = pneg %p223
        %p628 = pneg %p247
        %p629 = pneg %p244
        %p630 = pneg %p268
        %p631 = pneg %p265
        %p632 = pneg %p289
        %p633 = pneg %p286
        %p634 = pneg %p310
        %p635 = pneg %p307
        %p636 = pneg %p331
        %p637 = pneg %p328
        %p638 = pneg %p352
        %p639 = pneg %p349
        %p640 = pneg %p373
        %p641 = pneg %p370
        %p642 = pneg %p394
        %p643 = pneg %p391
        %p644 = pneg %p415
        %p645 = pneg %p412
        %p646 = pneg %p443
        %p647 = pneg %p440
        %s648 = sand.u32 %s430, 1
        %s649 = scalar_lea.sflag [#allocation6], %s648
        %s650 = sand.u32 %s430, 1
        %s651 = smul.addr %s650, 8
        %s652 = scalar_lea.vmem [#allocation13], %s651
        %p653 = scmp.lt.s32.totalorder %s38, 1
        %s654 = scalar_select %p653, %s38, 1
        %s655 = smul.addr %s654, 8
        %s656 = scalar_lea.vmem %s0, %s655
        %p657 = scmp.lt.s32.totalorder %s38, 1
        %s658 = scalar_select %p657, %s38, 1
        %p659 = scmp.lt.s32.totalorder %s39, 0
        %s660 = scalar_select %p659, %s39, 0
        %s661 = sadd.s32 %s660, %s658
        %s662 = smul.addr %s661, 8
        %s663 = scalar_lea.vmem %s1, %s662
        %p664 = scmp.lt.s32.totalorder %s38, 1
        %s665 = scalar_select %p664, %s38, 1
        %s666 = scalar_lea.vmem %s2, %s665
        %p668 = scmp.eq.s32.totalorder %s39, 0
        // Predicated region
        $region109: #{tpu_custom_call.1} parent=87 // pred_check
          %p669 = pneg %p668
        $region110: #{tpu_custom_call.1} parent=87 // pred_check_branch
          %671 = sbr.rel (%p669) target = $region112
        $region111: #{tpu_custom_call.1} parent=87 // pred_region
          %v672 = vld [vmem:[%s656] sm:$0xff]
          %v673 = vpack.c.bf16 %v672, %v672
          %v674 = vld [vmem:[#allocation7] sm:$0xf]
          %v675 = vld [vmem:[#allocation7 + $0x4] sm:$0xf]
          %v676 = vld [vmem:[#allocation7 + $0x8] sm:$0xf]
          %v677 = vld [vmem:[#allocation7 + $0xc] sm:$0xf]
          %v678 = vld [vmem:[#allocation9] sm:$0x1]
          %v680 = vlaneseq
          %v681 = vshrl.u32 %v680, 7
          %v682 = vsub.s32 0, %v681
          %v683 = vrot.slane %v678, %v682
          %v689 = vunpack.c.l.b16 %v674
          %v690 = vunpack.c.l.b16 %v675
          %v691 = vunpack.c.l.b16 %v676
          %v692 = vunpack.c.l.b16 %v677
          %v693 = vpack.c.b16 %v690, %v689
          %v694 = vpack.c.b16 %v692, %v691
          %vm697 = vcmask 261120
          %v699 = vsel %vm697, %v673, 0
          %701 = vmatprep.subr.bf16.mxu0 0
          %702 = vmatpush1.bf16.msra.mxu0 %v693
          %703 = vmatprep.subr.bf16.mxu0 0
          %704 = vmatpush1.bf16.msra.mxu0 %v694
          %705 = vmatprep.subr.bf16.mxu0 0
          %706 = vmatpush1.bf16.msra.mxu0 0
          %707 = vmatprep.subr.bf16.mxu0 0
          %708 = vmatpush1.bf16.msra.mxu0 0
          %709 = vmatprep.subr.bf16.mxu0 0
          %710 = vmatpush1.bf16.msra.mxu0 0
          %711 = vmatprep.subr.bf16.mxu0 0
          %712 = vmatpush1.bf16.msra.mxu0 0
          %713 = vmatprep.subr.bf16.mxu0 0
          %714 = vmatpush1.bf16.msra.mxu0 0
          %715 = vmatprep.subr.bf16.mxu0 0
          %716 = vmatpush1.bf16.msra.mxu0 0
          %717 = vmatprep.subr.bf16.mxu0 0
          %718 = vmatpush1.bf16.msra.mxu0 0
          %719 = vmatprep.subr.bf16.mxu0 0
          %720 = vmatpush1.bf16.msra.mxu0 0
          %721 = vmatprep.subr.bf16.mxu0 0
          %722 = vmatpush1.bf16.msra.mxu0 0
          %723 = vmatprep.subr.bf16.mxu0 0
          %724 = vmatpush1.bf16.msra.mxu0 0
          %725 = vmatprep.subr.bf16.mxu0 0
          %726 = vmatpush1.bf16.msra.mxu0 0
          %727 = vmatprep.subr.bf16.mxu0 0
          %728 = vmatpush1.bf16.msra.mxu0 0
          %729 = vmatprep.subr.bf16.mxu0 0
          %730 = vmatpush1.bf16.msra.mxu0 0
          %731 = vmatprep.subr.bf16.mxu0 0
          %732 = vmatpush1.bf16.msra.mxu0 0
          %733 = vmatprep.mubr.bf16.mxu0 0
          %734 = vmatmul.mubr.bf16.gmra.mrb[0].mxu0 %v699
          %v735 = vpop.f32.mrb[0].mxu0
          %v736 = vadd.f32 %v683, %v735
          %v737 = vpop.f32.mrb[0].mxu0
          %v738 = vpop.f32.mrb[0].mxu0
          %v739 = vpop.f32.mrb[0].mxu0
          %740 = vdwg.mxu0
          %v741 = vpack.c.bf16 %v736, %v736
          %743 = vrot.lane.b32.xlu0 %v741, 120
          %v744 = vpop.permute.xlu0 %743
          %745 = vrot.lane.b32.xlu0 %v741, 112
          %v746 = vpop.permute.xlu0 %745
          %747 = vrot.lane.b32.xlu0 %v741, 104
          %v748 = vpop.permute.xlu0 %747
          %v750 = vunpack.c.l.s4 1983009808
          %v751 = vunpack.c.0.s8 %v750
          %v752 = vlaneseq
          %v753 = vshrl.u32 %v752, 7
          %v754 = vsub.s32 %v751, %v753
          %v755 = vrot.slane %v741, %v754
          %v758 = vunpack.c.l.s4 1983009808
          %v759 = vunpack.c.0.s8 %v758
          %v760 = vlaneseq
          %v761 = vshrl.u32 %v760, 7
          %v762 = vsub.s32 %v759, %v761
          %v763 = vrot.slane %v746, %v762
          %v764 = vcombine.low %v755, %v763
          %v765 = vcombine.high %v755, %v763
          %v767 = vunpack.c.l.s4 1934713408
          %v768 = vunpack.c.0.s8 %v767
          %v769 = vlaneseq
          %v770 = vshrl.u32 %v769, 7
          %v771 = vsub.s32 %v768, %v770
          %v772 = vrot.slane %v764, %v771
          %v774 = vunpack.c.l.s4 1934713408
          %v775 = vunpack.c.0.s8 %v774
          %v776 = vlaneseq
          %v777 = vshrl.u32 %v776, 7
          %v778 = vsub.s32 %v775, %v777
          %v779 = vrot.slane %v765, %v778
          %v780 = vcombine.high %v772, 0
          %v781 = vcombine.high %v779, 0
          %v784 = vunpack.c.l.s4 1983009808
          %v785 = vunpack.c.0.s8 %v784
          %v786 = vlaneseq
          %v787 = vshrl.u32 %v786, 7
          %v788 = vsub.s32 %v785, %v787
          %v789 = vrot.slane %v744, %v788
          %v792 = vunpack.c.l.s4 1983009808
          %v793 = vunpack.c.0.s8 %v792
          %v794 = vlaneseq
          %v795 = vshrl.u32 %v794, 7
          %v796 = vsub.s32 %v793, %v795
          %v797 = vrot.slane %v748, %v796
          %v798 = vcombine.low %v789, %v797
          %v799 = vcombine.high %v789, %v797
          %v801 = vunpack.c.l.s4 1934713408
          %v802 = vunpack.c.0.s8 %v801
          %v803 = vlaneseq
          %v804 = vshrl.u32 %v803, 7
          %v805 = vsub.s32 %v802, %v804
          %v806 = vrot.slane %v798, %v805
          %v808 = vunpack.c.l.s4 1934713408
          %v809 = vunpack.c.0.s8 %v808
          %v810 = vlaneseq
          %v811 = vshrl.u32 %v810, 7
          %v812 = vsub.s32 %v809, %v811
          %v813 = vrot.slane %v799, %v812
          %v814 = vcombine.high %v806, 0
          %v815 = vcombine.high %v813, 0
          %v818 = vpack.i.b16 %v806, %v772
          %v820 = vshrl.u32 %v772, 16
          %v821 = vshrl.u32 %v806, 16
          %v822 = vpack.i.b16 %v821, %v820
          %v826 = vpack.i.b16 %v814, %v780
          %v828 = vshrl.u32 %v780, 16
          %v829 = vshrl.u32 %v814, 16
          %v830 = vpack.i.b16 %v829, %v828
          %v834 = vpack.i.b16 %v813, %v779
          %v836 = vshrl.u32 %v779, 16
          %v837 = vshrl.u32 %v813, 16
          %v838 = vpack.i.b16 %v837, %v836
          %v842 = vpack.i.b16 %v815, %v781
          %v844 = vshrl.u32 %v781, 16
          %v845 = vshrl.u32 %v815, 16
          %v846 = vpack.i.b16 %v845, %v844
          %v848 = vcombine.low %v818, %v834
          %v850 = vunpack.c.l.s4 1983009808
          %v851 = vunpack.c.0.s8 %v850
          %v852 = vlaneseq
          %v853 = vshrl.u32 %v852, 7
          %v854 = vsub.s32 %v851, %v853
          %v855 = vrot.slane %v848, %v854
          %v856 = vcombine.low %v826, %v842
          %v858 = vunpack.c.l.s4 1983009808
          %v859 = vunpack.c.0.s8 %v858
          %v860 = vlaneseq
          %v861 = vshrl.u32 %v860, 7
          %v862 = vsub.s32 %v859, %v861
          %v863 = vrot.slane %v856, %v862
          %v864 = vcombine.low %v855, %v863
          %v866 = vunpack.c.l.s4 1934713408
          %v867 = vunpack.c.0.s8 %v866
          %v868 = vlaneseq
          %v869 = vshrl.u32 %v868, 7
          %v870 = vsub.s32 %v867, %v869
          %v871 = vrot.slane %v864, %v870
          %v872 = vcombine.high %v871, 0
          %v873 = vcombine.low %v822, %v838
          %v875 = vunpack.c.l.s4 1983009808
          %v876 = vunpack.c.0.s8 %v875
          %v877 = vlaneseq
          %v878 = vshrl.u32 %v877, 7
          %v879 = vsub.s32 %v876, %v878
          %v880 = vrot.slane %v873, %v879
          %v881 = vcombine.low %v830, %v846
          %v883 = vunpack.c.l.s4 1983009808
          %v884 = vunpack.c.0.s8 %v883
          %v885 = vlaneseq
          %v886 = vshrl.u32 %v885, 7
          %v887 = vsub.s32 %v884, %v886
          %v888 = vrot.slane %v881, %v887
          %v889 = vcombine.low %v880, %v888
          %v891 = vunpack.c.l.s4 1934713408
          %v892 = vunpack.c.0.s8 %v891
          %v893 = vlaneseq
          %v894 = vshrl.u32 %v893, 7
          %v895 = vsub.s32 %v892, %v894
          %v896 = vrot.slane %v889, %v895
          %v897 = vcombine.high %v896, 0
          %v900 = vpack.i.b16 %v896, %v871
          %v902 = vshrl.u32 %v871, 16
          %v903 = vshrl.u32 %v896, 16
          %v904 = vpack.i.b16 %v903, %v902
          %v908 = vpack.i.b16 %v897, %v872
          %v910 = vshrl.u32 %v872, 16
          %v911 = vshrl.u32 %v897, 16
          %v912 = vpack.i.b16 %v911, %v910
          %vm914 = vcmask 60416
          %915 = vst.msk [vmem:[#allocation2] sm:$0xf] %vm914, %v900
          %916 = vst.msk [vmem:[#allocation2 + $0x4] sm:$0xf] %vm914, %v904
          %917 = vst.msk [vmem:[#allocation2 + $0x8] sm:$0xf] %vm914, %v908
          %918 = vst.msk [vmem:[#allocation2 + $0xc] sm:$0xf] %vm914, %v912
          %919 = vrot.lane.b32.xlu0 %v741, 96
          %v920 = vpop.permute.xlu0 %919
          %921 = vrot.lane.b32.xlu0 %v744, 96
          %v922 = vpop.permute.xlu0 %921
          %923 = vrot.lane.b32.xlu0 %v746, 96
          %v924 = vpop.permute.xlu0 %923
          %925 = vrot.lane.b32.xlu0 %v748, 96
          %v926 = vpop.permute.xlu0 %925
          %v929 = vunpack.c.l.s4 1983009808
          %v930 = vunpack.c.0.s8 %v929
          %v931 = vlaneseq
          %v932 = vshrl.u32 %v931, 7
          %v933 = vsub.s32 %v930, %v932
          %v934 = vrot.slane %v920, %v933
          %v937 = vunpack.c.l.s4 1983009808
          %v938 = vunpack.c.0.s8 %v937
          %v939 = vlaneseq
          %v940 = vshrl.u32 %v939, 7
          %v941 = vsub.s32 %v938, %v940
          %v942 = vrot.slane %v924, %v941
          %v943 = vcombine.low %v934, %v942
          %v944 = vcombine.high %v934, %v942
          %v946 = vunpack.c.l.s4 1934713408
          %v947 = vunpack.c.0.s8 %v946
          %v948 = vlaneseq
          %v949 = vshrl.u32 %v948, 7
          %v950 = vsub.s32 %v947, %v949
          %v951 = vrot.slane %v943, %v950
          %v953 = vunpack.c.l.s4 1934713408
          %v954 = vunpack.c.0.s8 %v953
          %v955 = vlaneseq
          %v956 = vshrl.u32 %v955, 7
          %v957 = vsub.s32 %v954, %v956
          %v958 = vrot.slane %v944, %v957
          %v959 = vcombine.high %v951, 0
          %v960 = vcombine.high %v958, 0
          %v963 = vunpack.c.l.s4 1983009808
          %v964 = vunpack.c.0.s8 %v963
          %v965 = vlaneseq
          %v966 = vshrl.u32 %v965, 7
          %v967 = vsub.s32 %v964, %v966
          %v968 = vrot.slane %v922, %v967
          %v971 = vunpack.c.l.s4 1983009808
          %v972 = vunpack.c.0.s8 %v971
          %v973 = vlaneseq
          %v974 = vshrl.u32 %v973, 7
          %v975 = vsub.s32 %v972, %v974
          %v976 = vrot.slane %v926, %v975
          %v977 = vcombine.low %v968, %v976
          %v978 = vcombine.high %v968, %v976
          %v980 = vunpack.c.l.s4 1934713408
          %v981 = vunpack.c.0.s8 %v980
          %v982 = vlaneseq
          %v983 = vshrl.u32 %v982, 7
          %v984 = vsub.s32 %v981, %v983
          %v985 = vrot.slane %v977, %v984
          %v987 = vunpack.c.l.s4 1934713408
          %v988 = vunpack.c.0.s8 %v987
          %v989 = vlaneseq
          %v990 = vshrl.u32 %v989, 7
          %v991 = vsub.s32 %v988, %v990
          %v992 = vrot.slane %v978, %v991
          %v993 = vcombine.high %v985, 0
          %v994 = vcombine.high %v992, 0
          %v997 = vpack.i.b16 %v985, %v951
          %v999 = vshrl.u32 %v951, 16
          %v1000 = vshrl.u32 %v985, 16
          %v1001 = vpack.i.b16 %v1000, %v999
          %v1005 = vpack.i.b16 %v993, %v959
          %v1007 = vshrl.u32 %v959, 16
          %v1008 = vshrl.u32 %v993, 16
          %v1009 = vpack.i.b16 %v1008, %v1007
          %v1013 = vpack.i.b16 %v992, %v958
          %v1015 = vshrl.u32 %v958, 16
          %v1016 = vshrl.u32 %v992, 16
          %v1017 = vpack.i.b16 %v1016, %v1015
          %v1021 = vpack.i.b16 %v994, %v960
          %v1023 = vshrl.u32 %v960, 16
          %v1024 = vshrl.u32 %v994, 16
          %v1025 = vpack.i.b16 %v1024, %v1023
          %v1027 = vcombine.low %v997, %v1013
          %v1029 = vunpack.c.l.s4 1983009808
          %v1030 = vunpack.c.0.s8 %v1029
          %v1031 = vlaneseq
          %v1032 = vshrl.u32 %v1031, 7
          %v1033 = vsub.s32 %v1030, %v1032
          %v1034 = vrot.slane %v1027, %v1033
          %v1035 = vcombine.low %v1005, %v1021
          %v1037 = vunpack.c.l.s4 1983009808
          %v1038 = vunpack.c.0.s8 %v1037
          %v1039 = vlaneseq
          %v1040 = vshrl.u32 %v1039, 7
          %v1041 = vsub.s32 %v1038, %v1040
          %v1042 = vrot.slane %v1035, %v1041
          %v1043 = vcombine.low %v1034, %v1042
          %v1045 = vunpack.c.l.s4 1934713408
          %v1046 = vunpack.c.0.s8 %v1045
          %v1047 = vlaneseq
          %v1048 = vshrl.u32 %v1047, 7
          %v1049 = vsub.s32 %v1046, %v1048
          %v1050 = vrot.slane %v1043, %v1049
          %v1051 = vcombine.high %v1050, 0
          %v1052 = vcombine.low %v1001, %v1017
          %v1054 = vunpack.c.l.s4 1983009808
          %v1055 = vunpack.c.0.s8 %v1054
          %v1056 = vlaneseq
          %v1057 = vshrl.u32 %v1056, 7
          %v1058 = vsub.s32 %v1055, %v1057
          %v1059 = vrot.slane %v1052, %v1058
          %v1060 = vcombine.low %v1009, %v1025
          %v1062 = vunpack.c.l.s4 1983009808
          %v1063 = vunpack.c.0.s8 %v1062
          %v1064 = vlaneseq
          %v1065 = vshrl.u32 %v1064, 7
          %v1066 = vsub.s32 %v1063, %v1065
          %v1067 = vrot.slane %v1060, %v1066
          %v1068 = vcombine.low %v1059, %v1067
          %v1070 = vunpack.c.l.s4 1934713408
          %v1071 = vunpack.c.0.s8 %v1070
          %v1072 = vlaneseq
          %v1073 = vshrl.u32 %v1072, 7
          %v1074 = vsub.s32 %v1071, %v1073
          %v1075 = vrot.slane %v1068, %v1074
          %v1076 = vcombine.high %v1075, 0
          %v1079 = vpack.i.b16 %v1075, %v1050
          %v1081 = vshrl.u32 %v1050, 16
          %v1082 = vshrl.u32 %v1075, 16
          %v1083 = vpack.i.b16 %v1082, %v1081
          %v1087 = vpack.i.b16 %v1076, %v1051
          %v1089 = vshrl.u32 %v1051, 16
          %v1090 = vshrl.u32 %v1076, 16
          %v1091 = vpack.i.b16 %v1090, %v1089
          %1093 = vst.msk [vmem:[#allocation3] sm:$0xf] %vm914, %v1079
          %1094 = vst.msk [vmem:[#allocation3 + $0x4] sm:$0xf] %vm914, %v1083
          %1095 = vst.msk [vmem:[#allocation3 + $0x8] sm:$0xf] %vm914, %v1087
          %1096 = vst.msk [vmem:[#allocation3 + $0xc] sm:$0xf] %vm914, %v1091
        $region112: #{tpu_custom_call.1} parent=87 // pred_fallthru
          _
        %v1097 = vld [vmem:[%s663] sm:$0xff]
        %v1098 = vpack.c.bf16 %v1097, %v1097
        %v1099 = vld [vmem:[%s3] sm:$0xf]
        %v1100 = vld [vmem:[%s3 + $0x4] sm:$0xf]
        %v1101 = vld [vmem:[%s3 + $0x8] sm:$0xf]
        %v1102 = vld [vmem:[%s3 + $0xc] sm:$0xf]
        %v1103 = vld [vmem:[#allocation4] sm:$0x1]
        %v1105 = vlaneseq
        %v1106 = vshrl.u32 %v1105, 7
        %v1107 = vsub.s32 0, %v1106
        %v1108 = vrot.slane %v1103, %v1107
        %v1114 = vunpack.c.l.b16 %v1099
        %v1115 = vunpack.c.l.b16 %v1100
        %v1116 = vunpack.c.l.b16 %v1101
        %v1117 = vunpack.c.l.b16 %v1102
        %v1118 = vpack.c.b16 %v1115, %v1114
        %v1119 = vpack.c.b16 %v1117, %v1116
        %vm1122 = vcmask 261120
        %v1124 = vsel %vm1122, %v1098, 0
        %1126 = vmatprep.subr.bf16.mxu0 0
        %1127 = vmatpush1.bf16.msra.mxu0 %v1118
        %1128 = vmatprep.subr.bf16.mxu0 0
        %1129 = vmatpush1.bf16.msra.mxu0 %v1119
        %1130 = vmatprep.subr.bf16.mxu0 0
        %1131 = vmatpush1.bf16.msra.mxu0 0
        %1132 = vmatprep.subr.bf16.mxu0 0
        %1133 = vmatpush1.bf16.msra.mxu0 0
        %1134 = vmatprep.subr.bf16.mxu0 0
        %1135 = vmatpush1.bf16.msra.mxu0 0
        %1136 = vmatprep.subr.bf16.mxu0 0
        %1137 = vmatpush1.bf16.msra.mxu0 0
        %1138 = vmatprep.subr.bf16.mxu0 0
        %1139 = vmatpush1.bf16.msra.mxu0 0
        %1140 = vmatprep.subr.bf16.mxu0 0
        %1141 = vmatpush1.bf16.msra.mxu0 0
        %1142 = vmatprep.subr.bf16.mxu0 0
        %1143 = vmatpush1.bf16.msra.mxu0 0
        %1144 = vmatprep.subr.bf16.mxu0 0
        %1145 = vmatpush1.bf16.msra.mxu0 0
        %1146 = vmatprep.subr.bf16.mxu0 0
        %1147 = vmatpush1.bf16.msra.mxu0 0
        %1148 = vmatprep.subr.bf16.mxu0 0
        %1149 = vmatpush1.bf16.msra.mxu0 0
        %1150 = vmatprep.subr.bf16.mxu0 0
        %1151 = vmatpush1.bf16.msra.mxu0 0
        %1152 = vmatprep.subr.bf16.mxu0 0
        %1153 = vmatpush1.bf16.msra.mxu0 0
        %1154 = vmatprep.subr.bf16.mxu0 0
        %1155 = vmatpush1.bf16.msra.mxu0 0
        %1156 = vmatprep.subr.bf16.mxu0 0
        %1157 = vmatpush1.bf16.msra.mxu0 0
        %1158 = vmatprep.mubr.bf16.mxu0 0
        %1159 = vmatmul.mubr.bf16.gmra.mrb[0].mxu0 %v1124
        %v1160 = vpop.f32.mrb[0].mxu0
        %v1161 = vadd.f32 %v1108, %v1160
        %v1162 = vpop.f32.mrb[0].mxu0
        %v1163 = vpop.f32.mrb[0].mxu0
        %v1164 = vpop.f32.mrb[0].mxu0
        %1165 = vdwg.mxu0
        %v1166 = vpack.c.bf16 %v1161, %v1161
        %1168 = vrot.lane.b32.xlu0 %v1166, 120
        %v1169 = vpop.permute.xlu0 %1168
        %1170 = vrot.lane.b32.xlu0 %v1166, 112
        %v1171 = vpop.permute.xlu0 %1170
        %1172 = vrot.lane.b32.xlu0 %v1166, 104
        %v1173 = vpop.permute.xlu0 %1172
        %v1175 = vunpack.c.l.s4 1983009808
        %v1176 = vunpack.c.0.s8 %v1175
        %v1177 = vlaneseq
        %v1178 = vshrl.u32 %v1177, 7
        %v1179 = vsub.s32 %v1176, %v1178
        %v1180 = vrot.slane %v1166, %v1179
        %v1183 = vunpack.c.l.s4 1983009808
        %v1184 = vunpack.c.0.s8 %v1183
        %v1185 = vlaneseq
        %v1186 = vshrl.u32 %v1185, 7
        %v1187 = vsub.s32 %v1184, %v1186
        %v1188 = vrot.slane %v1171, %v1187
        %v1189 = vcombine.low %v1180, %v1188
        %v1190 = vcombine.high %v1180, %v1188
        %v1192 = vunpack.c.l.s4 1934713408
        %v1193 = vunpack.c.0.s8 %v1192
        %v1194 = vlaneseq
        %v1195 = vshrl.u32 %v1194, 7
        %v1196 = vsub.s32 %v1193, %v1195
        %v1197 = vrot.slane %v1189, %v1196
        %v1199 = vunpack.c.l.s4 1934713408
        %v1200 = vunpack.c.0.s8 %v1199
        %v1201 = vlaneseq
        %v1202 = vshrl.u32 %v1201, 7
        %v1203 = vsub.s32 %v1200, %v1202
        %v1204 = vrot.slane %v1190, %v1203
        %v1205 = vcombine.high %v1197, 0
        %v1206 = vcombine.high %v1204, 0
        %v1209 = vunpack.c.l.s4 1983009808
        %v1210 = vunpack.c.0.s8 %v1209
        %v1211 = vlaneseq
        %v1212 = vshrl.u32 %v1211, 7
        %v1213 = vsub.s32 %v1210, %v1212
        %v1214 = vrot.slane %v1169, %v1213
        %v1217 = vunpack.c.l.s4 1983009808
        %v1218 = vunpack.c.0.s8 %v1217
        %v1219 = vlaneseq
        %v1220 = vshrl.u32 %v1219, 7
        %v1221 = vsub.s32 %v1218, %v1220
        %v1222 = vrot.slane %v1173, %v1221
        %v1223 = vcombine.low %v1214, %v1222
        %v1224 = vcombine.high %v1214, %v1222
        %v1226 = vunpack.c.l.s4 1934713408
        %v1227 = vunpack.c.0.s8 %v1226
        %v1228 = vlaneseq
        %v1229 = vshrl.u32 %v1228, 7
        %v1230 = vsub.s32 %v1227, %v1229
        %v1231 = vrot.slane %v1223, %v1230
        %v1233 = vunpack.c.l.s4 1934713408
        %v1234 = vunpack.c.0.s8 %v1233
        %v1235 = vlaneseq
        %v1236 = vshrl.u32 %v1235, 7
        %v1237 = vsub.s32 %v1234, %v1236
        %v1238 = vrot.slane %v1224, %v1237
        %v1239 = vcombine.high %v1231, 0
        %v1240 = vcombine.high %v1238, 0
        %v1243 = vpack.i.b16 %v1231, %v1197
        %v1245 = vshrl.u32 %v1197, 16
        %v1246 = vshrl.u32 %v1231, 16
        %v1247 = vpack.i.b16 %v1246, %v1245
        %v1251 = vpack.i.b16 %v1239, %v1205
        %v1253 = vshrl.u32 %v1205, 16
        %v1254 = vshrl.u32 %v1239, 16
        %v1255 = vpack.i.b16 %v1254, %v1253
        %v1259 = vpack.i.b16 %v1238, %v1204
        %v1261 = vshrl.u32 %v1204, 16
        %v1262 = vshrl.u32 %v1238, 16
        %v1263 = vpack.i.b16 %v1262, %v1261
        %v1267 = vpack.i.b16 %v1240, %v1206
        %v1269 = vshrl.u32 %v1206, 16
        %v1270 = vshrl.u32 %v1240, 16
        %v1271 = vpack.i.b16 %v1270, %v1269
        %v1273 = vcombine.low %v1243, %v1259
        %v1275 = vunpack.c.l.s4 1983009808
        %v1276 = vunpack.c.0.s8 %v1275
        %v1277 = vlaneseq
        %v1278 = vshrl.u32 %v1277, 7
        %v1279 = vsub.s32 %v1276, %v1278
        %v1280 = vrot.slane %v1273, %v1279
        %v1281 = vcombine.low %v1251, %v1267
        %v1283 = vunpack.c.l.s4 1983009808
        %v1284 = vunpack.c.0.s8 %v1283
        %v1285 = vlaneseq
        %v1286 = vshrl.u32 %v1285, 7
        %v1287 = vsub.s32 %v1284, %v1286
        %v1288 = vrot.slane %v1281, %v1287
        %v1289 = vcombine.low %v1280, %v1288
        %v1291 = vunpack.c.l.s4 1934713408
        %v1292 = vunpack.c.0.s8 %v1291
        %v1293 = vlaneseq
        %v1294 = vshrl.u32 %v1293, 7
        %v1295 = vsub.s32 %v1292, %v1294
        %v1296 = vrot.slane %v1289, %v1295
        %v1297 = vcombine.high %v1296, 0
        %v1298 = vcombine.low %v1247, %v1263
        %v1300 = vunpack.c.l.s4 1983009808
        %v1301 = vunpack.c.0.s8 %v1300
        %v1302 = vlaneseq
        %v1303 = vshrl.u32 %v1302, 7
        %v1304 = vsub.s32 %v1301, %v1303
        %v1305 = vrot.slane %v1298, %v1304
        %v1306 = vcombine.low %v1255, %v1271
        %v1308 = vunpack.c.l.s4 1983009808
        %v1309 = vunpack.c.0.s8 %v1308
        %v1310 = vlaneseq
        %v1311 = vshrl.u32 %v1310, 7
        %v1312 = vsub.s32 %v1309, %v1311
        %v1313 = vrot.slane %v1306, %v1312
        %v1314 = vcombine.low %v1305, %v1313
        %v1316 = vunpack.c.l.s4 1934713408
        %v1317 = vunpack.c.0.s8 %v1316
        %v1318 = vlaneseq
        %v1319 = vshrl.u32 %v1318, 7
        %v1320 = vsub.s32 %v1317, %v1319
        %v1321 = vrot.slane %v1314, %v1320
        %v1322 = vcombine.high %v1321, 0
        %v1325 = vpack.i.b16 %v1321, %v1296
        %v1326 = vshrl.u32 %v1296, 16
        %v1327 = vshrl.u32 %v1321, 16
        %v1328 = vpack.i.b16 %v1327, %v1326
        %v1331 = vpack.i.b16 %v1322, %v1297
        %v1332 = vshrl.u32 %v1297, 16
        %v1333 = vshrl.u32 %v1322, 16
        %v1334 = vpack.i.b16 %v1333, %v1332
        %v1335 = vld [vmem:[#allocation2] sm:$0xf]
        %v1336 = vld [vmem:[#allocation2 + $0x4] sm:$0xf]
        %v1337 = vld [vmem:[#allocation2 + $0x8] sm:$0xf]
        %v1338 = vld [vmem:[#allocation2 + $0xc] sm:$0xf]
        %v1339 = vld [vmem:[%s666] sm:$0x1]
        %vm1340 = vcmp.gt.f32.partialorder %v1339, 0.0
        %v1341 = vsel %vm1340, 0.0, -1e+09
        %v1343 = vlaneseq
        %v1344 = vshrl.u32 %v1343, 7
        %v1345 = vsub.s32 0, %v1344
        %v1346 = vrot.slane %v1341, %v1345
        %vm1348 = vcmask 64512
        %v1350 = vsel %vm1348, %v1325, 0
        %v1353 = vsel %vm1348, %v1335, 0
        %1355 = vmatprep.subr.bf16.mxu0 0
        %1356 = vmatpush1.bf16.xpose.msra.mxu0 %v1353
        %1357 = vmatprep.subr.bf16.mxu0 0
        %1358 = vmatpush1.bf16.xpose.msra.mxu0 0
        %1359 = vmatprep.subr.bf16.mxu0 0
        %1360 = vmatpush1.bf16.xpose.msra.mxu0 0
        %1361 = vmatprep.subr.bf16.mxu0 0
        %1362 = vmatpush1.bf16.xpose.msra.mxu0 0
        %1363 = vmatprep.subr.bf16.mxu0 0
        %1364 = vmatpush1.bf16.xpose.msra.mxu0 0
        %1365 = vmatprep.subr.bf16.mxu0 0
        %1366 = vmatpush1.bf16.xpose.msra.mxu0 0
        %1367 = vmatprep.subr.bf16.mxu0 0
        %1368 = vmatpush1.bf16.xpose.msra.mxu0 0
        %1369 = vmatprep.subr.bf16.mxu0 0
        %1370 = vmatpush1.bf16.xpose.msra.mxu0 0
        %1371 = vmatprep.subr.bf16.mxu0 0
        %1372 = vmatpush1.bf16.xpose.msra.mxu0 0
        %1373 = vmatprep.subr.bf16.mxu0 0
        %1374 = vmatpush1.bf16.xpose.msra.mxu0 0
        %1375 = vmatprep.subr.bf16.mxu0 0
        %1376 = vmatpush1.bf16.xpose.msra.mxu0 0
        %1377 = vmatprep.subr.bf16.mxu0 0
        %1378 = vmatpush1.bf16.xpose.msra.mxu0 0
        %1379 = vmatprep.subr.bf16.mxu0 0
        %1380 = vmatpush1.bf16.xpose.msra.mxu0 0
        %1381 = vmatprep.subr.bf16.mxu0 0
        %1382 = vmatpush1.bf16.xpose.msra.mxu0 0
        %1383 = vmatprep.subr.bf16.mxu0 0
        %1384 = vmatpush1.bf16.xpose.msra.mxu0 0
        %1385 = vmatprep.subr.bf16.mxu0 0
        %1386 = vmatpush1.bf16.xpose.msra.mxu0 0
        %1387 = vmatprep.mubr.bf16.mxu0 0
        %1388 = vmatmul.mubr.bf16.gmra.mrb[0].mxu0 %v1350
        %v1389 = vpop.f32.mrb[0].mxu0
        %v1390 = vadd.f32 %v1346, %v1389
        %v1391 = vpop.f32.mrb[0].mxu0
        %v1392 = vpop.f32.mrb[0].mxu0
        %v1393 = vpop.f32.mrb[0].mxu0
        %1394 = vdwg.mxu0
        %v1396 = vsel %vm1348, %v1328, 0
        %v1399 = vsel %vm1348, %v1336, 0
        %1401 = vmatprep.subr.bf16.mxu0 0
        %1402 = vmatpush1.bf16.xpose.msra.mxu0 %v1399
        %1403 = vmatprep.subr.bf16.mxu0 0
        %1404 = vmatpush1.bf16.xpose.msra.mxu0 0
        %1405 = vmatprep.subr.bf16.mxu0 0
        %1406 = vmatpush1.bf16.xpose.msra.mxu0 0
        %1407 = vmatprep.subr.bf16.mxu0 0
        %1408 = vmatpush1.bf16.xpose.msra.mxu0 0
        %1409 = vmatprep.subr.bf16.mxu0 0
        %1410 = vmatpush1.bf16.xpose.msra.mxu0 0
        %1411 = vmatprep.subr.bf16.mxu0 0
        %1412 = vmatpush1.bf16.xpose.msra.mxu0 0
        %1413 = vmatprep.subr.bf16.mxu0 0
        %1414 = vmatpush1.bf16.xpose.msra.mxu0 0
        %1415 = vmatprep.subr.bf16.mxu0 0
        %1416 = vmatpush1.bf16.xpose.msra.mxu0 0
        %1417 = vmatprep.subr.bf16.mxu0 0
        %1418 = vmatpush1.bf16.xpose.msra.mxu0 0
        %1419 = vmatprep.subr.bf16.mxu0 0
        %1420 = vmatpush1.bf16.xpose.msra.mxu0 0
        %1421 = vmatprep.subr.bf16.mxu0 0
        %1422 = vmatpush1.bf16.xpose.msra.mxu0 0
        %1423 = vmatprep.subr.bf16.mxu0 0
        %1424 = vmatpush1.bf16.xpose.msra.mxu0 0
        %1425 = vmatprep.subr.bf16.mxu0 0
        %1426 = vmatpush1.bf16.xpose.msra.mxu0 0
        %1427 = vmatprep.subr.bf16.mxu0 0
        %1428 = vmatpush1.bf16.xpose.msra.mxu0 0
        %1429 = vmatprep.subr.bf16.mxu0 0
        %1430 = vmatpush1.bf16.xpose.msra.mxu0 0
        %1431 = vmatprep.subr.bf16.mxu0 0
        %1432 = vmatpush1.bf16.xpose.msra.mxu0 0
        %1433 = vmatprep.mubr.bf16.mxu0 0
        %1434 = vmatmul.mubr.bf16.gmra.mrb[0].mxu0 %v1396
        %v1435 = vpop.f32.mrb[0].mxu0
        %v1436 = vadd.f32 %v1346, %v1435
        %v1437 = vpop.f32.mrb[0].mxu0
        %v1438 = vpop.f32.mrb[0].mxu0
        %v1439 = vpop.f32.mrb[0].mxu0
        %1440 = vdwg.mxu0
        %v1442 = vsel %vm1348, %v1331, 0
        %v1445 = vsel %vm1348, %v1337, 0
        %1447 = vmatprep.subr.bf16.mxu0 0
        %1448 = vmatpush1.bf16.xpose.msra.mxu0 %v1445
        %1449 = vmatprep.subr.bf16.mxu0 0
        %1450 = vmatpush1.bf16.xpose.msra.mxu0 0
        %1451 = vmatprep.subr.bf16.mxu0 0
        %1452 = vmatpush1.bf16.xpose.msra.mxu0 0
        %1453 = vmatprep.subr.bf16.mxu0 0
        %1454 = vmatpush1.bf16.xpose.msra.mxu0 0
        %1455 = vmatprep.subr.bf16.mxu0 0
        %1456 = vmatpush1.bf16.xpose.msra.mxu0 0
        %1457 = vmatprep.subr.bf16.mxu0 0
        %1458 = vmatpush1.bf16.xpose.msra.mxu0 0
        %1459 = vmatprep.subr.bf16.mxu0 0
        %1460 = vmatpush1.bf16.xpose.msra.mxu0 0
        %1461 = vmatprep.subr.bf16.mxu0 0
        %1462 = vmatpush1.bf16.xpose.msra.mxu0 0
        %1463 = vmatprep.subr.bf16.mxu0 0
        %1464 = vmatpush1.bf16.xpose.msra.mxu0 0
        %1465 = vmatprep.subr.bf16.mxu0 0
        %1466 = vmatpush1.bf16.xpose.msra.mxu0 0
        %1467 = vmatprep.subr.bf16.mxu0 0
        %1468 = vmatpush1.bf16.xpose.msra.mxu0 0
        %1469 = vmatprep.subr.bf16.mxu0 0
        %1470 = vmatpush1.bf16.xpose.msra.mxu0 0
        %1471 = vmatprep.subr.bf16.mxu0 0
        %1472 = vmatpush1.bf16.xpose.msra.mxu0 0
        %1473 = vmatprep.subr.bf16.mxu0 0
        %1474 = vmatpush1.bf16.xpose.msra.mxu0 0
        %1475 = vmatprep.subr.bf16.mxu0 0
        %1476 = vmatpush1.bf16.xpose.msra.mxu0 0
        %1477 = vmatprep.subr.bf16.mxu0 0
        %1478 = vmatpush1.bf16.xpose.msra.mxu0 0
        %1479 = vmatprep.mubr.bf16.mxu0 0
        %1480 = vmatmul.mubr.bf16.gmra.mrb[0].mxu0 %v1442
        %v1481 = vpop.f32.mrb[0].mxu0
        %v1482 = vadd.f32 %v1346, %v1481
        %v1483 = vpop.f32.mrb[0].mxu0
        %v1484 = vpop.f32.mrb[0].mxu0
        %v1485 = vpop.f32.mrb[0].mxu0
        %1486 = vdwg.mxu0
        %v1488 = vsel %vm1348, %v1334, 0
        %v1491 = vsel %vm1348, %v1338, 0
        %1493 = vmatprep.subr.bf16.mxu0 0
        %1494 = vmatpush1.bf16.xpose.msra.mxu0 %v1491
        %1495 = vmatprep.subr.bf16.mxu0 0
        %1496 = vmatpush1.bf16.xpose.msra.mxu0 0
        %1497 = vmatprep.subr.bf16.mxu0 0
        %1498 = vmatpush1.bf16.xpose.msra.mxu0 0
        %1499 = vmatprep.subr.bf16.mxu0 0
        %1500 = vmatpush1.bf16.xpose.msra.mxu0 0
        %1501 = vmatprep.subr.bf16.mxu0 0
        %1502 = vmatpush1.bf16.xpose.msra.mxu0 0
        %1503 = vmatprep.subr.bf16.mxu0 0
        %1504 = vmatpush1.bf16.xpose.msra.mxu0 0
        %1505 = vmatprep.subr.bf16.mxu0 0
        %1506 = vmatpush1.bf16.xpose.msra.mxu0 0
        %1507 = vmatprep.subr.bf16.mxu0 0
        %1508 = vmatpush1.bf16.xpose.msra.mxu0 0
        %1509 = vmatprep.subr.bf16.mxu0 0
        %1510 = vmatpush1.bf16.xpose.msra.mxu0 0
        %1511 = vmatprep.subr.bf16.mxu0 0
        %1512 = vmatpush1.bf16.xpose.msra.mxu0 0
        %1513 = vmatprep.subr.bf16.mxu0 0
        %1514 = vmatpush1.bf16.xpose.msra.mxu0 0
        %1515 = vmatprep.subr.bf16.mxu0 0
        %1516 = vmatpush1.bf16.xpose.msra.mxu0 0
        %1517 = vmatprep.subr.bf16.mxu0 0
        %1518 = vmatpush1.bf16.xpose.msra.mxu0 0
        %1519 = vmatprep.subr.bf16.mxu0 0
        %1520 = vmatpush1.bf16.xpose.msra.mxu0 0
        %1521 = vmatprep.subr.bf16.mxu0 0
        %1522 = vmatpush1.bf16.xpose.msra.mxu0 0
        %1523 = vmatprep.subr.bf16.mxu0 0
        %1524 = vmatpush1.bf16.xpose.msra.mxu0 0
        %1525 = vmatprep.mubr.bf16.mxu0 0
        %1526 = vmatmul.mubr.bf16.gmra.mrb[0].mxu0 %v1488
        %v1527 = vpop.f32.mrb[0].mxu0
        %v1528 = vadd.f32 %v1346, %v1527
        %v1529 = vpop.f32.mrb[0].mxu0
        %v1530 = vpop.f32.mrb[0].mxu0
        %v1531 = vpop.f32.mrb[0].mxu0
        %1532 = vdwg.mxu0
        %v1533 = vsel %vm1348, %v1390, -inf
        %1534 = vmax.xlane.f32.xlu0 %v1533
        %v1535 = vpop.xlane.xlu0 %1534
        %v1536 = vsel %vm1348, %v1436, -inf
        %1537 = vmax.xlane.f32.xlu0 %v1536
        %v1538 = vpop.xlane.xlu0 %1537
        %v1539 = vsel %vm1348, %v1482, -inf
        %1540 = vmax.xlane.f32.xlu0 %v1539
        %v1541 = vpop.xlane.xlu0 %1540
        %v1542 = vsel %vm1348, %v1528, -inf
        %1543 = vmax.xlane.f32.xlu0 %v1542
        %v1544 = vpop.xlane.xlu0 %1543
        %v1545 = vsub.f32 %v1390, %v1535
        %v1546 = vsub.f32 %v1436, %v1538
        %v1547 = vsub.f32 %v1482, %v1541
        %v1548 = vsub.f32 %v1528, %v1544
        %v1549 = vmul.f32 %v1545, 1.442695
        %v1550 = vpow.pop %v1549
        %v1551 = vmul.f32 %v1546, 1.442695
        %v1552 = vpow.pop %v1551
        %v1553 = vmul.f32 %v1547, 1.442695
        %v1554 = vpow.pop %v1553
        %v1555 = vmul.f32 %v1548, 1.442695
        %v1556 = vpow.pop %v1555
        %v1557 = vsel %vm1348, %v1550, 0.0
        %1558 = vadd.xlane.f32.xlu0 %v1557
        %v1559 = vpop.xlane.xlu0 %1558
        %v1560 = vsel %vm1348, %v1552, 0.0
        %1561 = vadd.xlane.f32.xlu0 %v1560
        %v1562 = vpop.xlane.xlu0 %1561
        %v1563 = vsel %vm1348, %v1554, 0.0
        %1564 = vadd.xlane.f32.xlu0 %v1563
        %v1565 = vpop.xlane.xlu0 %1564
        %v1566 = vsel %vm1348, %v1556, 0.0
        %1567 = vadd.xlane.f32.xlu0 %v1566
        %v1568 = vpop.xlane.xlu0 %1567
        %v1569 = vpack.c.bf16 %v1550, %v1550
        %v1570 = vpack.c.bf16 %v1552, %v1552
        %v1571 = vpack.c.bf16 %v1554, %v1554
        %v1572 = vpack.c.bf16 %v1556, %v1556
        %v1573 = vld [vmem:[#allocation3] sm:$0xf]
        %v1574 = vld [vmem:[#allocation3 + $0x4] sm:$0xf]
        %v1575 = vld [vmem:[#allocation3 + $0x8] sm:$0xf]
        %v1576 = vld [vmem:[#allocation3 + $0xc] sm:$0xf]
        %v1578 = vsel %vm1348, %v1569, 0
        %vm1580 = vcmask 1043456
        %v1582 = vsel %vm1580, %v1573, 0
        %1584 = vmatprep.subr.bf16.mxu0 0
        %1585 = vmatpush1.bf16.msra.mxu0 %v1582
        %1586 = vmatprep.subr.bf16.mxu0 0
        %1587 = vmatpush1.bf16.msra.mxu0 0
        %1588 = vmatprep.subr.bf16.mxu0 0
        %1589 = vmatpush1.bf16.msra.mxu0 0
        %1590 = vmatprep.subr.bf16.mxu0 0
        %1591 = vmatpush1.bf16.msra.mxu0 0
        %1592 = vmatprep.subr.bf16.mxu0 0
        %1593 = vmatpush1.bf16.msra.mxu0 0
        %1594 = vmatprep.subr.bf16.mxu0 0
        %1595 = vmatpush1.bf16.msra.mxu0 0
        %1596 = vmatprep.subr.bf16.mxu0 0
        %1597 = vmatpush1.bf16.msra.mxu0 0
        %1598 = vmatprep.subr.bf16.mxu0 0
        %1599 = vmatpush1.bf16.msra.mxu0 0
        %1600 = vmatprep.subr.bf16.mxu0 0
        %1601 = vmatpush1.bf16.msra.mxu0 0
        %1602 = vmatprep.subr.bf16.mxu0 0
        %1603 = vmatpush1.bf16.msra.mxu0 0
        %1604 = vmatprep.subr.bf16.mxu0 0
        %1605 = vmatpush1.bf16.msra.mxu0 0
        %1606 = vmatprep.subr.bf16.mxu0 0
        %1607 = vmatpush1.bf16.msra.mxu0 0
        %1608 = vmatprep.subr.bf16.mxu0 0
        %1609 = vmatpush1.bf16.msra.mxu0 0
        %1610 = vmatprep.subr.bf16.mxu0 0
        %1611 = vmatpush1.bf16.msra.mxu0 0
        %1612 = vmatprep.subr.bf16.mxu0 0
        %1613 = vmatpush1.bf16.msra.mxu0 0
        %1614 = vmatprep.subr.bf16.mxu0 0
        %1615 = vmatpush1.bf16.msra.mxu0 0
        %1616 = vmatprep.mubr.bf16.mxu0 0
        %1617 = vmatmul.mubr.bf16.gmra.mrb[0].mxu0 %v1578
        %v1618 = vpop.f32.mrb[0].mxu0
        %v1619 = vadd.f32 0.0, %v1618
        %v1620 = vpop.f32.mrb[0].mxu0
        %v1621 = vpop.f32.mrb[0].mxu0
        %v1622 = vpop.f32.mrb[0].mxu0
        %1623 = vdwg.mxu0
        %v1625 = vsel %vm1348, %v1570, 0
        %v1628 = vsel %vm1580, %v1574, 0
        %1630 = vmatprep.subr.bf16.mxu0 0
        %1631 = vmatpush1.bf16.msra.mxu0 %v1628
        %1632 = vmatprep.subr.bf16.mxu0 0
        %1633 = vmatpush1.bf16.msra.mxu0 0
        %1634 = vmatprep.subr.bf16.mxu0 0
        %1635 = vmatpush1.bf16.msra.mxu0 0
        %1636 = vmatprep.subr.bf16.mxu0 0
        %1637 = vmatpush1.bf16.msra.mxu0 0
        %1638 = vmatprep.subr.bf16.mxu0 0
        %1639 = vmatpush1.bf16.msra.mxu0 0
        %1640 = vmatprep.subr.bf16.mxu0 0
        %1641 = vmatpush1.bf16.msra.mxu0 0
        %1642 = vmatprep.subr.bf16.mxu0 0
        %1643 = vmatpush1.bf16.msra.mxu0 0
        %1644 = vmatprep.subr.bf16.mxu0 0
        %1645 = vmatpush1.bf16.msra.mxu0 0
        %1646 = vmatprep.subr.bf16.mxu0 0
        %1647 = vmatpush1.bf16.msra.mxu0 0
        %1648 = vmatprep.subr.bf16.mxu0 0
        %1649 = vmatpush1.bf16.msra.mxu0 0
        %1650 = vmatprep.subr.bf16.mxu0 0
        %1651 = vmatpush1.bf16.msra.mxu0 0
        %1652 = vmatprep.subr.bf16.mxu0 0
        %1653 = vmatpush1.bf16.msra.mxu0 0
        %1654 = vmatprep.subr.bf16.mxu0 0
        %1655 = vmatpush1.bf16.msra.mxu0 0
        %1656 = vmatprep.subr.bf16.mxu0 0
        %1657 = vmatpush1.bf16.msra.mxu0 0
        %1658 = vmatprep.subr.bf16.mxu0 0
        %1659 = vmatpush1.bf16.msra.mxu0 0
        %1660 = vmatprep.subr.bf16.mxu0 0
        %1661 = vmatpush1.bf16.msra.mxu0 0
        %1662 = vmatprep.mubr.bf16.mxu0 0
        %1663 = vmatmul.mubr.bf16.gmra.mrb[0].mxu0 %v1625
        %v1664 = vpop.f32.mrb[0].mxu0
        %v1665 = vadd.f32 0.0, %v1664
        %v1666 = vpop.f32.mrb[0].mxu0
        %v1667 = vpop.f32.mrb[0].mxu0
        %v1668 = vpop.f32.mrb[0].mxu0
        %1669 = vdwg.mxu0
        %v1671 = vsel %vm1348, %v1571, 0
        %v1674 = vsel %vm1580, %v1575, 0
        %1676 = vmatprep.subr.bf16.mxu0 0
        %1677 = vmatpush1.bf16.msra.mxu0 %v1674
        %1678 = vmatprep.subr.bf16.mxu0 0
        %1679 = vmatpush1.bf16.msra.mxu0 0
        %1680 = vmatprep.subr.bf16.mxu0 0
        %1681 = vmatpush1.bf16.msra.mxu0 0
        %1682 = vmatprep.subr.bf16.mxu0 0
        %1683 = vmatpush1.bf16.msra.mxu0 0
        %1684 = vmatprep.subr.bf16.mxu0 0
        %1685 = vmatpush1.bf16.msra.mxu0 0
        %1686 = vmatprep.subr.bf16.mxu0 0
        %1687 = vmatpush1.bf16.msra.mxu0 0
        %1688 = vmatprep.subr.bf16.mxu0 0
        %1689 = vmatpush1.bf16.msra.mxu0 0
        %1690 = vmatprep.subr.bf16.mxu0 0
        %1691 = vmatpush1.bf16.msra.mxu0 0
        %1692 = vmatprep.subr.bf16.mxu0 0
        %1693 = vmatpush1.bf16.msra.mxu0 0
        %1694 = vmatprep.subr.bf16.mxu0 0
        %1695 = vmatpush1.bf16.msra.mxu0 0
        %1696 = vmatprep.subr.bf16.mxu0 0
        %1697 = vmatpush1.bf16.msra.mxu0 0
        %1698 = vmatprep.subr.bf16.mxu0 0
        %1699 = vmatpush1.bf16.msra.mxu0 0
        %1700 = vmatprep.subr.bf16.mxu0 0
        %1701 = vmatpush1.bf16.msra.mxu0 0
        %1702 = vmatprep.subr.bf16.mxu0 0
        %1703 = vmatpush1.bf16.msra.mxu0 0
        %1704 = vmatprep.subr.bf16.mxu0 0
        %1705 = vmatpush1.bf16.msra.mxu0 0
        %1706 = vmatprep.subr.bf16.mxu0 0
        %1707 = vmatpush1.bf16.msra.mxu0 0
        %1708 = vmatprep.mubr.bf16.mxu0 0
        %1709 = vmatmul.mubr.bf16.gmra.mrb[0].mxu0 %v1671
        %v1710 = vpop.f32.mrb[0].mxu0
        %v1711 = vadd.f32 0.0, %v1710
        %v1712 = vpop.f32.mrb[0].mxu0
        %v1713 = vpop.f32.mrb[0].mxu0
        %v1714 = vpop.f32.mrb[0].mxu0
        %1715 = vdwg.mxu0
        %v1717 = vsel %vm1348, %v1572, 0
        %v1720 = vsel %vm1580, %v1576, 0
        %1722 = vmatprep.subr.bf16.mxu0 0
        %1723 = vmatpush1.bf16.msra.mxu0 %v1720
        %1724 = vmatprep.subr.bf16.mxu0 0
        %1725 = vmatpush1.bf16.msra.mxu0 0
        %1726 = vmatprep.subr.bf16.mxu0 0
        %1727 = vmatpush1.bf16.msra.mxu0 0
        %1728 = vmatprep.subr.bf16.mxu0 0
        %1729 = vmatpush1.bf16.msra.mxu0 0
        %1730 = vmatprep.subr.bf16.mxu0 0
        %1731 = vmatpush1.bf16.msra.mxu0 0
        %1732 = vmatprep.subr.bf16.mxu0 0
        %1733 = vmatpush1.bf16.msra.mxu0 0
        %1734 = vmatprep.subr.bf16.mxu0 0
        %1735 = vmatpush1.bf16.msra.mxu0 0
        %1736 = vmatprep.subr.bf16.mxu0 0
        %1737 = vmatpush1.bf16.msra.mxu0 0
        %1738 = vmatprep.subr.bf16.mxu0 0
        %1739 = vmatpush1.bf16.msra.mxu0 0
        %1740 = vmatprep.subr.bf16.mxu0 0
        %1741 = vmatpush1.bf16.msra.mxu0 0
        %1742 = vmatprep.subr.bf16.mxu0 0
        %1743 = vmatpush1.bf16.msra.mxu0 0
        %1744 = vmatprep.subr.bf16.mxu0 0
        %1745 = vmatpush1.bf16.msra.mxu0 0
        %1746 = vmatprep.subr.bf16.mxu0 0
        %1747 = vmatpush1.bf16.msra.mxu0 0
        %1748 = vmatprep.subr.bf16.mxu0 0
        %1749 = vmatpush1.bf16.msra.mxu0 0
        %1750 = vmatprep.subr.bf16.mxu0 0
        %1751 = vmatpush1.bf16.msra.mxu0 0
        %1752 = vmatprep.subr.bf16.mxu0 0
        %1753 = vmatpush1.bf16.msra.mxu0 0
        %1754 = vmatprep.mubr.bf16.mxu0 0
        %1755 = vmatmul.mubr.bf16.gmra.mrb[0].mxu0 %v1717
        %v1756 = vpop.f32.mrb[0].mxu0
        %v1757 = vadd.f32 0.0, %v1756
        %v1758 = vpop.f32.mrb[0].mxu0
        %v1759 = vpop.f32.mrb[0].mxu0
        %v1760 = vpop.f32.mrb[0].mxu0
        %1761 = vdwg.mxu0
        %v1762 = vrcp.pop %v1559
        %v1763 = vrcp.pop %v1562
        %v1764 = vrcp.pop %v1565
        %v1765 = vrcp.pop %v1568
        %v1766 = vmul.f32 %v1619, %v1762
        %v1767 = vmul.f32 %v1665, %v1763
        %v1768 = vmul.f32 %v1711, %v1764
        %v1769 = vmul.f32 %v1757, %v1765
        %v1770 = vcombine.low %v1766, %v1768
        %v1771 = vcombine.high %v1766, %v1768
        %v1773 = vunpack.c.l.s4 1983009808
        %v1774 = vunpack.c.0.s8 %v1773
        %v1775 = vlaneseq
        %v1776 = vshrl.u32 %v1775, 7
        %v1777 = vsub.s32 %v1774, %v1776
        %v1778 = vrot.slane %v1770, %v1777
        %v1780 = vunpack.c.l.s4 1983009808
        %v1781 = vunpack.c.0.s8 %v1780
        %v1782 = vlaneseq
        %v1783 = vshrl.u32 %v1782, 7
        %v1784 = vsub.s32 %v1781, %v1783
        %v1785 = vrot.slane %v1771, %v1784
        %v1786 = vcombine.low %v1767, %v1769
        %v1787 = vcombine.high %v1767, %v1769
        %v1789 = vunpack.c.l.s4 1983009808
        %v1790 = vunpack.c.0.s8 %v1789
        %v1791 = vlaneseq
        %v1792 = vshrl.u32 %v1791, 7
        %v1793 = vsub.s32 %v1790, %v1792
        %v1794 = vrot.slane %v1786, %v1793
        %v1796 = vunpack.c.l.s4 1983009808
        %v1797 = vunpack.c.0.s8 %v1796
        %v1798 = vlaneseq
        %v1799 = vshrl.u32 %v1798, 7
        %v1800 = vsub.s32 %v1797, %v1799
        %v1801 = vrot.slane %v1787, %v1800
        %v1802 = vcombine.low %v1778, %v1794
        %v1803 = vcombine.high %v1778, %v1794
        %v1805 = vunpack.c.l.s4 1934713408
        %v1806 = vunpack.c.0.s8 %v1805
        %v1807 = vlaneseq
        %v1808 = vshrl.u32 %v1807, 7
        %v1809 = vsub.s32 %v1806, %v1808
        %v1810 = vrot.slane %v1802, %v1809
        %v1812 = vunpack.c.l.s4 1934713408
        %v1813 = vunpack.c.0.s8 %v1812
        %v1814 = vlaneseq
        %v1815 = vshrl.u32 %v1814, 7
        %v1816 = vsub.s32 %v1813, %v1815
        %v1817 = vrot.slane %v1803, %v1816
        %v1818 = vcombine.low %v1785, %v1801
        %v1819 = vcombine.high %v1785, %v1801
        %v1821 = vunpack.c.l.s4 1934713408
        %v1822 = vunpack.c.0.s8 %v1821
        %v1823 = vlaneseq
        %v1824 = vshrl.u32 %v1823, 7
        %v1825 = vsub.s32 %v1822, %v1824
        %v1826 = vrot.slane %v1818, %v1825
        %v1828 = vunpack.c.l.s4 1934713408
        %v1829 = vunpack.c.0.s8 %v1828
        %v1830 = vlaneseq
        %v1831 = vshrl.u32 %v1830, 7
        %v1832 = vsub.s32 %v1829, %v1831
        %v1833 = vrot.slane %v1819, %v1832
        %v1834 = vcombine.high %v1810, 0.0
        %v1835 = vcombine.high %v1817, 0.0
        %v1836 = vcombine.high %v1826, 0.0
        %v1837 = vcombine.high %v1833, 0.0
        %v1838 = vcombine.low %v1810, %v1817
        %v1840 = vunpack.c.l.s4 1983009808
        %v1841 = vunpack.c.0.s8 %v1840
        %v1842 = vlaneseq
        %v1843 = vshrl.u32 %v1842, 7
        %v1844 = vsub.s32 %v1841, %v1843
        %v1845 = vrot.slane %v1838, %v1844
        %v1846 = vcombine.low %v1834, %v1835
        %v1848 = vunpack.c.l.s4 1983009808
        %v1849 = vunpack.c.0.s8 %v1848
        %v1850 = vlaneseq
        %v1851 = vshrl.u32 %v1850, 7
        %v1852 = vsub.s32 %v1849, %v1851
        %v1853 = vrot.slane %v1846, %v1852
        %v1854 = vcombine.low %v1826, %v1833
        %v1856 = vunpack.c.l.s4 1983009808
        %v1857 = vunpack.c.0.s8 %v1856
        %v1858 = vlaneseq
        %v1859 = vshrl.u32 %v1858, 7
        %v1860 = vsub.s32 %v1857, %v1859
        %v1861 = vrot.slane %v1854, %v1860
        %v1862 = vcombine.low %v1836, %v1837
        %v1864 = vunpack.c.l.s4 1983009808
        %v1865 = vunpack.c.0.s8 %v1864
        %v1866 = vlaneseq
        %v1867 = vshrl.u32 %v1866, 7
        %v1868 = vsub.s32 %v1865, %v1867
        %v1869 = vrot.slane %v1862, %v1868
        %v1870 = vcombine.low %v1845, %v1853
        %v1871 = vcombine.high %v1845, %v1853
        %v1873 = vunpack.c.l.s4 1934713408
        %v1874 = vunpack.c.0.s8 %v1873
        %v1875 = vlaneseq
        %v1876 = vshrl.u32 %v1875, 7
        %v1877 = vsub.s32 %v1874, %v1876
        %v1878 = vrot.slane %v1870, %v1877
        %v1880 = vunpack.c.l.s4 1934713408
        %v1881 = vunpack.c.0.s8 %v1880
        %v1882 = vlaneseq
        %v1883 = vshrl.u32 %v1882, 7
        %v1884 = vsub.s32 %v1881, %v1883
        %v1885 = vrot.slane %v1871, %v1884
        %v1886 = vcombine.low %v1861, %v1869
        %v1887 = vcombine.high %v1861, %v1869
        %v1889 = vunpack.c.l.s4 1934713408
        %v1890 = vunpack.c.0.s8 %v1889
        %v1891 = vlaneseq
        %v1892 = vshrl.u32 %v1891, 7
        %v1893 = vsub.s32 %v1890, %v1892
        %v1894 = vrot.slane %v1886, %v1893
        %v1896 = vunpack.c.l.s4 1934713408
        %v1897 = vunpack.c.0.s8 %v1896
        %v1898 = vlaneseq
        %v1899 = vshrl.u32 %v1898, 7
        %v1900 = vsub.s32 %v1897, %v1899
        %v1901 = vrot.slane %v1887, %v1900
        %v1902 = vcombine.low %v1878, %v1894
        %v1903 = vcombine.high %v1878, %v1894
        %v1904 = vcombine.low %v1885, %v1901
        %v1905 = vcombine.high %v1885, %v1901
        %1907 = vrot.lane.b32.xlu0 %v1903, 8
        %v1908 = vpop.permute.xlu0 %1907
        %1911 = vrot.lane.b32.xlu0 %v1904, 16
        %v1912 = vpop.permute.xlu0 %1911
        %1915 = vrot.lane.b32.xlu0 %v1905, 24
        %v1916 = vpop.permute.xlu0 %1915
        %v1918 = vsel %vm1348, %v1902, %v1908
        %vm1919 = vcmask 130048
        %v1920 = vsel %vm1919, %v1918, %v1912
        %vm1921 = vcmask 195584
        %v1922 = vsel %vm1921, %v1920, %v1916
        %v1923 = vpack.c.bf16 %v1922, %v1922
        %v1924 = vld [vmem:[#allocation10] sm:$0xf]
        %v1925 = vld [vmem:[#allocation10 + $0x4] sm:$0xf]
        %v1926 = vld [vmem:[#allocation10 + $0x8] sm:$0xf]
        %v1927 = vld [vmem:[#allocation10 + $0xc] sm:$0xf]
        %v1928 = vld [vmem:[#allocation12] sm:$0x1]
        %v1930 = vlaneseq
        %v1931 = vshrl.u32 %v1930, 7
        %v1932 = vsub.s32 0, %v1931
        %v1933 = vrot.slane %v1928, %v1932
        %v1939 = vunpack.c.l.b16 %v1924
        %v1940 = vunpack.c.l.b16 %v1925
        %v1941 = vunpack.c.l.b16 %v1926
        %v1942 = vunpack.c.l.b16 %v1927
        %v1943 = vpack.c.b16 %v1940, %v1939
        %v1944 = vpack.c.b16 %v1942, %v1941
        %v1948 = vsel %vm1122, %v1923, 0
        %1950 = vmatprep.subr.bf16.mxu0 0
        %1951 = vmatpush1.bf16.msra.mxu0 %v1943
        %1952 = vmatprep.subr.bf16.mxu0 0
        %1953 = vmatpush1.bf16.msra.mxu0 %v1944
        %1954 = vmatprep.subr.bf16.mxu0 0
        %1955 = vmatpush1.bf16.msra.mxu0 0
        %1956 = vmatprep.subr.bf16.mxu0 0
        %1957 = vmatpush1.bf16.msra.mxu0 0
        %1958 = vmatprep.subr.bf16.mxu0 0
        %1959 = vmatpush1.bf16.msra.mxu0 0
        %1960 = vmatprep.subr.bf16.mxu0 0
        %1961 = vmatpush1.bf16.msra.mxu0 0
        %1962 = vmatprep.subr.bf16.mxu0 0
        %1963 = vmatpush1.bf16.msra.mxu0 0
        %1964 = vmatprep.subr.bf16.mxu0 0
        %1965 = vmatpush1.bf16.msra.mxu0 0
        %1966 = vmatprep.subr.bf16.mxu0 0
        %1967 = vmatpush1.bf16.msra.mxu0 0
        %1968 = vmatprep.subr.bf16.mxu0 0
        %1969 = vmatpush1.bf16.msra.mxu0 0
        %1970 = vmatprep.subr.bf16.mxu0 0
        %1971 = vmatpush1.bf16.msra.mxu0 0
        %1972 = vmatprep.subr.bf16.mxu0 0
        %1973 = vmatpush1.bf16.msra.mxu0 0
        %1974 = vmatprep.subr.bf16.mxu0 0
        %1975 = vmatpush1.bf16.msra.mxu0 0
        %1976 = vmatprep.subr.bf16.mxu0 0
        %1977 = vmatpush1.bf16.msra.mxu0 0
        %1978 = vmatprep.subr.bf16.mxu0 0
        %1979 = vmatpush1.bf16.msra.mxu0 0
        %1980 = vmatprep.subr.bf16.mxu0 0
        %1981 = vmatpush1.bf16.msra.mxu0 0
        %1982 = vmatprep.mubr.bf16.mxu0 0
        %1983 = vmatmul.mubr.bf16.gmra.mrb[0].mxu0 %v1948
        %v1984 = vpop.f32.mrb[0].mxu0
        %v1985 = vadd.f32 %v1933, %v1984
        %v1986 = vpop.f32.mrb[0].mxu0
        %v1987 = vpop.f32.mrb[0].mxu0
        %v1988 = vpop.f32.mrb[0].mxu0
        %1989 = vdwg.mxu0
        %v1990 = vadd.f32 %v1097, %v1985
        %v1991 = vld [vmem:[%s13] sm:$0x1]
        %v1992 = vld [vmem:[%s14] sm:$0x1]
        %v1993 = vsel %vm1122, %v1990, 0.0
        %1994 = vadd.xlane.f32.xlu0 %v1993
        %v1995 = vpop.xlane.xlu0 %1994
        %v1996 = vrcp.pop 32.0
        %v1997 = vmul.f32 %v1995, %v1996
        %v1998 = vsub.f32 %v1990, %v1997
        %v1999 = vmul.f32 %v1998, %v1998
        %v2000 = vsel %vm1122, %v1999, 0.0
        %2001 = vadd.xlane.f32.xlu0 %v2000
        %v2002 = vpop.xlane.xlu0 %2001
        %v2003 = vmul.f32 %v2002, %v1996
        %v2004 = vadd.f32 %v2003, 1e-05
        %v2005 = vrsqrt.pop %v2004
        %v2006 = vmul.f32 %v1998, %v2005
        %v2008 = vlaneseq
        %v2009 = vshrl.u32 %v2008, 7
        %v2010 = vsub.s32 0, %v2009
        %v2011 = vrot.slane %v1991, %v2010
        %v2013 = vmul.f32 %v2006, %v2011
        %v2015 = vlaneseq
        %v2016 = vshrl.u32 %v2015, 7
        %v2017 = vsub.s32 0, %v2016
        %v2018 = vrot.slane %v1992, %v2017
        %v2020 = vadd.f32 %v2013, %v2018
        %v2021 = vpack.c.bf16 %v2020, %v2020
        %v2022 = vld [vmem:[%s9] sm:$0xf]
        %v2023 = vld [vmem:[%s9 + $0x4] sm:$0xf]
        %v2024 = vld [vmem:[%s9 + $0x8] sm:$0xf]
        %v2025 = vld [vmem:[%s9 + $0xc] sm:$0xf]
        %v2026 = vld [vmem:[%s10] sm:$0x1]
        %v2028 = vlaneseq
        %v2029 = vshrl.u32 %v2028, 7
        %v2030 = vsub.s32 0, %v2029
        %v2031 = vrot.slane %v2026, %v2030
        %v2037 = vunpack.c.l.b16 %v2022
        %v2038 = vunpack.c.l.b16 %v2023
        %v2039 = vunpack.c.l.b16 %v2024
        %v2040 = vunpack.c.l.b16 %v2025
        %v2041 = vpack.c.b16 %v2038, %v2037
        %v2042 = vpack.c.b16 %v2040, %v2039
        %v2046 = vsel %vm1122, %v2021, 0
        %2048 = vmatprep.subr.bf16.mxu0 0
        %2049 = vmatpush1.bf16.msra.mxu0 %v2041
        %2050 = vmatprep.subr.bf16.mxu0 0
        %2051 = vmatpush1.bf16.msra.mxu0 %v2042
        %2052 = vmatprep.subr.bf16.mxu0 0
        %2053 = vmatpush1.bf16.msra.mxu0 0
        %2054 = vmatprep.subr.bf16.mxu0 0
        %2055 = vmatpush1.bf16.msra.mxu0 0
        %2056 = vmatprep.subr.bf16.mxu0 0
        %2057 = vmatpush1.bf16.msra.mxu0 0
        %2058 = vmatprep.subr.bf16.mxu0 0
        %2059 = vmatpush1.bf16.msra.mxu0 0
        %2060 = vmatprep.subr.bf16.mxu0 0
        %2061 = vmatpush1.bf16.msra.mxu0 0
        %2062 = vmatprep.subr.bf16.mxu0 0
        %2063 = vmatpush1.bf16.msra.mxu0 0
        %2064 = vmatprep.subr.bf16.mxu0 0
        %2065 = vmatpush1.bf16.msra.mxu0 0
        %2066 = vmatprep.subr.bf16.mxu0 0
        %2067 = vmatpush1.bf16.msra.mxu0 0
        %2068 = vmatprep.subr.bf16.mxu0 0
        %2069 = vmatpush1.bf16.msra.mxu0 0
        %2070 = vmatprep.subr.bf16.mxu0 0
        %2071 = vmatpush1.bf16.msra.mxu0 0
        %2072 = vmatprep.subr.bf16.mxu0 0
        %2073 = vmatpush1.bf16.msra.mxu0 0
        %2074 = vmatprep.subr.bf16.mxu0 0
        %2075 = vmatpush1.bf16.msra.mxu0 0
        %2076 = vmatprep.subr.bf16.mxu0 0
        %2077 = vmatpush1.bf16.msra.mxu0 0
        %2078 = vmatprep.subr.bf16.mxu0 0
        %2079 = vmatpush1.bf16.msra.mxu0 0
        %2080 = vmatprep.mubr.bf16.mxu0 0
        %2081 = vmatmul.mubr.bf16.gmra.mrb[0].mxu0 %v2046
        %v2082 = vpop.f32.mrb[0].mxu0
        %v2083 = vadd.f32 %v2031, %v2082
        %v2084 = vpop.f32.mrb[0].mxu0
        %v2085 = vpop.f32.mrb[0].mxu0
        %v2086 = vpop.f32.mrb[0].mxu0
        %2087 = vdwg.mxu0
        %v2088 = vmax.f32 %v2083, 0.0
        %v2089 = vpack.c.bf16 %v2088, %v2088
        %v2090 = vld [vmem:[%s11] sm:$0xf]
        %v2091 = vld [vmem:[%s11 + $0x4] sm:$0xf]
        %v2092 = vld [vmem:[%s11 + $0x8] sm:$0xf]
        %v2093 = vld [vmem:[%s11 + $0xc] sm:$0xf]
        %v2094 = vld [vmem:[%s11 + $0x10] sm:$0xf]
        %v2095 = vld [vmem:[%s11 + $0x14] sm:$0xf]
        %v2096 = vld [vmem:[%s11 + $0x18] sm:$0xf]
        %v2097 = vld [vmem:[%s11 + $0x1c] sm:$0xf]
        %v2098 = vld [vmem:[%s12] sm:$0x1]
        %v2100 = vlaneseq
        %v2101 = vshrl.u32 %v2100, 7
        %v2102 = vsub.s32 0, %v2101
        %v2103 = vrot.slane %v2098, %v2102
        %v2113 = vunpack.c.l.b16 %v2090
        %v2114 = vunpack.c.l.b16 %v2091
        %v2115 = vunpack.c.l.b16 %v2092
        %v2116 = vunpack.c.l.b16 %v2093
        %v2117 = vunpack.c.l.b16 %v2094
        %v2118 = vunpack.c.l.b16 %v2095
        %v2119 = vunpack.c.l.b16 %v2096
        %v2120 = vunpack.c.l.b16 %v2097
        %v2121 = vpack.c.b16 %v2114, %v2113
        %v2122 = vpack.c.b16 %v2116, %v2115
        %v2123 = vpack.c.b16 %v2118, %v2117
        %v2124 = vpack.c.b16 %v2120, %v2119
        %vm2129 = vcmask 523264
        %v2131 = vsel %vm2129, %v2089, 0
        %2133 = vmatprep.subr.bf16.mxu0 0
        %2134 = vmatpush1.bf16.msra.mxu0 %v2121
        %2135 = vmatprep.subr.bf16.mxu0 0
        %2136 = vmatpush1.bf16.msra.mxu0 %v2122
        %2137 = vmatprep.subr.bf16.mxu0 0
        %2138 = vmatpush1.bf16.msra.mxu0 %v2123
        %2139 = vmatprep.subr.bf16.mxu0 0
        %2140 = vmatpush1.bf16.msra.mxu0 %v2124
        %2141 = vmatprep.subr.bf16.mxu0 0
        %2142 = vmatpush1.bf16.msra.mxu0 0
        %2143 = vmatprep.subr.bf16.mxu0 0
        %2144 = vmatpush1.bf16.msra.mxu0 0
        %2145 = vmatprep.subr.bf16.mxu0 0
        %2146 = vmatpush1.bf16.msra.mxu0 0
        %2147 = vmatprep.subr.bf16.mxu0 0
        %2148 = vmatpush1.bf16.msra.mxu0 0
        %2149 = vmatprep.subr.bf16.mxu0 0
        %2150 = vmatpush1.bf16.msra.mxu0 0
        %2151 = vmatprep.subr.bf16.mxu0 0
        %2152 = vmatpush1.bf16.msra.mxu0 0
        %2153 = vmatprep.subr.bf16.mxu0 0
        %2154 = vmatpush1.bf16.msra.mxu0 0
        %2155 = vmatprep.subr.bf16.mxu0 0
        %2156 = vmatpush1.bf16.msra.mxu0 0
        %2157 = vmatprep.subr.bf16.mxu0 0
        %2158 = vmatpush1.bf16.msra.mxu0 0
        %2159 = vmatprep.subr.bf16.mxu0 0
        %2160 = vmatpush1.bf16.msra.mxu0 0
        %2161 = vmatprep.subr.bf16.mxu0 0
        %2162 = vmatpush1.bf16.msra.mxu0 0
        %2163 = vmatprep.subr.bf16.mxu0 0
        %2164 = vmatpush1.bf16.msra.mxu0 0
        %2165 = vmatprep.mubr.bf16.mxu0 0
        %2166 = vmatmul.mubr.bf16.gmra.mrb[0].mxu0 %v2131
        %v2167 = vpop.f32.mrb[0].mxu0
        %v2168 = vadd.f32 %v2103, %v2167
        %v2169 = vpop.f32.mrb[0].mxu0
        %v2170 = vpop.f32.mrb[0].mxu0
        %v2171 = vpop.f32.mrb[0].mxu0
        %2172 = vdwg.mxu0
        %v2173 = vadd.f32 %v2020, %v2168
        %v2174 = vld [vmem:[%s15] sm:$0x1]
        %v2175 = vld [vmem:[%s16] sm:$0x1]
        %v2176 = vsel %vm1122, %v2173, 0.0
        %2177 = vadd.xlane.f32.xlu0 %v2176
        %v2178 = vpop.xlane.xlu0 %2177
        %v2179 = vmul.f32 %v2178, %v1996
        %v2180 = vsub.f32 %v2173, %v2179
        %v2181 = vmul.f32 %v2180, %v2180
        %v2182 = vsel %vm1122, %v2181, 0.0
        %2183 = vadd.xlane.f32.xlu0 %v2182
        %v2184 = vpop.xlane.xlu0 %2183
        %v2185 = vmul.f32 %v2184, %v1996
        %v2186 = vadd.f32 %v2185, 1e-05
        %v2187 = vrsqrt.pop %v2186
        %v2188 = vmul.f32 %v2180, %v2187
        %v2190 = vlaneseq
        %v2191 = vshrl.u32 %v2190, 7
        %v2192 = vsub.s32 0, %v2191
        %v2193 = vrot.slane %v2174, %v2192
        %v2195 = vmul.f32 %v2188, %v2193
        %v2197 = vlaneseq
        %v2198 = vshrl.u32 %v2197, 7
        %v2199 = vsub.s32 0, %v2198
        %v2200 = vrot.slane %v2175, %v2199
        %v2202 = vadd.f32 %v2195, %v2200
        %2203 = vst.msk [vmem:[%s652] sm:$0xff] %vm1122, %v2202
        %s2204 = sand.u32 %s430, 1
        %s2205 = scalar_lea.sflag [#allocation6], %s2204
        %s2206 = sand.u32 %s430, 1
        %s2207 = smul.addr %s2206, 8
        %s2208 = scalar_lea.vmem [#allocation13], %s2207
        // Predicated region
        $region113: #{tpu_custom_call.1} parent=87 // pred_check
          %p2209 = pneg %p440
        $region114: #{tpu_custom_call.1} parent=87 // pred_check_branch
          %2211 = sbr.rel (%p2209) target = $region116
        $region115: #{tpu_custom_call.1} parent=87 // pred_region
          %s2213 = ssub.s32 128, 128
          %2214 = vsyncadd %s2205, %s2213
          %s2215 = sadd.s32 %s39, %s38
          %s2216 = smul.addr %s2215, 128
          %s2217 = scalar_lea.hbm %s17, %s2216
          %s2219 = sshll.u32 %s2208, 4
          %s2220 = int_to_ptr.vmem [resolvable:$true] %s2219
          %2222 = dma.vmem_to_hbm [thread:$0]  %s2220, 128, %s2217, %s2205
        $region116: #{tpu_custom_call.1} parent=87 // pred_fallthru
          _
      $region88: #{tpu_custom_call.1} parent=5 // pred_fallthru
        _
      %p2223 = scmp.le.s32.totalorder 2, %s29
      // Predicated region
      $region117: #{tpu_custom_call.1} parent=5 // pred_check
        %p2224 = pneg %p2223
      $region118: #{tpu_custom_call.1} parent=5 // pred_check_branch
        %2226 = sbr.rel (%p2224) target = $region120
      $region119: #{tpu_custom_call.1} parent=5 // pred_region
        %s2227 = ssub.s32 %s29, 2
        // Predicated region
        $region121: #{tpu_custom_call.1} parent=119 // pred_check
          %p2228 = pneg %p446
        $region122: #{tpu_custom_call.1} parent=119 // pred_check_branch
          %2230 = sbr.rel (%p2228) target = $region124
        $region123: #{tpu_custom_call.1} parent=119 // pred_region
          %s2231 = sand.u32 %s431, 1
          %s2232 = scalar_lea.sflag [#allocation6], %s2231
          %s2233 = sand.u32 %s431, 1
          %s2234 = smul.addr %s2233, 8
          %s2235 = scalar_lea.vmem [#allocation13], %s2234
          %2236 = dma.done %s2232, 128
        $region124: #{tpu_custom_call.1} parent=119 // pred_fallthru
          _
      $region120: #{tpu_custom_call.1} parent=5 // pred_fallthru
        _
    $region6: #{tpu_custom_call.1} parent=1 // loop_footer
      %s33 = sadd.s32 1, %s29
    $region7: #{tpu_custom_call.1} parent=1 // loop_footer_branch
      %28 = sbr.rel target = $region3
    $region8: #{tpu_custom_call.1} parent=1 // loop_exit
      _
    %2237 = vsyncpa [#allocation5], 1
    %s2238 = scalar_lea.sflag [#allocation5], 1
    %2239 = vsyncpa %s2238, 1
    %2240 = vsyncpa [#allocation8], 1
    %2241 = vsyncpa [#allocation11], 1
    %2242 = vsyncpa [#allocation6], 1
    %s2243 = scalar_lea.sflag [#allocation6], 1
    %2244 = vsyncpa %s2243, 1

</llo_original>
